<compile_context>
chip_gen: v7x
topology: tpu7x:2x2x1
jax: 0.10.0
libtpu: 0.0.40
codegen_flags: <defaults>
</compile_context>

<pallas_src>
import jax
import jax.numpy as jnp
from jax.experimental import pallas as pl
from jax.experimental.pallas import tpu as pltpu


# ----------------------------- small in-kernel helper --------------------------------

def _tile_lanes(x, reps):
    """Concatenate `reps` copies of a 2D value along the lane (last) axis (log2 doubling)."""
    out = x
    built = 1
    while built * 2 <= reps:
        out = jnp.concatenate([out, out], axis=1)
        built *= 2
    if built < reps:
        out = jnp.concatenate([out] + [x] * (reps - built), axis=1)
    return out


# ----------------------------- fused forward kernel ----------------------------------

def _cnn1_kernel(x_ref, w1e_ref, b1e_ref, w2e_ref, b2e_ref,
                 sw1_ref, sh1_ref, sw2_ref, sh2_ref,
                 fc1w_ref, fc1b_ref, fc2w_ref, fc2b_ref, fc3w_ref, fc3b_ref,
                 o_ref):
    f32 = jnp.float32
    x = x_ref[0]                                           # (28, 28)

    # ---- conv1 (1->6, 3x3, stride 1) + ReLU; output layout (26, 6*26) = [h, 26*co + w]
    w1e = w1e_ref[...]                                     # (9, 156)
    acc1 = None
    t = 0
    for kh in range(3):
        for kw in range(3):
            patch = x[kh:kh + 26, kw:kw + 26]              # (26, 26)
            tiled = _tile_lanes(patch, 6)                  # (26, 156)
            term = tiled * w1e[t:t + 1, :]
            acc1 = term if acc1 is None else acc1 + term
            t += 1
    a1 = jnp.maximum(acc1 + b1e_ref[...], 0.0)             # (26, 156)

    # ---- max_pool2d(2, 2): shifted maxes + 0/1 selection matmuls -> (13, 6*13)
    v1 = jnp.maximum(a1[0:25, :], a1[1:26, :])             # (25, 156)
    m1 = jnp.maximum(v1[:, 0:155], v1[:, 1:156])           # (25, 155)
    pw1 = jnp.dot(m1, sw1_ref[...], preferred_element_type=f32)   # (25, 78)
    p1 = jnp.dot(sh1_ref[...], pw1, preferred_element_type=f32)   # (13, 78) = [i, 13*ci + j]

    # ---- conv2 (6->16, 3x3, stride 1) + ReLU; output layout (11, 16*11) = [h, 11*co + w]
    w2e = w2e_ref[...]                                     # (54, 176)
    acc2 = None
    t = 0
    for ci in range(6):
        for kh in range(3):
            for kw in range(3):
                patch = p1[kh:kh + 11, 13 * ci + kw: 13 * ci + kw + 11]   # (11, 11)
                tiled = _tile_lanes(patch, 16)             # (11, 176)
                term = tiled * w2e[t:t + 1, :]
                acc2 = term if acc2 is None else acc2 + term
                t += 1
    a2 = jnp.maximum(acc2 + b2e_ref[...], 0.0)             # (11, 176)

    # ---- max_pool2d(2, 2): 11x11 -> 5x5 (floor mode) -> (5, 16*5)
    v2 = jnp.maximum(a2[0:10, :], a2[1:11, :])             # (10, 176)
    m2 = jnp.maximum(v2[:, 0:175], v2[:, 1:176])           # (10, 175)
    pw2 = jnp.dot(m2, sw2_ref[...], preferred_element_type=f32)   # (10, 80)
    tp = jnp.dot(sh2_ref[...], pw2, preferred_element_type=f32)   # (5, 80) = [i, 5*co + j]

    # ---- flatten to (1, 400); lane index f = 80*i + 5*co + j (fc1w rows permuted to match)
    flat = jnp.concatenate([tp[i:i + 1, :] for i in range(5)], axis=1)    # (1, 400)

    # ---- fc1 + relu, fc2 + relu, fc3 + log_softmax
    z1 = jnp.maximum(jnp.dot(flat, fc1w_ref[...], preferred_element_type=f32)
                     + fc1b_ref[...], 0.0)                 # (1, 120)
    z2 = jnp.maximum(jnp.dot(z1, fc2w_ref[...], preferred_element_type=f32)
                     + fc2b_ref[...], 0.0)                 # (1, 84)
    z3 = jnp.dot(z2, fc3w_ref[...], preferred_element_type=f32) + fc3b_ref[...]   # (1, 10)
    zmax = jnp.max(z3, axis=-1, keepdims=True)
    s = z3 - zmax
    lse = jnp.log(jnp.sum(jnp.exp(s), axis=-1, keepdims=True))
    o_ref[...] = (s - lse)[None]                           # (1, 1, 10)


# ----------------------------- pallas_call wrapper ------------------------------------

def cnn1_forward(x_nchw, p):
    N = x_nchw.shape[0]
    x = x_nchw.reshape(N, 28, 28).astype(jnp.float32)

    args = (x, p["w1e"], p["b1e"], p["w2e"], p["b2e"],
            p["sw1"], p["sh1"], p["sw2"], p["sh2"],
            p["fc1w"], p["fc1b"], p["fc2w"], p["fc2b"], p["fc3w"], p["fc3b"])

    def _resident(a):
        # whole array in VMEM, constant block index -> fetched once, stays resident
        return pl.BlockSpec(a.shape, lambda n: (0,) * a.ndim)

    in_specs = [pl.BlockSpec((1, 28, 28), lambda n: (n, 0, 0))]
    in_specs += [_resident(a) for a in args[1:]]

    out = pl.pallas_call(
        _cnn1_kernel,
        out_shape=jax.ShapeDtypeStruct((N, 1, 10), jnp.float32),
        grid=(N,),
        in_specs=in_specs,
        out_specs=pl.BlockSpec((1, 1, 10), lambda n: (n, 0, 0)),
        compiler_params=pltpu.CompilerParams(dimension_semantics=("parallel",)),
    )(*args)
    return out.reshape(N, 10)


# ----------------------------- parameter init (one-time layout work) ------------------

def init_params(key):
    """Synthetic parameters with CNN1's exact shapes, pre-laid-out for the fused kernel."""
    ks = jax.random.split(key, 10)
    scale = 0.1
    w1 = scale * jax.random.normal(ks[0], (6, 1, 3, 3), jnp.float32)
    b1 = scale * jax.random.normal(ks[1], (6,), jnp.float32)
    w2 = scale * jax.random.normal(ks[2], (16, 6, 3, 3), jnp.float32)
    b2 = scale * jax.random.normal(ks[3], (16,), jnp.float32)
    fc1w = scale * jax.random.normal(ks[4], (120, 400), jnp.float32)
    fc1b = scale * jax.random.normal(ks[5], (120,), jnp.float32)
    fc2w = scale * jax.random.normal(ks[6], (84, 120), jnp.float32)
    fc2b = scale * jax.random.normal(ks[7], (84,), jnp.float32)
    fc3w = scale * jax.random.normal(ks[8], (10, 84), jnp.float32)
    fc3b = scale * jax.random.normal(ks[9], (10,), jnp.float32)

    p = {}
    # conv1: per-tap (t = 3*kh + kw) weight rows replicated along lanes: [t, 26*co + w]
    w1f = w1.reshape(6, 9)
    p["w1e"] = jnp.repeat(w1f.T, 26, axis=1)               # (9, 156)
    p["b1e"] = jnp.repeat(b1, 26)[None, :]                 # (1, 156)
    # conv2: per-tap (t = 9*ci + 3*kh + kw) weight rows replicated: [t, 11*co + w]
    w2f = w2.reshape(16, 54)
    p["w2e"] = jnp.repeat(w2f.T, 11, axis=1)               # (54, 176)
    p["b2e"] = jnp.repeat(b2, 11)[None, :]                 # (1, 176)

    # 0/1 selection matrices for stride-2 pooling (exact copies through the MXU).
    # pool1: input lane l = 26*c + w (w<=24 valid), output lane m = 13*c + j, l = 2*m.
    p["sw1"] = (jnp.arange(155)[:, None] == 2 * jnp.arange(78)[None, :]).astype(jnp.float32)
    p["sh1"] = (jnp.arange(25)[None, :] == 2 * jnp.arange(13)[:, None]).astype(jnp.float32)
    # pool2: input lane l = 11*c + 2*j, output lane m = 5*c + j  <=>  0 <= 11*m - 5*l <= 4.
    d = 11 * jnp.arange(80)[None, :] - 5 * jnp.arange(175)[:, None]
    p["sw2"] = ((d >= 0) & (d <= 4)).astype(jnp.float32)
    p["sh2"] = (jnp.arange(10)[None, :] == 2 * jnp.arange(5)[:, None]).astype(jnp.float32)

    # fc1: permute rows so the kernel's flatten order f = 80*i + 5*co + j maps to the
    # PyTorch view(-1, 400) order q = 25*co + 5*i + j.
    f = jnp.arange(400)
    i = f // 80
    rem = f % 80
    co = rem // 5
    j = rem % 5
    q = 25 * co + 5 * i + j
    p["fc1w"] = fc1w.T[q, :]                               # (400, 120)
    p["fc1b"] = fc1b[None, :]                              # (1, 120)
    p["fc2w"] = fc2w.T                                     # (120, 84)
    p["fc2b"] = fc2b[None, :]
    p["fc3w"] = fc3w.T                                     # (84, 10)
    p["fc3b"] = fc3b[None, :]

    # keep originals for the pure-JAX reference check
    p["_raw"] = (w1, b1, w2, b2, fc1w, fc1b, fc2w, fc2b, fc3w, fc3b)
    return p


# ----------------------------- pure-JAX reference (sanity check) ----------------------

def cnn1_reference(x_nchw, p):
    w1, b1, w2, b2, fc1w, fc1b, fc2w, fc2b, fc3w, fc3b = p["_raw"]

    def conv(x, w, b):
        y = jax.lax.conv_general_dilated(
            x, w, window_strides=(1, 1), padding="VALID",
            dimension_numbers=("NCHW", "OIHW", "NCHW"))
        return y + b.reshape(1, -1, 1, 1)

    def pool(x):
        return jax.lax.reduce_window(
            x, -jnp.inf, jax.lax.max, (1, 1, 2, 2), (1, 1, 2, 2), "VALID")

    a = jnp.maximum(conv(x_nchw, w1, b1), 0.0)
    a = pool(a)
    a = jnp.maximum(conv(a, w2, b2), 0.0)
    a = pool(a)
    a = a.reshape(a.shape[0], -1)
    a = jnp.maximum(a @ fc1w.T + fc1b, 0.0)
    a = jnp.maximum(a @ fc2w.T + fc2b, 0.0)
    z = a @ fc3w.T + fc3b
    return jax.nn.log_softmax(z, axis=1)


# ----------------------------- main ----------------------------------------------------

if __name__ == "__main__":
    key = jax.random.PRNGKey(0)
    kx, kp = jax.random.split(key)

    # MNIST-shaped input required by the hard-coded fc1 (5*5*16); small batch of 2.
    x = jax.random.normal(kx, (2, 1, 28, 28), jnp.float32)
    params = init_params(kp)

    fwd = jax.jit(cnn1_forward)
    out = jax.block_until_ready(fwd(x, params))
    assert out.shape == (2, 10), out.shape

    ref = jax.block_until_ready(cnn1_reference(x, params))
    assert jnp.allclose(out, ref, rtol=1e-2, atol=1e-2), "mismatch vs pure-JAX reference"

    print("KERNEL_OK")
</pallas_src>

<mosaic_0001>
module attributes {stable_mosaic.version = 11 : i64} {
  func.func @_cnn1_kernel(%arg0: i32, %arg1: memref<1x28x28xf32, #tpu.memory_space<vmem>>, %arg2: memref<9x156xf32, #tpu.memory_space<vmem>>, %arg3: memref<1x156xf32, #tpu.memory_space<vmem>>, %arg4: memref<54x176xf32, #tpu.memory_space<vmem>>, %arg5: memref<1x176xf32, #tpu.memory_space<vmem>>, %arg6: memref<155x78xf32, #tpu.memory_space<vmem>>, %arg7: memref<13x25xf32, #tpu.memory_space<vmem>>, %arg8: memref<175x80xf32, #tpu.memory_space<vmem>>, %arg9: memref<5x10xf32, #tpu.memory_space<vmem>>, %arg10: memref<400x120xf32, #tpu.memory_space<vmem>>, %arg11: memref<1x120xf32, #tpu.memory_space<vmem>>, %arg12: memref<120x84xf32, #tpu.memory_space<vmem>>, %arg13: memref<1x84xf32, #tpu.memory_space<vmem>>, %arg14: memref<84x10xf32, #tpu.memory_space<vmem>>, %arg15: memref<1x10xf32, #tpu.memory_space<vmem>>, %arg16: memref<1x1x10xf32, #tpu.memory_space<vmem>>) attributes {dimension_semantics = [#tpu.dimension_semantics<parallel>], iteration_bounds = array<i64: 2>, scalar_prefetch = 0 : i64, scratch_operands = 0 : i64, tpu.core_type = #tpu.core_type<tc>, window_params = [{transform_indices = @transform_0, window_bounds = array<i64: 1, 28, 28>}, {pipeline_mode = #tpu.pipeline_mode<synchronous>, transform_indices = @transform_1, window_bounds = array<i64: 9, 156>}, {pipeline_mode = #tpu.pipeline_mode<synchronous>, transform_indices = @transform_2, window_bounds = array<i64: 1, 156>}, {pipeline_mode = #tpu.pipeline_mode<synchronous>, transform_indices = @transform_3, window_bounds = array<i64: 54, 176>}, {pipeline_mode = #tpu.pipeline_mode<synchronous>, transform_indices = @transform_4, window_bounds = array<i64: 1, 176>}, {pipeline_mode = #tpu.pipeline_mode<synchronous>, transform_indices = @transform_5, window_bounds = array<i64: 155, 78>}, {pipeline_mode = #tpu.pipeline_mode<synchronous>, transform_indices = @transform_6, window_bounds = array<i64: 13, 25>}, {pipeline_mode = #tpu.pipeline_mode<synchronous>, transform_indices = @transform_7, window_bounds = array<i64: 175, 80>}, {pipeline_mode = #tpu.pipeline_mode<synchronous>, transform_indices = @transform_8, window_bounds = array<i64: 5, 10>}, {pipeline_mode = #tpu.pipeline_mode<synchronous>, transform_indices = @transform_9, window_bounds = array<i64: 400, 120>}, {pipeline_mode = #tpu.pipeline_mode<synchronous>, transform_indices = @transform_10, window_bounds = array<i64: 1, 120>}, {pipeline_mode = #tpu.pipeline_mode<synchronous>, transform_indices = @transform_11, window_bounds = array<i64: 120, 84>}, {pipeline_mode = #tpu.pipeline_mode<synchronous>, transform_indices = @transform_12, window_bounds = array<i64: 1, 84>}, {pipeline_mode = #tpu.pipeline_mode<synchronous>, transform_indices = @transform_13, window_bounds = array<i64: 84, 10>}, {pipeline_mode = #tpu.pipeline_mode<synchronous>, transform_indices = @transform_14, window_bounds = array<i64: 1, 10>}, {transform_indices = @transform_15, window_bounds = array<i64: 1, 1, 10>}]} {
    %c0 = arith.constant 0 : index
    %c0_0 = arith.constant 0 : index
    %c0_1 = arith.constant 0 : index
    %0 = vector.load %arg1[%c0, %c0_0, %c0_1] : memref<1x28x28xf32, #tpu.memory_space<vmem>>, vector<1x28x28xf32>
    %1 = vector.shape_cast %0 : vector<1x28x28xf32> to vector<28x28xf32>
    %c0_2 = arith.constant 0 : index
    %c0_3 = arith.constant 0 : index
    %2 = vector.load %arg2[%c0_2, %c0_3] : memref<9x156xf32, #tpu.memory_space<vmem>>, vector<9x156xf32>
    %3 = vector.extract_strided_slice %1 {offsets = [0, 0], sizes = [26, 26], strides = [1, 1]} : vector<28x28xf32> to vector<26x26xf32>
    %4 = tpu.concatenate %3, %3 in 1 : vector<26x26xf32>, vector<26x26xf32> -> vector<26x52xf32>
    %5 = tpu.concatenate %4, %4 in 1 : vector<26x52xf32>, vector<26x52xf32> -> vector<26x104xf32>
    %6 = tpu.concatenate %5, %3, %3 in 1 : vector<26x104xf32>, vector<26x26xf32>, vector<26x26xf32> -> vector<26x156xf32>
    %7 = vector.extract_strided_slice %2 {offsets = [0, 0], sizes = [1, 156], strides = [1, 1]} : vector<9x156xf32> to vector<1x156xf32>
    %8 = vector.broadcast %7 : vector<1x156xf32> to vector<26x156xf32>
    %9 = arith.mulf %6, %8 : vector<26x156xf32>
    %10 = vector.extract_strided_slice %1 {offsets = [0, 1], sizes = [26, 26], strides = [1, 1]} : vector<28x28xf32> to vector<26x26xf32>
    %11 = tpu.concatenate %10, %10 in 1 : vector<26x26xf32>, vector<26x26xf32> -> vector<26x52xf32>
    %12 = tpu.concatenate %11, %11 in 1 : vector<26x52xf32>, vector<26x52xf32> -> vector<26x104xf32>
    %13 = tpu.concatenate %12, %10, %10 in 1 : vector<26x104xf32>, vector<26x26xf32>, vector<26x26xf32> -> vector<26x156xf32>
    %14 = vector.extract_strided_slice %2 {offsets = [1, 0], sizes = [1, 156], strides = [1, 1]} : vector<9x156xf32> to vector<1x156xf32>
    %15 = vector.broadcast %14 : vector<1x156xf32> to vector<26x156xf32>
    %16 = arith.mulf %13, %15 : vector<26x156xf32>
    %17 = arith.addf %9, %16 : vector<26x156xf32>
    %18 = vector.extract_strided_slice %1 {offsets = [0, 2], sizes = [26, 26], strides = [1, 1]} : vector<28x28xf32> to vector<26x26xf32>
    %19 = tpu.concatenate %18, %18 in 1 : vector<26x26xf32>, vector<26x26xf32> -> vector<26x52xf32>
    %20 = tpu.concatenate %19, %19 in 1 : vector<26x52xf32>, vector<26x52xf32> -> vector<26x104xf32>
    %21 = tpu.concatenate %20, %18, %18 in 1 : vector<26x104xf32>, vector<26x26xf32>, vector<26x26xf32> -> vector<26x156xf32>
    %22 = vector.extract_strided_slice %2 {offsets = [2, 0], sizes = [1, 156], strides = [1, 1]} : vector<9x156xf32> to vector<1x156xf32>
    %23 = vector.broadcast %22 : vector<1x156xf32> to vector<26x156xf32>
    %24 = arith.mulf %21, %23 : vector<26x156xf32>
    %25 = arith.addf %17, %24 : vector<26x156xf32>
    %26 = vector.extract_strided_slice %1 {offsets = [1, 0], sizes = [26, 26], strides = [1, 1]} : vector<28x28xf32> to vector<26x26xf32>
    %27 = tpu.concatenate %26, %26 in 1 : vector<26x26xf32>, vector<26x26xf32> -> vector<26x52xf32>
    %28 = tpu.concatenate %27, %27 in 1 : vector<26x52xf32>, vector<26x52xf32> -> vector<26x104xf32>
    %29 = tpu.concatenate %28, %26, %26 in 1 : vector<26x104xf32>, vector<26x26xf32>, vector<26x26xf32> -> vector<26x156xf32>
    %30 = vector.extract_strided_slice %2 {offsets = [3, 0], sizes = [1, 156], strides = [1, 1]} : vector<9x156xf32> to vector<1x156xf32>
    %31 = vector.broadcast %30 : vector<1x156xf32> to vector<26x156xf32>
    %32 = arith.mulf %29, %31 : vector<26x156xf32>
    %33 = arith.addf %25, %32 : vector<26x156xf32>
    %34 = vector.extract_strided_slice %1 {offsets = [1, 1], sizes = [26, 26], strides = [1, 1]} : vector<28x28xf32> to vector<26x26xf32>
    %35 = tpu.concatenate %34, %34 in 1 : vector<26x26xf32>, vector<26x26xf32> -> vector<26x52xf32>
    %36 = tpu.concatenate %35, %35 in 1 : vector<26x52xf32>, vector<26x52xf32> -> vector<26x104xf32>
    %37 = tpu.concatenate %36, %34, %34 in 1 : vector<26x104xf32>, vector<26x26xf32>, vector<26x26xf32> -> vector<26x156xf32>
    %38 = vector.extract_strided_slice %2 {offsets = [4, 0], sizes = [1, 156], strides = [1, 1]} : vector<9x156xf32> to vector<1x156xf32>
    %39 = vector.broadcast %38 : vector<1x156xf32> to vector<26x156xf32>
    %40 = arith.mulf %37, %39 : vector<26x156xf32>
    %41 = arith.addf %33, %40 : vector<26x156xf32>
    %42 = vector.extract_strided_slice %1 {offsets = [1, 2], sizes = [26, 26], strides = [1, 1]} : vector<28x28xf32> to vector<26x26xf32>
    %43 = tpu.concatenate %42, %42 in 1 : vector<26x26xf32>, vector<26x26xf32> -> vector<26x52xf32>
    %44 = tpu.concatenate %43, %43 in 1 : vector<26x52xf32>, vector<26x52xf32> -> vector<26x104xf32>
    %45 = tpu.concatenate %44, %42, %42 in 1 : vector<26x104xf32>, vector<26x26xf32>, vector<26x26xf32> -> vector<26x156xf32>
    %46 = vector.extract_strided_slice %2 {offsets = [5, 0], sizes = [1, 156], strides = [1, 1]} : vector<9x156xf32> to vector<1x156xf32>
    %47 = vector.broadcast %46 : vector<1x156xf32> to vector<26x156xf32>
    %48 = arith.mulf %45, %47 : vector<26x156xf32>
    %49 = arith.addf %41, %48 : vector<26x156xf32>
    %50 = vector.extract_strided_slice %1 {offsets = [2, 0], sizes = [26, 26], strides = [1, 1]} : vector<28x28xf32> to vector<26x26xf32>
    %51 = tpu.concatenate %50, %50 in 1 : vector<26x26xf32>, vector<26x26xf32> -> vector<26x52xf32>
    %52 = tpu.concatenate %51, %51 in 1 : vector<26x52xf32>, vector<26x52xf32> -> vector<26x104xf32>
    %53 = tpu.concatenate %52, %50, %50 in 1 : vector<26x104xf32>, vector<26x26xf32>, vector<26x26xf32> -> vector<26x156xf32>
    %54 = vector.extract_strided_slice %2 {offsets = [6, 0], sizes = [1, 156], strides = [1, 1]} : vector<9x156xf32> to vector<1x156xf32>
    %55 = vector.broadcast %54 : vector<1x156xf32> to vector<26x156xf32>
    %56 = arith.mulf %53, %55 : vector<26x156xf32>
    %57 = arith.addf %49, %56 : vector<26x156xf32>
    %58 = vector.extract_strided_slice %1 {offsets = [2, 1], sizes = [26, 26], strides = [1, 1]} : vector<28x28xf32> to vector<26x26xf32>
    %59 = tpu.concatenate %58, %58 in 1 : vector<26x26xf32>, vector<26x26xf32> -> vector<26x52xf32>
    %60 = tpu.concatenate %59, %59 in 1 : vector<26x52xf32>, vector<26x52xf32> -> vector<26x104xf32>
    %61 = tpu.concatenate %60, %58, %58 in 1 : vector<26x104xf32>, vector<26x26xf32>, vector<26x26xf32> -> vector<26x156xf32>
    %62 = vector.extract_strided_slice %2 {offsets = [7, 0], sizes = [1, 156], strides = [1, 1]} : vector<9x156xf32> to vector<1x156xf32>
    %63 = vector.broadcast %62 : vector<1x156xf32> to vector<26x156xf32>
    %64 = arith.mulf %61, %63 : vector<26x156xf32>
    %65 = arith.addf %57, %64 : vector<26x156xf32>
    %66 = vector.extract_strided_slice %1 {offsets = [2, 2], sizes = [26, 26], strides = [1, 1]} : vector<28x28xf32> to vector<26x26xf32>
    %67 = tpu.concatenate %66, %66 in 1 : vector<26x26xf32>, vector<26x26xf32> -> vector<26x52xf32>
    %68 = tpu.concatenate %67, %67 in 1 : vector<26x52xf32>, vector<26x52xf32> -> vector<26x104xf32>
    %69 = tpu.concatenate %68, %66, %66 in 1 : vector<26x104xf32>, vector<26x26xf32>, vector<26x26xf32> -> vector<26x156xf32>
    %70 = vector.extract_strided_slice %2 {offsets = [8, 0], sizes = [1, 156], strides = [1, 1]} : vector<9x156xf32> to vector<1x156xf32>
    %71 = vector.broadcast %70 : vector<1x156xf32> to vector<26x156xf32>
    %72 = arith.mulf %69, %71 : vector<26x156xf32>
    %73 = arith.addf %65, %72 : vector<26x156xf32>
    %c0_4 = arith.constant 0 : index
    %c0_5 = arith.constant 0 : index
    %74 = vector.load %arg3[%c0_4, %c0_5] : memref<1x156xf32, #tpu.memory_space<vmem>>, vector<1x156xf32>
    %75 = vector.broadcast %74 : vector<1x156xf32> to vector<26x156xf32>
    %76 = arith.addf %73, %75 : vector<26x156xf32>
    %cst = arith.constant 0.000000e+00 : f32
    %77 = vector.broadcast %cst : f32 to vector<26x156xf32>
    %78 = arith.maximumf %76, %77 : vector<26x156xf32>
    %79 = vector.extract_strided_slice %78 {offsets = [0, 0], sizes = [25, 156], strides = [1, 1]} : vector<26x156xf32> to vector<25x156xf32>
    %80 = vector.extract_strided_slice %78 {offsets = [1, 0], sizes = [25, 156], strides = [1, 1]} : vector<26x156xf32> to vector<25x156xf32>
    %81 = arith.maximumf %79, %80 : vector<25x156xf32>
    %82 = vector.extract_strided_slice %81 {offsets = [0, 0], sizes = [25, 155], strides = [1, 1]} : vector<25x156xf32> to vector<25x155xf32>
    %83 = vector.extract_strided_slice %81 {offsets = [0, 1], sizes = [25, 155], strides = [1, 1]} : vector<25x156xf32> to vector<25x155xf32>
    %84 = arith.maximumf %82, %83 : vector<25x155xf32>
    %c0_6 = arith.constant 0 : index
    %c0_7 = arith.constant 0 : index
    %85 = vector.load %arg6[%c0_6, %c0_7] : memref<155x78xf32, #tpu.memory_space<vmem>>, vector<155x78xf32>
    %cst_8 = arith.constant dense<0.000000e+00> : vector<25x78xf32>
    %86 = tpu.matmul %84, %85, %cst_8 {dimension_numbers = #tpu.dot_dimension_numbers<[1], [0], [0], [1], [0, 0, 1, 1], [], []>} : vector<25x155xf32>, vector<155x78xf32>, vector<25x78xf32> -> vector<25x78xf32>
    %c0_9 = arith.constant 0 : index
    %c0_10 = arith.constant 0 : index
    %87 = vector.load %arg7[%c0_9, %c0_10] : memref<13x25xf32, #tpu.memory_space<vmem>>, vector<13x25xf32>
    %cst_11 = arith.constant dense<0.000000e+00> : vector<13x78xf32>
    %88 = tpu.matmul %87, %86, %cst_11 {dimension_numbers = #tpu.dot_dimension_numbers<[1], [0], [0], [1], [0, 0, 1, 1], [], []>} : vector<13x25xf32>, vector<25x78xf32>, vector<13x78xf32> -> vector<13x78xf32>
    %c0_12 = arith.constant 0 : index
    %c0_13 = arith.constant 0 : index
    %89 = vector.load %arg4[%c0_12, %c0_13] : memref<54x176xf32, #tpu.memory_space<vmem>>, vector<54x176xf32>
    %90 = vector.extract_strided_slice %88 {offsets = [0, 0], sizes = [11, 11], strides = [1, 1]} : vector<13x78xf32> to vector<11x11xf32>
    %91 = tpu.concatenate %90, %90 in 1 : vector<11x11xf32>, vector<11x11xf32> -> vector<11x22xf32>
    %92 = tpu.concatenate %91, %91 in 1 : vector<11x22xf32>, vector<11x22xf32> -> vector<11x44xf32>
    %93 = tpu.concatenate %92, %92 in 1 : vector<11x44xf32>, vector<11x44xf32> -> vector<11x88xf32>
    %94 = tpu.concatenate %93, %93 in 1 : vector<11x88xf32>, vector<11x88xf32> -> vector<11x176xf32>
    %95 = vector.extract_strided_slice %89 {offsets = [0, 0], sizes = [1, 176], strides = [1, 1]} : vector<54x176xf32> to vector<1x176xf32>
    %96 = vector.broadcast %95 : vector<1x176xf32> to vector<11x176xf32>
    %97 = arith.mulf %94, %96 : vector<11x176xf32>
    %98 = vector.extract_strided_slice %88 {offsets = [0, 1], sizes = [11, 11], strides = [1, 1]} : vector<13x78xf32> to vector<11x11xf32>
    %99 = tpu.concatenate %98, %98 in 1 : vector<11x11xf32>, vector<11x11xf32> -> vector<11x22xf32>
    %100 = tpu.concatenate %99, %99 in 1 : vector<11x22xf32>, vector<11x22xf32> -> vector<11x44xf32>
    %101 = tpu.concatenate %100, %100 in 1 : vector<11x44xf32>, vector<11x44xf32> -> vector<11x88xf32>
    %102 = tpu.concatenate %101, %101 in 1 : vector<11x88xf32>, vector<11x88xf32> -> vector<11x176xf32>
    %103 = vector.extract_strided_slice %89 {offsets = [1, 0], sizes = [1, 176], strides = [1, 1]} : vector<54x176xf32> to vector<1x176xf32>
    %104 = vector.broadcast %103 : vector<1x176xf32> to vector<11x176xf32>
    %105 = arith.mulf %102, %104 : vector<11x176xf32>
    %106 = arith.addf %97, %105 : vector<11x176xf32>
    %107 = vector.extract_strided_slice %88 {offsets = [0, 2], sizes = [11, 11], strides = [1, 1]} : vector<13x78xf32> to vector<11x11xf32>
    %108 = tpu.concatenate %107, %107 in 1 : vector<11x11xf32>, vector<11x11xf32> -> vector<11x22xf32>
    %109 = tpu.concatenate %108, %108 in 1 : vector<11x22xf32>, vector<11x22xf32> -> vector<11x44xf32>
    %110 = tpu.concatenate %109, %109 in 1 : vector<11x44xf32>, vector<11x44xf32> -> vector<11x88xf32>
    %111 = tpu.concatenate %110, %110 in 1 : vector<11x88xf32>, vector<11x88xf32> -> vector<11x176xf32>
    %112 = vector.extract_strided_slice %89 {offsets = [2, 0], sizes = [1, 176], strides = [1, 1]} : vector<54x176xf32> to vector<1x176xf32>
    %113 = vector.broadcast %112 : vector<1x176xf32> to vector<11x176xf32>
    %114 = arith.mulf %111, %113 : vector<11x176xf32>
    %115 = arith.addf %106, %114 : vector<11x176xf32>
    %116 = vector.extract_strided_slice %88 {offsets = [1, 0], sizes = [11, 11], strides = [1, 1]} : vector<13x78xf32> to vector<11x11xf32>
    %117 = tpu.concatenate %116, %116 in 1 : vector<11x11xf32>, vector<11x11xf32> -> vector<11x22xf32>
    %118 = tpu.concatenate %117, %117 in 1 : vector<11x22xf32>, vector<11x22xf32> -> vector<11x44xf32>
    %119 = tpu.concatenate %118, %118 in 1 : vector<11x44xf32>, vector<11x44xf32> -> vector<11x88xf32>
    %120 = tpu.concatenate %119, %119 in 1 : vector<11x88xf32>, vector<11x88xf32> -> vector<11x176xf32>
    %121 = vector.extract_strided_slice %89 {offsets = [3, 0], sizes = [1, 176], strides = [1, 1]} : vector<54x176xf32> to vector<1x176xf32>
    %122 = vector.broadcast %121 : vector<1x176xf32> to vector<11x176xf32>
    %123 = arith.mulf %120, %122 : vector<11x176xf32>
    %124 = arith.addf %115, %123 : vector<11x176xf32>
    %125 = vector.extract_strided_slice %88 {offsets = [1, 1], sizes = [11, 11], strides = [1, 1]} : vector<13x78xf32> to vector<11x11xf32>
    %126 = tpu.concatenate %125, %125 in 1 : vector<11x11xf32>, vector<11x11xf32> -> vector<11x22xf32>
    %127 = tpu.concatenate %126, %126 in 1 : vector<11x22xf32>, vector<11x22xf32> -> vector<11x44xf32>
    %128 = tpu.concatenate %127, %127 in 1 : vector<11x44xf32>, vector<11x44xf32> -> vector<11x88xf32>
    %129 = tpu.concatenate %128, %128 in 1 : vector<11x88xf32>, vector<11x88xf32> -> vector<11x176xf32>
    %130 = vector.extract_strided_slice %89 {offsets = [4, 0], sizes = [1, 176], strides = [1, 1]} : vector<54x176xf32> to vector<1x176xf32>
    %131 = vector.broadcast %130 : vector<1x176xf32> to vector<11x176xf32>
    %132 = arith.mulf %129, %131 : vector<11x176xf32>
    %133 = arith.addf %124, %132 : vector<11x176xf32>
    %134 = vector.extract_strided_slice %88 {offsets = [1, 2], sizes = [11, 11], strides = [1, 1]} : vector<13x78xf32> to vector<11x11xf32>
    %135 = tpu.concatenate %134, %134 in 1 : vector<11x11xf32>, vector<11x11xf32> -> vector<11x22xf32>
    %136 = tpu.concatenate %135, %135 in 1 : vector<11x22xf32>, vector<11x22xf32> -> vector<11x44xf32>
    %137 = tpu.concatenate %136, %136 in 1 : vector<11x44xf32>, vector<11x44xf32> -> vector<11x88xf32>
    %138 = tpu.concatenate %137, %137 in 1 : vector<11x88xf32>, vector<11x88xf32> -> vector<11x176xf32>
    %139 = vector.extract_strided_slice %89 {offsets = [5, 0], sizes = [1, 176], strides = [1, 1]} : vector<54x176xf32> to vector<1x176xf32>
    %140 = vector.broadcast %139 : vector<1x176xf32> to vector<11x176xf32>
    %141 = arith.mulf %138, %140 : vector<11x176xf32>
    %142 = arith.addf %133, %141 : vector<11x176xf32>
    %143 = vector.extract_strided_slice %88 {offsets = [2, 0], sizes = [11, 11], strides = [1, 1]} : vector<13x78xf32> to vector<11x11xf32>
    %144 = tpu.concatenate %143, %143 in 1 : vector<11x11xf32>, vector<11x11xf32> -> vector<11x22xf32>
    %145 = tpu.concatenate %144, %144 in 1 : vector<11x22xf32>, vector<11x22xf32> -> vector<11x44xf32>
    %146 = tpu.concatenate %145, %145 in 1 : vector<11x44xf32>, vector<11x44xf32> -> vector<11x88xf32>
    %147 = tpu.concatenate %146, %146 in 1 : vector<11x88xf32>, vector<11x88xf32> -> vector<11x176xf32>
    %148 = vector.extract_strided_slice %89 {offsets = [6, 0], sizes = [1, 176], strides = [1, 1]} : vector<54x176xf32> to vector<1x176xf32>
    %149 = vector.broadcast %148 : vector<1x176xf32> to vector<11x176xf32>
    %150 = arith.mulf %147, %149 : vector<11x176xf32>
    %151 = arith.addf %142, %150 : vector<11x176xf32>
    %152 = vector.extract_strided_slice %88 {offsets = [2, 1], sizes = [11, 11], strides = [1, 1]} : vector<13x78xf32> to vector<11x11xf32>
    %153 = tpu.concatenate %152, %152 in 1 : vector<11x11xf32>, vector<11x11xf32> -> vector<11x22xf32>
    %154 = tpu.concatenate %153, %153 in 1 : vector<11x22xf32>, vector<11x22xf32> -> vector<11x44xf32>
    %155 = tpu.concatenate %154, %154 in 1 : vector<11x44xf32>, vector<11x44xf32> -> vector<11x88xf32>
    %156 = tpu.concatenate %155, %155 in 1 : vector<11x88xf32>, vector<11x88xf32> -> vector<11x176xf32>
    %157 = vector.extract_strided_slice %89 {offsets = [7, 0], sizes = [1, 176], strides = [1, 1]} : vector<54x176xf32> to vector<1x176xf32>
    %158 = vector.broadcast %157 : vector<1x176xf32> to vector<11x176xf32>
    %159 = arith.mulf %156, %158 : vector<11x176xf32>
    %160 = arith.addf %151, %159 : vector<11x176xf32>
    %161 = vector.extract_strided_slice %88 {offsets = [2, 2], sizes = [11, 11], strides = [1, 1]} : vector<13x78xf32> to vector<11x11xf32>
    %162 = tpu.concatenate %161, %161 in 1 : vector<11x11xf32>, vector<11x11xf32> -> vector<11x22xf32>
    %163 = tpu.concatenate %162, %162 in 1 : vector<11x22xf32>, vector<11x22xf32> -> vector<11x44xf32>
    %164 = tpu.concatenate %163, %163 in 1 : vector<11x44xf32>, vector<11x44xf32> -> vector<11x88xf32>
    %165 = tpu.concatenate %164, %164 in 1 : vector<11x88xf32>, vector<11x88xf32> -> vector<11x176xf32>
    %166 = vector.extract_strided_slice %89 {offsets = [8, 0], sizes = [1, 176], strides = [1, 1]} : vector<54x176xf32> to vector<1x176xf32>
    %167 = vector.broadcast %166 : vector<1x176xf32> to vector<11x176xf32>
    %168 = arith.mulf %165, %167 : vector<11x176xf32>
    %169 = arith.addf %160, %168 : vector<11x176xf32>
    %170 = vector.extract_strided_slice %88 {offsets = [0, 13], sizes = [11, 11], strides = [1, 1]} : vector<13x78xf32> to vector<11x11xf32>
    %171 = tpu.concatenate %170, %170 in 1 : vector<11x11xf32>, vector<11x11xf32> -> vector<11x22xf32>
    %172 = tpu.concatenate %171, %171 in 1 : vector<11x22xf32>, vector<11x22xf32> -> vector<11x44xf32>
    %173 = tpu.concatenate %172, %172 in 1 : vector<11x44xf32>, vector<11x44xf32> -> vector<11x88xf32>
    %174 = tpu.concatenate %173, %173 in 1 : vector<11x88xf32>, vector<11x88xf32> -> vector<11x176xf32>
    %175 = vector.extract_strided_slice %89 {offsets = [9, 0], sizes = [1, 176], strides = [1, 1]} : vector<54x176xf32> to vector<1x176xf32>
    %176 = vector.broadcast %175 : vector<1x176xf32> to vector<11x176xf32>
    %177 = arith.mulf %174, %176 : vector<11x176xf32>
    %178 = arith.addf %169, %177 : vector<11x176xf32>
    %179 = vector.extract_strided_slice %88 {offsets = [0, 14], sizes = [11, 11], strides = [1, 1]} : vector<13x78xf32> to vector<11x11xf32>
    %180 = tpu.concatenate %179, %179 in 1 : vector<11x11xf32>, vector<11x11xf32> -> vector<11x22xf32>
    %181 = tpu.concatenate %180, %180 in 1 : vector<11x22xf32>, vector<11x22xf32> -> vector<11x44xf32>
    %182 = tpu.concatenate %181, %181 in 1 : vector<11x44xf32>, vector<11x44xf32> -> vector<11x88xf32>
    %183 = tpu.concatenate %182, %182 in 1 : vector<11x88xf32>, vector<11x88xf32> -> vector<11x176xf32>
    %184 = vector.extract_strided_slice %89 {offsets = [10, 0], sizes = [1, 176], strides = [1, 1]} : vector<54x176xf32> to vector<1x176xf32>
    %185 = vector.broadcast %184 : vector<1x176xf32> to vector<11x176xf32>
    %186 = arith.mulf %183, %185 : vector<11x176xf32>
    %187 = arith.addf %178, %186 : vector<11x176xf32>
    %188 = vector.extract_strided_slice %88 {offsets = [0, 15], sizes = [11, 11], strides = [1, 1]} : vector<13x78xf32> to vector<11x11xf32>
    %189 = tpu.concatenate %188, %188 in 1 : vector<11x11xf32>, vector<11x11xf32> -> vector<11x22xf32>
    %190 = tpu.concatenate %189, %189 in 1 : vector<11x22xf32>, vector<11x22xf32> -> vector<11x44xf32>
    %191 = tpu.concatenate %190, %190 in 1 : vector<11x44xf32>, vector<11x44xf32> -> vector<11x88xf32>
    %192 = tpu.concatenate %191, %191 in 1 : vector<11x88xf32>, vector<11x88xf32> -> vector<11x176xf32>
    %193 = vector.extract_strided_slice %89 {offsets = [11, 0], sizes = [1, 176], strides = [1, 1]} : vector<54x176xf32> to vector<1x176xf32>
    %194 = vector.broadcast %193 : vector<1x176xf32> to vector<11x176xf32>
    %195 = arith.mulf %192, %194 : vector<11x176xf32>
    %196 = arith.addf %187, %195 : vector<11x176xf32>
    %197 = vector.extract_strided_slice %88 {offsets = [1, 13], sizes = [11, 11], strides = [1, 1]} : vector<13x78xf32> to vector<11x11xf32>
    %198 = tpu.concatenate %197, %197 in 1 : vector<11x11xf32>, vector<11x11xf32> -> vector<11x22xf32>
    %199 = tpu.concatenate %198, %198 in 1 : vector<11x22xf32>, vector<11x22xf32> -> vector<11x44xf32>
    %200 = tpu.concatenate %199, %199 in 1 : vector<11x44xf32>, vector<11x44xf32> -> vector<11x88xf32>
    %201 = tpu.concatenate %200, %200 in 1 : vector<11x88xf32>, vector<11x88xf32> -> vector<11x176xf32>
    %202 = vector.extract_strided_slice %89 {offsets = [12, 0], sizes = [1, 176], strides = [1, 1]} : vector<54x176xf32> to vector<1x176xf32>
    %203 = vector.broadcast %202 : vector<1x176xf32> to vector<11x176xf32>
    %204 = arith.mulf %201, %203 : vector<11x176xf32>
    %205 = arith.addf %196, %204 : vector<11x176xf32>
    %206 = vector.extract_strided_slice %88 {offsets = [1, 14], sizes = [11, 11], strides = [1, 1]} : vector<13x78xf32> to vector<11x11xf32>
    %207 = tpu.concatenate %206, %206 in 1 : vector<11x11xf32>, vector<11x11xf32> -> vector<11x22xf32>
    %208 = tpu.concatenate %207, %207 in 1 : vector<11x22xf32>, vector<11x22xf32> -> vector<11x44xf32>
    %209 = tpu.concatenate %208, %208 in 1 : vector<11x44xf32>, vector<11x44xf32> -> vector<11x88xf32>
    %210 = tpu.concatenate %209, %209 in 1 : vector<11x88xf32>, vector<11x88xf32> -> vector<11x176xf32>
    %211 = vector.extract_strided_slice %89 {offsets = [13, 0], sizes = [1, 176], strides = [1, 1]} : vector<54x176xf32> to vector<1x176xf32>
    %212 = vector.broadcast %211 : vector<1x176xf32> to vector<11x176xf32>
    %213 = arith.mulf %210, %212 : vector<11x176xf32>
    %214 = arith.addf %205, %213 : vector<11x176xf32>
    %215 = vector.extract_strided_slice %88 {offsets = [1, 15], sizes = [11, 11], strides = [1, 1]} : vector<13x78xf32> to vector<11x11xf32>
    %216 = tpu.concatenate %215, %215 in 1 : vector<11x11xf32>, vector<11x11xf32> -> vector<11x22xf32>
    %217 = tpu.concatenate %216, %216 in 1 : vector<11x22xf32>, vector<11x22xf32> -> vector<11x44xf32>
    %218 = tpu.concatenate %217, %217 in 1 : vector<11x44xf32>, vector<11x44xf32> -> vector<11x88xf32>
    %219 = tpu.concatenate %218, %218 in 1 : vector<11x88xf32>, vector<11x88xf32> -> vector<11x176xf32>
    %220 = vector.extract_strided_slice %89 {offsets = [14, 0], sizes = [1, 176], strides = [1, 1]} : vector<54x176xf32> to vector<1x176xf32>
    %221 = vector.broadcast %220 : vector<1x176xf32> to vector<11x176xf32>
    %222 = arith.mulf %219, %221 : vector<11x176xf32>
    %223 = arith.addf %214, %222 : vector<11x176xf32>
    %224 = vector.extract_strided_slice %88 {offsets = [2, 13], sizes = [11, 11], strides = [1, 1]} : vector<13x78xf32> to vector<11x11xf32>
    %225 = tpu.concatenate %224, %224 in 1 : vector<11x11xf32>, vector<11x11xf32> -> vector<11x22xf32>
    %226 = tpu.concatenate %225, %225 in 1 : vector<11x22xf32>, vector<11x22xf32> -> vector<11x44xf32>
    %227 = tpu.concatenate %226, %226 in 1 : vector<11x44xf32>, vector<11x44xf32> -> vector<11x88xf32>
    %228 = tpu.concatenate %227, %227 in 1 : vector<11x88xf32>, vector<11x88xf32> -> vector<11x176xf32>
    %229 = vector.extract_strided_slice %89 {offsets = [15, 0], sizes = [1, 176], strides = [1, 1]} : vector<54x176xf32> to vector<1x176xf32>
    %230 = vector.broadcast %229 : vector<1x176xf32> to vector<11x176xf32>
    %231 = arith.mulf %228, %230 : vector<11x176xf32>
    %232 = arith.addf %223, %231 : vector<11x176xf32>
    %233 = vector.extract_strided_slice %88 {offsets = [2, 14], sizes = [11, 11], strides = [1, 1]} : vector<13x78xf32> to vector<11x11xf32>
    %234 = tpu.concatenate %233, %233 in 1 : vector<11x11xf32>, vector<11x11xf32> -> vector<11x22xf32>
    %235 = tpu.concatenate %234, %234 in 1 : vector<11x22xf32>, vector<11x22xf32> -> vector<11x44xf32>
    %236 = tpu.concatenate %235, %235 in 1 : vector<11x44xf32>, vector<11x44xf32> -> vector<11x88xf32>
    %237 = tpu.concatenate %236, %236 in 1 : vector<11x88xf32>, vector<11x88xf32> -> vector<11x176xf32>
    %238 = vector.extract_strided_slice %89 {offsets = [16, 0], sizes = [1, 176], strides = [1, 1]} : vector<54x176xf32> to vector<1x176xf32>
    %239 = vector.broadcast %238 : vector<1x176xf32> to vector<11x176xf32>
    %240 = arith.mulf %237, %239 : vector<11x176xf32>
    %241 = arith.addf %232, %240 : vector<11x176xf32>
    %242 = vector.extract_strided_slice %88 {offsets = [2, 15], sizes = [11, 11], strides = [1, 1]} : vector<13x78xf32> to vector<11x11xf32>
    %243 = tpu.concatenate %242, %242 in 1 : vector<11x11xf32>, vector<11x11xf32> -> vector<11x22xf32>
    %244 = tpu.concatenate %243, %243 in 1 : vector<11x22xf32>, vector<11x22xf32> -> vector<11x44xf32>
    %245 = tpu.concatenate %244, %244 in 1 : vector<11x44xf32>, vector<11x44xf32> -> vector<11x88xf32>
    %246 = tpu.concatenate %245, %245 in 1 : vector<11x88xf32>, vector<11x88xf32> -> vector<11x176xf32>
    %247 = vector.extract_strided_slice %89 {offsets = [17, 0], sizes = [1, 176], strides = [1, 1]} : vector<54x176xf32> to vector<1x176xf32>
    %248 = vector.broadcast %247 : vector<1x176xf32> to vector<11x176xf32>
    %249 = arith.mulf %246, %248 : vector<11x176xf32>
    %250 = arith.addf %241, %249 : vector<11x176xf32>
    %251 = vector.extract_strided_slice %88 {offsets = [0, 26], sizes = [11, 11], strides = [1, 1]} : vector<13x78xf32> to vector<11x11xf32>
    %252 = tpu.concatenate %251, %251 in 1 : vector<11x11xf32>, vector<11x11xf32> -> vector<11x22xf32>
    %253 = tpu.concatenate %252, %252 in 1 : vector<11x22xf32>, vector<11x22xf32> -> vector<11x44xf32>
    %254 = tpu.concatenate %253, %253 in 1 : vector<11x44xf32>, vector<11x44xf32> -> vector<11x88xf32>
    %255 = tpu.concatenate %254, %254 in 1 : vector<11x88xf32>, vector<11x88xf32> -> vector<11x176xf32>
    %256 = vector.extract_strided_slice %89 {offsets = [18, 0], sizes = [1, 176], strides = [1, 1]} : vector<54x176xf32> to vector<1x176xf32>
    %257 = vector.broadcast %256 : vector<1x176xf32> to vector<11x176xf32>
    %258 = arith.mulf %255, %257 : vector<11x176xf32>
    %259 = arith.addf %250, %258 : vector<11x176xf32>
    %260 = vector.extract_strided_slice %88 {offsets = [0, 27], sizes = [11, 11], strides = [1, 1]} : vector<13x78xf32> to vector<11x11xf32>
    %261 = tpu.concatenate %260, %260 in 1 : vector<11x11xf32>, vector<11x11xf32> -> vector<11x22xf32>
    %262 = tpu.concatenate %261, %261 in 1 : vector<11x22xf32>, vector<11x22xf32> -> vector<11x44xf32>
    %263 = tpu.concatenate %262, %262 in 1 : vector<11x44xf32>, vector<11x44xf32> -> vector<11x88xf32>
    %264 = tpu.concatenate %263, %263 in 1 : vector<11x88xf32>, vector<11x88xf32> -> vector<11x176xf32>
    %265 = vector.extract_strided_slice %89 {offsets = [19, 0], sizes = [1, 176], strides = [1, 1]} : vector<54x176xf32> to vector<1x176xf32>
    %266 = vector.broadcast %265 : vector<1x176xf32> to vector<11x176xf32>
    %267 = arith.mulf %264, %266 : vector<11x176xf32>
    %268 = arith.addf %259, %267 : vector<11x176xf32>
    %269 = vector.extract_strided_slice %88 {offsets = [0, 28], sizes = [11, 11], strides = [1, 1]} : vector<13x78xf32> to vector<11x11xf32>
    %270 = tpu.concatenate %269, %269 in 1 : vector<11x11xf32>, vector<11x11xf32> -> vector<11x22xf32>
    %271 = tpu.concatenate %270, %270 in 1 : vector<11x22xf32>, vector<11x22xf32> -> vector<11x44xf32>
    %272 = tpu.concatenate %271, %271 in 1 : vector<11x44xf32>, vector<11x44xf32> -> vector<11x88xf32>
    %273 = tpu.concatenate %272, %272 in 1 : vector<11x88xf32>, vector<11x88xf32> -> vector<11x176xf32>
    %274 = vector.extract_strided_slice %89 {offsets = [20, 0], sizes = [1, 176], strides = [1, 1]} : vector<54x176xf32> to vector<1x176xf32>
    %275 = vector.broadcast %274 : vector<1x176xf32> to vector<11x176xf32>
    %276 = arith.mulf %273, %275 : vector<11x176xf32>
    %277 = arith.addf %268, %276 : vector<11x176xf32>
    %278 = vector.extract_strided_slice %88 {offsets = [1, 26], sizes = [11, 11], strides = [1, 1]} : vector<13x78xf32> to vector<11x11xf32>
    %279 = tpu.concatenate %278, %278 in 1 : vector<11x11xf32>, vector<11x11xf32> -> vector<11x22xf32>
    %280 = tpu.concatenate %279, %279 in 1 : vector<11x22xf32>, vector<11x22xf32> -> vector<11x44xf32>
    %281 = tpu.concatenate %280, %280 in 1 : vector<11x44xf32>, vector<11x44xf32> -> vector<11x88xf32>
    %282 = tpu.concatenate %281, %281 in 1 : vector<11x88xf32>, vector<11x88xf32> -> vector<11x176xf32>
    %283 = vector.extract_strided_slice %89 {offsets = [21, 0], sizes = [1, 176], strides = [1, 1]} : vector<54x176xf32> to vector<1x176xf32>
    %284 = vector.broadcast %283 : vector<1x176xf32> to vector<11x176xf32>
    %285 = arith.mulf %282, %284 : vector<11x176xf32>
    %286 = arith.addf %277, %285 : vector<11x176xf32>
    %287 = vector.extract_strided_slice %88 {offsets = [1, 27], sizes = [11, 11], strides = [1, 1]} : vector<13x78xf32> to vector<11x11xf32>
    %288 = tpu.concatenate %287, %287 in 1 : vector<11x11xf32>, vector<11x11xf32> -> vector<11x22xf32>
    %289 = tpu.concatenate %288, %288 in 1 : vector<11x22xf32>, vector<11x22xf32> -> vector<11x44xf32>
    %290 = tpu.concatenate %289, %289 in 1 : vector<11x44xf32>, vector<11x44xf32> -> vector<11x88xf32>
    %291 = tpu.concatenate %290, %290 in 1 : vector<11x88xf32>, vector<11x88xf32> -> vector<11x176xf32>
    %292 = vector.extract_strided_slice %89 {offsets = [22, 0], sizes = [1, 176], strides = [1, 1]} : vector<54x176xf32> to vector<1x176xf32>
    %293 = vector.broadcast %292 : vector<1x176xf32> to vector<11x176xf32>
    %294 = arith.mulf %291, %293 : vector<11x176xf32>
    %295 = arith.addf %286, %294 : vector<11x176xf32>
    %296 = vector.extract_strided_slice %88 {offsets = [1, 28], sizes = [11, 11], strides = [1, 1]} : vector<13x78xf32> to vector<11x11xf32>
    %297 = tpu.concatenate %296, %296 in 1 : vector<11x11xf32>, vector<11x11xf32> -> vector<11x22xf32>
    %298 = tpu.concatenate %297, %297 in 1 : vector<11x22xf32>, vector<11x22xf32> -> vector<11x44xf32>
    %299 = tpu.concatenate %298, %298 in 1 : vector<11x44xf32>, vector<11x44xf32> -> vector<11x88xf32>
    %300 = tpu.concatenate %299, %299 in 1 : vector<11x88xf32>, vector<11x88xf32> -> vector<11x176xf32>
    %301 = vector.extract_strided_slice %89 {offsets = [23, 0], sizes = [1, 176], strides = [1, 1]} : vector<54x176xf32> to vector<1x176xf32>
    %302 = vector.broadcast %301 : vector<1x176xf32> to vector<11x176xf32>
    %303 = arith.mulf %300, %302 : vector<11x176xf32>
    %304 = arith.addf %295, %303 : vector<11x176xf32>
    %305 = vector.extract_strided_slice %88 {offsets = [2, 26], sizes = [11, 11], strides = [1, 1]} : vector<13x78xf32> to vector<11x11xf32>
    %306 = tpu.concatenate %305, %305 in 1 : vector<11x11xf32>, vector<11x11xf32> -> vector<11x22xf32>
    %307 = tpu.concatenate %306, %306 in 1 : vector<11x22xf32>, vector<11x22xf32> -> vector<11x44xf32>
    %308 = tpu.concatenate %307, %307 in 1 : vector<11x44xf32>, vector<11x44xf32> -> vector<11x88xf32>
    %309 = tpu.concatenate %308, %308 in 1 : vector<11x88xf32>, vector<11x88xf32> -> vector<11x176xf32>
    %310 = vector.extract_strided_slice %89 {offsets = [24, 0], sizes = [1, 176], strides = [1, 1]} : vector<54x176xf32> to vector<1x176xf32>
    %311 = vector.broadcast %310 : vector<1x176xf32> to vector<11x176xf32>
    %312 = arith.mulf %309, %311 : vector<11x176xf32>
    %313 = arith.addf %304, %312 : vector<11x176xf32>
    %314 = vector.extract_strided_slice %88 {offsets = [2, 27], sizes = [11, 11], strides = [1, 1]} : vector<13x78xf32> to vector<11x11xf32>
    %315 = tpu.concatenate %314, %314 in 1 : vector<11x11xf32>, vector<11x11xf32> -> vector<11x22xf32>
    %316 = tpu.concatenate %315, %315 in 1 : vector<11x22xf32>, vector<11x22xf32> -> vector<11x44xf32>
    %317 = tpu.concatenate %316, %316 in 1 : vector<11x44xf32>, vector<11x44xf32> -> vector<11x88xf32>
    %318 = tpu.concatenate %317, %317 in 1 : vector<11x88xf32>, vector<11x88xf32> -> vector<11x176xf32>
    %319 = vector.extract_strided_slice %89 {offsets = [25, 0], sizes = [1, 176], strides = [1, 1]} : vector<54x176xf32> to vector<1x176xf32>
    %320 = vector.broadcast %319 : vector<1x176xf32> to vector<11x176xf32>
    %321 = arith.mulf %318, %320 : vector<11x176xf32>
    %322 = arith.addf %313, %321 : vector<11x176xf32>
    %323 = vector.extract_strided_slice %88 {offsets = [2, 28], sizes = [11, 11], strides = [1, 1]} : vector<13x78xf32> to vector<11x11xf32>
    %324 = tpu.concatenate %323, %323 in 1 : vector<11x11xf32>, vector<11x11xf32> -> vector<11x22xf32>
    %325 = tpu.concatenate %324, %324 in 1 : vector<11x22xf32>, vector<11x22xf32> -> vector<11x44xf32>
    %326 = tpu.concatenate %325, %325 in 1 : vector<11x44xf32>, vector<11x44xf32> -> vector<11x88xf32>
    %327 = tpu.concatenate %326, %326 in 1 : vector<11x88xf32>, vector<11x88xf32> -> vector<11x176xf32>
    %328 = vector.extract_strided_slice %89 {offsets = [26, 0], sizes = [1, 176], strides = [1, 1]} : vector<54x176xf32> to vector<1x176xf32>
    %329 = vector.broadcast %328 : vector<1x176xf32> to vector<11x176xf32>
    %330 = arith.mulf %327, %329 : vector<11x176xf32>
    %331 = arith.addf %322, %330 : vector<11x176xf32>
    %332 = vector.extract_strided_slice %88 {offsets = [0, 39], sizes = [11, 11], strides = [1, 1]} : vector<13x78xf32> to vector<11x11xf32>
    %333 = tpu.concatenate %332, %332 in 1 : vector<11x11xf32>, vector<11x11xf32> -> vector<11x22xf32>
    %334 = tpu.concatenate %333, %333 in 1 : vector<11x22xf32>, vector<11x22xf32> -> vector<11x44xf32>
    %335 = tpu.concatenate %334, %334 in 1 : vector<11x44xf32>, vector<11x44xf32> -> vector<11x88xf32>
    %336 = tpu.concatenate %335, %335 in 1 : vector<11x88xf32>, vector<11x88xf32> -> vector<11x176xf32>
    %337 = vector.extract_strided_slice %89 {offsets = [27, 0], sizes = [1, 176], strides = [1, 1]} : vector<54x176xf32> to vector<1x176xf32>
    %338 = vector.broadcast %337 : vector<1x176xf32> to vector<11x176xf32>
    %339 = arith.mulf %336, %338 : vector<11x176xf32>
    %340 = arith.addf %331, %339 : vector<11x176xf32>
    %341 = vector.extract_strided_slice %88 {offsets = [0, 40], sizes = [11, 11], strides = [1, 1]} : vector<13x78xf32> to vector<11x11xf32>
    %342 = tpu.concatenate %341, %341 in 1 : vector<11x11xf32>, vector<11x11xf32> -> vector<11x22xf32>
    %343 = tpu.concatenate %342, %342 in 1 : vector<11x22xf32>, vector<11x22xf32> -> vector<11x44xf32>
    %344 = tpu.concatenate %343, %343 in 1 : vector<11x44xf32>, vector<11x44xf32> -> vector<11x88xf32>
    %345 = tpu.concatenate %344, %344 in 1 : vector<11x88xf32>, vector<11x88xf32> -> vector<11x176xf32>
    %346 = vector.extract_strided_slice %89 {offsets = [28, 0], sizes = [1, 176], strides = [1, 1]} : vector<54x176xf32> to vector<1x176xf32>
    %347 = vector.broadcast %346 : vector<1x176xf32> to vector<11x176xf32>
    %348 = arith.mulf %345, %347 : vector<11x176xf32>
    %349 = arith.addf %340, %348 : vector<11x176xf32>
    %350 = vector.extract_strided_slice %88 {offsets = [0, 41], sizes = [11, 11], strides = [1, 1]} : vector<13x78xf32> to vector<11x11xf32>
    %351 = tpu.concatenate %350, %350 in 1 : vector<11x11xf32>, vector<11x11xf32> -> vector<11x22xf32>
    %352 = tpu.concatenate %351, %351 in 1 : vector<11x22xf32>, vector<11x22xf32> -> vector<11x44xf32>
    %353 = tpu.concatenate %352, %352 in 1 : vector<11x44xf32>, vector<11x44xf32> -> vector<11x88xf32>
    %354 = tpu.concatenate %353, %353 in 1 : vector<11x88xf32>, vector<11x88xf32> -> vector<11x176xf32>
    %355 = vector.extract_strided_slice %89 {offsets = [29, 0], sizes = [1, 176], strides = [1, 1]} : vector<54x176xf32> to vector<1x176xf32>
    %356 = vector.broadcast %355 : vector<1x176xf32> to vector<11x176xf32>
    %357 = arith.mulf %354, %356 : vector<11x176xf32>
    %358 = arith.addf %349, %357 : vector<11x176xf32>
    %359 = vector.extract_strided_slice %88 {offsets = [1, 39], sizes = [11, 11], strides = [1, 1]} : vector<13x78xf32> to vector<11x11xf32>
    %360 = tpu.concatenate %359, %359 in 1 : vector<11x11xf32>, vector<11x11xf32> -> vector<11x22xf32>
    %361 = tpu.concatenate %360, %360 in 1 : vector<11x22xf32>, vector<11x22xf32> -> vector<11x44xf32>
    %362 = tpu.concatenate %361, %361 in 1 : vector<11x44xf32>, vector<11x44xf32> -> vector<11x88xf32>
    %363 = tpu.concatenate %362, %362 in 1 : vector<11x88xf32>, vector<11x88xf32> -> vector<11x176xf32>
    %364 = vector.extract_strided_slice %89 {offsets = [30, 0], sizes = [1, 176], strides = [1, 1]} : vector<54x176xf32> to vector<1x176xf32>
    %365 = vector.broadcast %364 : vector<1x176xf32> to vector<11x176xf32>
    %366 = arith.mulf %363, %365 : vector<11x176xf32>
    %367 = arith.addf %358, %366 : vector<11x176xf32>
    %368 = vector.extract_strided_slice %88 {offsets = [1, 40], sizes = [11, 11], strides = [1, 1]} : vector<13x78xf32> to vector<11x11xf32>
    %369 = tpu.concatenate %368, %368 in 1 : vector<11x11xf32>, vector<11x11xf32> -> vector<11x22xf32>
    %370 = tpu.concatenate %369, %369 in 1 : vector<11x22xf32>, vector<11x22xf32> -> vector<11x44xf32>
    %371 = tpu.concatenate %370, %370 in 1 : vector<11x44xf32>, vector<11x44xf32> -> vector<11x88xf32>
    %372 = tpu.concatenate %371, %371 in 1 : vector<11x88xf32>, vector<11x88xf32> -> vector<11x176xf32>
    %373 = vector.extract_strided_slice %89 {offsets = [31, 0], sizes = [1, 176], strides = [1, 1]} : vector<54x176xf32> to vector<1x176xf32>
    %374 = vector.broadcast %373 : vector<1x176xf32> to vector<11x176xf32>
    %375 = arith.mulf %372, %374 : vector<11x176xf32>
    %376 = arith.addf %367, %375 : vector<11x176xf32>
    %377 = vector.extract_strided_slice %88 {offsets = [1, 41], sizes = [11, 11], strides = [1, 1]} : vector<13x78xf32> to vector<11x11xf32>
    %378 = tpu.concatenate %377, %377 in 1 : vector<11x11xf32>, vector<11x11xf32> -> vector<11x22xf32>
    %379 = tpu.concatenate %378, %378 in 1 : vector<11x22xf32>, vector<11x22xf32> -> vector<11x44xf32>
    %380 = tpu.concatenate %379, %379 in 1 : vector<11x44xf32>, vector<11x44xf32> -> vector<11x88xf32>
    %381 = tpu.concatenate %380, %380 in 1 : vector<11x88xf32>, vector<11x88xf32> -> vector<11x176xf32>
    %382 = vector.extract_strided_slice %89 {offsets = [32, 0], sizes = [1, 176], strides = [1, 1]} : vector<54x176xf32> to vector<1x176xf32>
    %383 = vector.broadcast %382 : vector<1x176xf32> to vector<11x176xf32>
    %384 = arith.mulf %381, %383 : vector<11x176xf32>
    %385 = arith.addf %376, %384 : vector<11x176xf32>
    %386 = vector.extract_strided_slice %88 {offsets = [2, 39], sizes = [11, 11], strides = [1, 1]} : vector<13x78xf32> to vector<11x11xf32>
    %387 = tpu.concatenate %386, %386 in 1 : vector<11x11xf32>, vector<11x11xf32> -> vector<11x22xf32>
    %388 = tpu.concatenate %387, %387 in 1 : vector<11x22xf32>, vector<11x22xf32> -> vector<11x44xf32>
    %389 = tpu.concatenate %388, %388 in 1 : vector<11x44xf32>, vector<11x44xf32> -> vector<11x88xf32>
    %390 = tpu.concatenate %389, %389 in 1 : vector<11x88xf32>, vector<11x88xf32> -> vector<11x176xf32>
    %391 = vector.extract_strided_slice %89 {offsets = [33, 0], sizes = [1, 176], strides = [1, 1]} : vector<54x176xf32> to vector<1x176xf32>
    %392 = vector.broadcast %391 : vector<1x176xf32> to vector<11x176xf32>
    %393 = arith.mulf %390, %392 : vector<11x176xf32>
    %394 = arith.addf %385, %393 : vector<11x176xf32>
    %395 = vector.extract_strided_slice %88 {offsets = [2, 40], sizes = [11, 11], strides = [1, 1]} : vector<13x78xf32> to vector<11x11xf32>
    %396 = tpu.concatenate %395, %395 in 1 : vector<11x11xf32>, vector<11x11xf32> -> vector<11x22xf32>
    %397 = tpu.concatenate %396, %396 in 1 : vector<11x22xf32>, vector<11x22xf32> -> vector<11x44xf32>
    %398 = tpu.concatenate %397, %397 in 1 : vector<11x44xf32>, vector<11x44xf32> -> vector<11x88xf32>
    %399 = tpu.concatenate %398, %398 in 1 : vector<11x88xf32>, vector<11x88xf32> -> vector<11x176xf32>
    %400 = vector.extract_strided_slice %89 {offsets = [34, 0], sizes = [1, 176], strides = [1, 1]} : vector<54x176xf32> to vector<1x176xf32>
    %401 = vector.broadcast %400 : vector<1x176xf32> to vector<11x176xf32>
    %402 = arith.mulf %399, %401 : vector<11x176xf32>
    %403 = arith.addf %394, %402 : vector<11x176xf32>
    %404 = vector.extract_strided_slice %88 {offsets = [2, 41], sizes = [11, 11], strides = [1, 1]} : vector<13x78xf32> to vector<11x11xf32>
    %405 = tpu.concatenate %404, %404 in 1 : vector<11x11xf32>, vector<11x11xf32> -> vector<11x22xf32>
    %406 = tpu.concatenate %405, %405 in 1 : vector<11x22xf32>, vector<11x22xf32> -> vector<11x44xf32>
    %407 = tpu.concatenate %406, %406 in 1 : vector<11x44xf32>, vector<11x44xf32> -> vector<11x88xf32>
    %408 = tpu.concatenate %407, %407 in 1 : vector<11x88xf32>, vector<11x88xf32> -> vector<11x176xf32>
    %409 = vector.extract_strided_slice %89 {offsets = [35, 0], sizes = [1, 176], strides = [1, 1]} : vector<54x176xf32> to vector<1x176xf32>
    %410 = vector.broadcast %409 : vector<1x176xf32> to vector<11x176xf32>
    %411 = arith.mulf %408, %410 : vector<11x176xf32>
    %412 = arith.addf %403, %411 : vector<11x176xf32>
    %413 = vector.extract_strided_slice %88 {offsets = [0, 52], sizes = [11, 11], strides = [1, 1]} : vector<13x78xf32> to vector<11x11xf32>
    %414 = tpu.concatenate %413, %413 in 1 : vector<11x11xf32>, vector<11x11xf32> -> vector<11x22xf32>
    %415 = tpu.concatenate %414, %414 in 1 : vector<11x22xf32>, vector<11x22xf32> -> vector<11x44xf32>
    %416 = tpu.concatenate %415, %415 in 1 : vector<11x44xf32>, vector<11x44xf32> -> vector<11x88xf32>
    %417 = tpu.concatenate %416, %416 in 1 : vector<11x88xf32>, vector<11x88xf32> -> vector<11x176xf32>
    %418 = vector.extract_strided_slice %89 {offsets = [36, 0], sizes = [1, 176], strides = [1, 1]} : vector<54x176xf32> to vector<1x176xf32>
    %419 = vector.broadcast %418 : vector<1x176xf32> to vector<11x176xf32>
    %420 = arith.mulf %417, %419 : vector<11x176xf32>
    %421 = arith.addf %412, %420 : vector<11x176xf32>
    %422 = vector.extract_strided_slice %88 {offsets = [0, 53], sizes = [11, 11], strides = [1, 1]} : vector<13x78xf32> to vector<11x11xf32>
    %423 = tpu.concatenate %422, %422 in 1 : vector<11x11xf32>, vector<11x11xf32> -> vector<11x22xf32>
    %424 = tpu.concatenate %423, %423 in 1 : vector<11x22xf32>, vector<11x22xf32> -> vector<11x44xf32>
    %425 = tpu.concatenate %424, %424 in 1 : vector<11x44xf32>, vector<11x44xf32> -> vector<11x88xf32>
    %426 = tpu.concatenate %425, %425 in 1 : vector<11x88xf32>, vector<11x88xf32> -> vector<11x176xf32>
    %427 = vector.extract_strided_slice %89 {offsets = [37, 0], sizes = [1, 176], strides = [1, 1]} : vector<54x176xf32> to vector<1x176xf32>
    %428 = vector.broadcast %427 : vector<1x176xf32> to vector<11x176xf32>
    %429 = arith.mulf %426, %428 : vector<11x176xf32>
    %430 = arith.addf %421, %429 : vector<11x176xf32>
    %431 = vector.extract_strided_slice %88 {offsets = [0, 54], sizes = [11, 11], strides = [1, 1]} : vector<13x78xf32> to vector<11x11xf32>
    %432 = tpu.concatenate %431, %431 in 1 : vector<11x11xf32>, vector<11x11xf32> -> vector<11x22xf32>
    %433 = tpu.concatenate %432, %432 in 1 : vector<11x22xf32>, vector<11x22xf32> -> vector<11x44xf32>
    %434 = tpu.concatenate %433, %433 in 1 : vector<11x44xf32>, vector<11x44xf32> -> vector<11x88xf32>
    %435 = tpu.concatenate %434, %434 in 1 : vector<11x88xf32>, vector<11x88xf32> -> vector<11x176xf32>
    %436 = vector.extract_strided_slice %89 {offsets = [38, 0], sizes = [1, 176], strides = [1, 1]} : vector<54x176xf32> to vector<1x176xf32>
    %437 = vector.broadcast %436 : vector<1x176xf32> to vector<11x176xf32>
    %438 = arith.mulf %435, %437 : vector<11x176xf32>
    %439 = arith.addf %430, %438 : vector<11x176xf32>
    %440 = vector.extract_strided_slice %88 {offsets = [1, 52], sizes = [11, 11], strides = [1, 1]} : vector<13x78xf32> to vector<11x11xf32>
    %441 = tpu.concatenate %440, %440 in 1 : vector<11x11xf32>, vector<11x11xf32> -> vector<11x22xf32>
    %442 = tpu.concatenate %441, %441 in 1 : vector<11x22xf32>, vector<11x22xf32> -> vector<11x44xf32>
    %443 = tpu.concatenate %442, %442 in 1 : vector<11x44xf32>, vector<11x44xf32> -> vector<11x88xf32>
    %444 = tpu.concatenate %443, %443 in 1 : vector<11x88xf32>, vector<11x88xf32> -> vector<11x176xf32>
    %445 = vector.extract_strided_slice %89 {offsets = [39, 0], sizes = [1, 176], strides = [1, 1]} : vector<54x176xf32> to vector<1x176xf32>
    %446 = vector.broadcast %445 : vector<1x176xf32> to vector<11x176xf32>
    %447 = arith.mulf %444, %446 : vector<11x176xf32>
    %448 = arith.addf %439, %447 : vector<11x176xf32>
    %449 = vector.extract_strided_slice %88 {offsets = [1, 53], sizes = [11, 11], strides = [1, 1]} : vector<13x78xf32> to vector<11x11xf32>
    %450 = tpu.concatenate %449, %449 in 1 : vector<11x11xf32>, vector<11x11xf32> -> vector<11x22xf32>
    %451 = tpu.concatenate %450, %450 in 1 : vector<11x22xf32>, vector<11x22xf32> -> vector<11x44xf32>
    %452 = tpu.concatenate %451, %451 in 1 : vector<11x44xf32>, vector<11x44xf32> -> vector<11x88xf32>
    %453 = tpu.concatenate %452, %452 in 1 : vector<11x88xf32>, vector<11x88xf32> -> vector<11x176xf32>
    %454 = vector.extract_strided_slice %89 {offsets = [40, 0], sizes = [1, 176], strides = [1, 1]} : vector<54x176xf32> to vector<1x176xf32>
    %455 = vector.broadcast %454 : vector<1x176xf32> to vector<11x176xf32>
    %456 = arith.mulf %453, %455 : vector<11x176xf32>
    %457 = arith.addf %448, %456 : vector<11x176xf32>
    %458 = vector.extract_strided_slice %88 {offsets = [1, 54], sizes = [11, 11], strides = [1, 1]} : vector<13x78xf32> to vector<11x11xf32>
    %459 = tpu.concatenate %458, %458 in 1 : vector<11x11xf32>, vector<11x11xf32> -> vector<11x22xf32>
    %460 = tpu.concatenate %459, %459 in 1 : vector<11x22xf32>, vector<11x22xf32> -> vector<11x44xf32>
    %461 = tpu.concatenate %460, %460 in 1 : vector<11x44xf32>, vector<11x44xf32> -> vector<11x88xf32>
    %462 = tpu.concatenate %461, %461 in 1 : vector<11x88xf32>, vector<11x88xf32> -> vector<11x176xf32>
    %463 = vector.extract_strided_slice %89 {offsets = [41, 0], sizes = [1, 176], strides = [1, 1]} : vector<54x176xf32> to vector<1x176xf32>
    %464 = vector.broadcast %463 : vector<1x176xf32> to vector<11x176xf32>
    %465 = arith.mulf %462, %464 : vector<11x176xf32>
    %466 = arith.addf %457, %465 : vector<11x176xf32>
    %467 = vector.extract_strided_slice %88 {offsets = [2, 52], sizes = [11, 11], strides = [1, 1]} : vector<13x78xf32> to vector<11x11xf32>
    %468 = tpu.concatenate %467, %467 in 1 : vector<11x11xf32>, vector<11x11xf32> -> vector<11x22xf32>
    %469 = tpu.concatenate %468, %468 in 1 : vector<11x22xf32>, vector<11x22xf32> -> vector<11x44xf32>
    %470 = tpu.concatenate %469, %469 in 1 : vector<11x44xf32>, vector<11x44xf32> -> vector<11x88xf32>
    %471 = tpu.concatenate %470, %470 in 1 : vector<11x88xf32>, vector<11x88xf32> -> vector<11x176xf32>
    %472 = vector.extract_strided_slice %89 {offsets = [42, 0], sizes = [1, 176], strides = [1, 1]} : vector<54x176xf32> to vector<1x176xf32>
    %473 = vector.broadcast %472 : vector<1x176xf32> to vector<11x176xf32>
    %474 = arith.mulf %471, %473 : vector<11x176xf32>
    %475 = arith.addf %466, %474 : vector<11x176xf32>
    %476 = vector.extract_strided_slice %88 {offsets = [2, 53], sizes = [11, 11], strides = [1, 1]} : vector<13x78xf32> to vector<11x11xf32>
    %477 = tpu.concatenate %476, %476 in 1 : vector<11x11xf32>, vector<11x11xf32> -> vector<11x22xf32>
    %478 = tpu.concatenate %477, %477 in 1 : vector<11x22xf32>, vector<11x22xf32> -> vector<11x44xf32>
    %479 = tpu.concatenate %478, %478 in 1 : vector<11x44xf32>, vector<11x44xf32> -> vector<11x88xf32>
    %480 = tpu.concatenate %479, %479 in 1 : vector<11x88xf32>, vector<11x88xf32> -> vector<11x176xf32>
    %481 = vector.extract_strided_slice %89 {offsets = [43, 0], sizes = [1, 176], strides = [1, 1]} : vector<54x176xf32> to vector<1x176xf32>
    %482 = vector.broadcast %481 : vector<1x176xf32> to vector<11x176xf32>
    %483 = arith.mulf %480, %482 : vector<11x176xf32>
    %484 = arith.addf %475, %483 : vector<11x176xf32>
    %485 = vector.extract_strided_slice %88 {offsets = [2, 54], sizes = [11, 11], strides = [1, 1]} : vector<13x78xf32> to vector<11x11xf32>
    %486 = tpu.concatenate %485, %485 in 1 : vector<11x11xf32>, vector<11x11xf32> -> vector<11x22xf32>
    %487 = tpu.concatenate %486, %486 in 1 : vector<11x22xf32>, vector<11x22xf32> -> vector<11x44xf32>
    %488 = tpu.concatenate %487, %487 in 1 : vector<11x44xf32>, vector<11x44xf32> -> vector<11x88xf32>
    %489 = tpu.concatenate %488, %488 in 1 : vector<11x88xf32>, vector<11x88xf32> -> vector<11x176xf32>
    %490 = vector.extract_strided_slice %89 {offsets = [44, 0], sizes = [1, 176], strides = [1, 1]} : vector<54x176xf32> to vector<1x176xf32>
    %491 = vector.broadcast %490 : vector<1x176xf32> to vector<11x176xf32>
    %492 = arith.mulf %489, %491 : vector<11x176xf32>
    %493 = arith.addf %484, %492 : vector<11x176xf32>
    %494 = vector.extract_strided_slice %88 {offsets = [0, 65], sizes = [11, 11], strides = [1, 1]} : vector<13x78xf32> to vector<11x11xf32>
    %495 = tpu.concatenate %494, %494 in 1 : vector<11x11xf32>, vector<11x11xf32> -> vector<11x22xf32>
    %496 = tpu.concatenate %495, %495 in 1 : vector<11x22xf32>, vector<11x22xf32> -> vector<11x44xf32>
    %497 = tpu.concatenate %496, %496 in 1 : vector<11x44xf32>, vector<11x44xf32> -> vector<11x88xf32>
    %498 = tpu.concatenate %497, %497 in 1 : vector<11x88xf32>, vector<11x88xf32> -> vector<11x176xf32>
    %499 = vector.extract_strided_slice %89 {offsets = [45, 0], sizes = [1, 176], strides = [1, 1]} : vector<54x176xf32> to vector<1x176xf32>
    %500 = vector.broadcast %499 : vector<1x176xf32> to vector<11x176xf32>
    %501 = arith.mulf %498, %500 : vector<11x176xf32>
    %502 = arith.addf %493, %501 : vector<11x176xf32>
    %503 = vector.extract_strided_slice %88 {offsets = [0, 66], sizes = [11, 11], strides = [1, 1]} : vector<13x78xf32> to vector<11x11xf32>
    %504 = tpu.concatenate %503, %503 in 1 : vector<11x11xf32>, vector<11x11xf32> -> vector<11x22xf32>
    %505 = tpu.concatenate %504, %504 in 1 : vector<11x22xf32>, vector<11x22xf32> -> vector<11x44xf32>
    %506 = tpu.concatenate %505, %505 in 1 : vector<11x44xf32>, vector<11x44xf32> -> vector<11x88xf32>
    %507 = tpu.concatenate %506, %506 in 1 : vector<11x88xf32>, vector<11x88xf32> -> vector<11x176xf32>
    %508 = vector.extract_strided_slice %89 {offsets = [46, 0], sizes = [1, 176], strides = [1, 1]} : vector<54x176xf32> to vector<1x176xf32>
    %509 = vector.broadcast %508 : vector<1x176xf32> to vector<11x176xf32>
    %510 = arith.mulf %507, %509 : vector<11x176xf32>
    %511 = arith.addf %502, %510 : vector<11x176xf32>
    %512 = vector.extract_strided_slice %88 {offsets = [0, 67], sizes = [11, 11], strides = [1, 1]} : vector<13x78xf32> to vector<11x11xf32>
    %513 = tpu.concatenate %512, %512 in 1 : vector<11x11xf32>, vector<11x11xf32> -> vector<11x22xf32>
    %514 = tpu.concatenate %513, %513 in 1 : vector<11x22xf32>, vector<11x22xf32> -> vector<11x44xf32>
    %515 = tpu.concatenate %514, %514 in 1 : vector<11x44xf32>, vector<11x44xf32> -> vector<11x88xf32>
    %516 = tpu.concatenate %515, %515 in 1 : vector<11x88xf32>, vector<11x88xf32> -> vector<11x176xf32>
    %517 = vector.extract_strided_slice %89 {offsets = [47, 0], sizes = [1, 176], strides = [1, 1]} : vector<54x176xf32> to vector<1x176xf32>
    %518 = vector.broadcast %517 : vector<1x176xf32> to vector<11x176xf32>
    %519 = arith.mulf %516, %518 : vector<11x176xf32>
    %520 = arith.addf %511, %519 : vector<11x176xf32>
    %521 = vector.extract_strided_slice %88 {offsets = [1, 65], sizes = [11, 11], strides = [1, 1]} : vector<13x78xf32> to vector<11x11xf32>
    %522 = tpu.concatenate %521, %521 in 1 : vector<11x11xf32>, vector<11x11xf32> -> vector<11x22xf32>
    %523 = tpu.concatenate %522, %522 in 1 : vector<11x22xf32>, vector<11x22xf32> -> vector<11x44xf32>
    %524 = tpu.concatenate %523, %523 in 1 : vector<11x44xf32>, vector<11x44xf32> -> vector<11x88xf32>
    %525 = tpu.concatenate %524, %524 in 1 : vector<11x88xf32>, vector<11x88xf32> -> vector<11x176xf32>
    %526 = vector.extract_strided_slice %89 {offsets = [48, 0], sizes = [1, 176], strides = [1, 1]} : vector<54x176xf32> to vector<1x176xf32>
    %527 = vector.broadcast %526 : vector<1x176xf32> to vector<11x176xf32>
    %528 = arith.mulf %525, %527 : vector<11x176xf32>
    %529 = arith.addf %520, %528 : vector<11x176xf32>
    %530 = vector.extract_strided_slice %88 {offsets = [1, 66], sizes = [11, 11], strides = [1, 1]} : vector<13x78xf32> to vector<11x11xf32>
    %531 = tpu.concatenate %530, %530 in 1 : vector<11x11xf32>, vector<11x11xf32> -> vector<11x22xf32>
    %532 = tpu.concatenate %531, %531 in 1 : vector<11x22xf32>, vector<11x22xf32> -> vector<11x44xf32>
    %533 = tpu.concatenate %532, %532 in 1 : vector<11x44xf32>, vector<11x44xf32> -> vector<11x88xf32>
    %534 = tpu.concatenate %533, %533 in 1 : vector<11x88xf32>, vector<11x88xf32> -> vector<11x176xf32>
    %535 = vector.extract_strided_slice %89 {offsets = [49, 0], sizes = [1, 176], strides = [1, 1]} : vector<54x176xf32> to vector<1x176xf32>
    %536 = vector.broadcast %535 : vector<1x176xf32> to vector<11x176xf32>
    %537 = arith.mulf %534, %536 : vector<11x176xf32>
    %538 = arith.addf %529, %537 : vector<11x176xf32>
    %539 = vector.extract_strided_slice %88 {offsets = [1, 67], sizes = [11, 11], strides = [1, 1]} : vector<13x78xf32> to vector<11x11xf32>
    %540 = tpu.concatenate %539, %539 in 1 : vector<11x11xf32>, vector<11x11xf32> -> vector<11x22xf32>
    %541 = tpu.concatenate %540, %540 in 1 : vector<11x22xf32>, vector<11x22xf32> -> vector<11x44xf32>
    %542 = tpu.concatenate %541, %541 in 1 : vector<11x44xf32>, vector<11x44xf32> -> vector<11x88xf32>
    %543 = tpu.concatenate %542, %542 in 1 : vector<11x88xf32>, vector<11x88xf32> -> vector<11x176xf32>
    %544 = vector.extract_strided_slice %89 {offsets = [50, 0], sizes = [1, 176], strides = [1, 1]} : vector<54x176xf32> to vector<1x176xf32>
    %545 = vector.broadcast %544 : vector<1x176xf32> to vector<11x176xf32>
    %546 = arith.mulf %543, %545 : vector<11x176xf32>
    %547 = arith.addf %538, %546 : vector<11x176xf32>
    %548 = vector.extract_strided_slice %88 {offsets = [2, 65], sizes = [11, 11], strides = [1, 1]} : vector<13x78xf32> to vector<11x11xf32>
    %549 = tpu.concatenate %548, %548 in 1 : vector<11x11xf32>, vector<11x11xf32> -> vector<11x22xf32>
    %550 = tpu.concatenate %549, %549 in 1 : vector<11x22xf32>, vector<11x22xf32> -> vector<11x44xf32>
    %551 = tpu.concatenate %550, %550 in 1 : vector<11x44xf32>, vector<11x44xf32> -> vector<11x88xf32>
    %552 = tpu.concatenate %551, %551 in 1 : vector<11x88xf32>, vector<11x88xf32> -> vector<11x176xf32>
    %553 = vector.extract_strided_slice %89 {offsets = [51, 0], sizes = [1, 176], strides = [1, 1]} : vector<54x176xf32> to vector<1x176xf32>
    %554 = vector.broadcast %553 : vector<1x176xf32> to vector<11x176xf32>
    %555 = arith.mulf %552, %554 : vector<11x176xf32>
    %556 = arith.addf %547, %555 : vector<11x176xf32>
    %557 = vector.extract_strided_slice %88 {offsets = [2, 66], sizes = [11, 11], strides = [1, 1]} : vector<13x78xf32> to vector<11x11xf32>
    %558 = tpu.concatenate %557, %557 in 1 : vector<11x11xf32>, vector<11x11xf32> -> vector<11x22xf32>
    %559 = tpu.concatenate %558, %558 in 1 : vector<11x22xf32>, vector<11x22xf32> -> vector<11x44xf32>
    %560 = tpu.concatenate %559, %559 in 1 : vector<11x44xf32>, vector<11x44xf32> -> vector<11x88xf32>
    %561 = tpu.concatenate %560, %560 in 1 : vector<11x88xf32>, vector<11x88xf32> -> vector<11x176xf32>
    %562 = vector.extract_strided_slice %89 {offsets = [52, 0], sizes = [1, 176], strides = [1, 1]} : vector<54x176xf32> to vector<1x176xf32>
    %563 = vector.broadcast %562 : vector<1x176xf32> to vector<11x176xf32>
    %564 = arith.mulf %561, %563 : vector<11x176xf32>
    %565 = arith.addf %556, %564 : vector<11x176xf32>
    %566 = vector.extract_strided_slice %88 {offsets = [2, 67], sizes = [11, 11], strides = [1, 1]} : vector<13x78xf32> to vector<11x11xf32>
    %567 = tpu.concatenate %566, %566 in 1 : vector<11x11xf32>, vector<11x11xf32> -> vector<11x22xf32>
    %568 = tpu.concatenate %567, %567 in 1 : vector<11x22xf32>, vector<11x22xf32> -> vector<11x44xf32>
    %569 = tpu.concatenate %568, %568 in 1 : vector<11x44xf32>, vector<11x44xf32> -> vector<11x88xf32>
    %570 = tpu.concatenate %569, %569 in 1 : vector<11x88xf32>, vector<11x88xf32> -> vector<11x176xf32>
    %571 = vector.extract_strided_slice %89 {offsets = [53, 0], sizes = [1, 176], strides = [1, 1]} : vector<54x176xf32> to vector<1x176xf32>
    %572 = vector.broadcast %571 : vector<1x176xf32> to vector<11x176xf32>
    %573 = arith.mulf %570, %572 : vector<11x176xf32>
    %574 = arith.addf %565, %573 : vector<11x176xf32>
    %c0_14 = arith.constant 0 : index
    %c0_15 = arith.constant 0 : index
    %575 = vector.load %arg5[%c0_14, %c0_15] : memref<1x176xf32, #tpu.memory_space<vmem>>, vector<1x176xf32>
    %576 = vector.broadcast %575 : vector<1x176xf32> to vector<11x176xf32>
    %577 = arith.addf %574, %576 : vector<11x176xf32>
    %cst_16 = arith.constant 0.000000e+00 : f32
    %578 = vector.broadcast %cst_16 : f32 to vector<11x176xf32>
    %579 = arith.maximumf %577, %578 : vector<11x176xf32>
    %580 = vector.extract_strided_slice %579 {offsets = [0, 0], sizes = [10, 176], strides = [1, 1]} : vector<11x176xf32> to vector<10x176xf32>
    %581 = vector.extract_strided_slice %579 {offsets = [1, 0], sizes = [10, 176], strides = [1, 1]} : vector<11x176xf32> to vector<10x176xf32>
    %582 = arith.maximumf %580, %581 : vector<10x176xf32>
    %583 = vector.extract_strided_slice %582 {offsets = [0, 0], sizes = [10, 175], strides = [1, 1]} : vector<10x176xf32> to vector<10x175xf32>
    %584 = vector.extract_strided_slice %582 {offsets = [0, 1], sizes = [10, 175], strides = [1, 1]} : vector<10x176xf32> to vector<10x175xf32>
    %585 = arith.maximumf %583, %584 : vector<10x175xf32>
    %c0_17 = arith.constant 0 : index
    %c0_18 = arith.constant 0 : index
    %586 = vector.load %arg8[%c0_17, %c0_18] : memref<175x80xf32, #tpu.memory_space<vmem>>, vector<175x80xf32>
    %cst_19 = arith.constant dense<0.000000e+00> : vector<10x80xf32>
    %587 = tpu.matmul %585, %586, %cst_19 {dimension_numbers = #tpu.dot_dimension_numbers<[1], [0], [0], [1], [0, 0, 1, 1], [], []>} : vector<10x175xf32>, vector<175x80xf32>, vector<10x80xf32> -> vector<10x80xf32>
    %c0_20 = arith.constant 0 : index
    %c0_21 = arith.constant 0 : index
    %588 = vector.load %arg9[%c0_20, %c0_21] : memref<5x10xf32, #tpu.memory_space<vmem>>, vector<5x10xf32>
    %cst_22 = arith.constant dense<0.000000e+00> : vector<5x80xf32>
    %589 = tpu.matmul %588, %587, %cst_22 {dimension_numbers = #tpu.dot_dimension_numbers<[1], [0], [0], [1], [0, 0, 1, 1], [], []>} : vector<5x10xf32>, vector<10x80xf32>, vector<5x80xf32> -> vector<5x80xf32>
    %590 = vector.extract_strided_slice %589 {offsets = [0, 0], sizes = [1, 80], strides = [1, 1]} : vector<5x80xf32> to vector<1x80xf32>
    %591 = vector.extract_strided_slice %589 {offsets = [1, 0], sizes = [1, 80], strides = [1, 1]} : vector<5x80xf32> to vector<1x80xf32>
    %592 = vector.extract_strided_slice %589 {offsets = [2, 0], sizes = [1, 80], strides = [1, 1]} : vector<5x80xf32> to vector<1x80xf32>
    %593 = vector.extract_strided_slice %589 {offsets = [3, 0], sizes = [1, 80], strides = [1, 1]} : vector<5x80xf32> to vector<1x80xf32>
    %594 = vector.extract_strided_slice %589 {offsets = [4, 0], sizes = [1, 80], strides = [1, 1]} : vector<5x80xf32> to vector<1x80xf32>
    %595 = tpu.concatenate %590, %591, %592, %593, %594 in 1 : vector<1x80xf32>, vector<1x80xf32>, vector<1x80xf32>, vector<1x80xf32>, vector<1x80xf32> -> vector<1x400xf32>
    %c0_23 = arith.constant 0 : index
    %c0_24 = arith.constant 0 : index
    %596 = vector.load %arg10[%c0_23, %c0_24] : memref<400x120xf32, #tpu.memory_space<vmem>>, vector<400x120xf32>
    %cst_25 = arith.constant dense<0.000000e+00> : vector<1x120xf32>
    %597 = tpu.matmul %595, %596, %cst_25 {dimension_numbers = #tpu.dot_dimension_numbers<[1], [0], [0], [1], [0, 0, 1, 1], [], []>} : vector<1x400xf32>, vector<400x120xf32>, vector<1x120xf32> -> vector<1x120xf32>
    %c0_26 = arith.constant 0 : index
    %c0_27 = arith.constant 0 : index
    %598 = vector.load %arg11[%c0_26, %c0_27] : memref<1x120xf32, #tpu.memory_space<vmem>>, vector<1x120xf32>
    %599 = arith.addf %597, %598 : vector<1x120xf32>
    %cst_28 = arith.constant 0.000000e+00 : f32
    %600 = vector.broadcast %cst_28 : f32 to vector<1x120xf32>
    %601 = arith.maximumf %599, %600 : vector<1x120xf32>
    %c0_29 = arith.constant 0 : index
    %c0_30 = arith.constant 0 : index
    %602 = vector.load %arg12[%c0_29, %c0_30] : memref<120x84xf32, #tpu.memory_space<vmem>>, vector<120x84xf32>
    %cst_31 = arith.constant dense<0.000000e+00> : vector<1x84xf32>
    %603 = tpu.matmul %601, %602, %cst_31 {dimension_numbers = #tpu.dot_dimension_numbers<[1], [0], [0], [1], [0, 0, 1, 1], [], []>} : vector<1x120xf32>, vector<120x84xf32>, vector<1x84xf32> -> vector<1x84xf32>
    %c0_32 = arith.constant 0 : index
    %c0_33 = arith.constant 0 : index
    %604 = vector.load %arg13[%c0_32, %c0_33] : memref<1x84xf32, #tpu.memory_space<vmem>>, vector<1x84xf32>
    %605 = arith.addf %603, %604 : vector<1x84xf32>
    %cst_34 = arith.constant 0.000000e+00 : f32
    %606 = vector.broadcast %cst_34 : f32 to vector<1x84xf32>
    %607 = arith.maximumf %605, %606 : vector<1x84xf32>
    %c0_35 = arith.constant 0 : index
    %c0_36 = arith.constant 0 : index
    %608 = vector.load %arg14[%c0_35, %c0_36] : memref<84x10xf32, #tpu.memory_space<vmem>>, vector<84x10xf32>
    %cst_37 = arith.constant dense<0.000000e+00> : vector<1x10xf32>
    %609 = tpu.matmul %607, %608, %cst_37 {dimension_numbers = #tpu.dot_dimension_numbers<[1], [0], [0], [1], [0, 0, 1, 1], [], []>} : vector<1x84xf32>, vector<84x10xf32>, vector<1x10xf32> -> vector<1x10xf32>
    %c0_38 = arith.constant 0 : index
    %c0_39 = arith.constant 0 : index
    %610 = vector.load %arg15[%c0_38, %c0_39] : memref<1x10xf32, #tpu.memory_space<vmem>>, vector<1x10xf32>
    %611 = arith.addf %609, %610 : vector<1x10xf32>
    %cst_40 = arith.constant dense<0xFF800000> : vector<1xf32>
    %612 = vector.multi_reduction <maximumf>, %611, %cst_40 [1] : vector<1x10xf32> to vector<1xf32>
    %613 = vector.shape_cast %612 : vector<1xf32> to vector<1x1xf32>
    %614 = vector.broadcast %613 : vector<1x1xf32> to vector<1x10xf32>
    %615 = arith.subf %611, %614 : vector<1x10xf32>
    %616 = math.exp %615 : vector<1x10xf32>
    %cst_41 = arith.constant dense<0.000000e+00> : vector<1xf32>
    %617 = vector.multi_reduction <add>, %616, %cst_41 [1] : vector<1x10xf32> to vector<1xf32>
    %618 = vector.shape_cast %617 : vector<1xf32> to vector<1x1xf32>
    %619 = math.log %618 : vector<1x1xf32>
    %620 = vector.broadcast %619 : vector<1x1xf32> to vector<1x10xf32>
    %621 = arith.subf %615, %620 : vector<1x10xf32>
    %622 = vector.shape_cast %621 : vector<1x10xf32> to vector<1x1x10xf32>
    %c0_42 = arith.constant 0 : index
    %c0_43 = arith.constant 0 : index
    %c0_44 = arith.constant 0 : index
    %623 = vector.load %arg16[%c0_42, %c0_43, %c0_44] : memref<1x1x10xf32, #tpu.memory_space<vmem>>, vector<1x1x10xf32>
    tpu.vector_store %arg16[%c0_42, %c0_43, %c0_44], %622 {strides = array<i32>} : memref<1x1x10xf32, #tpu.memory_space<vmem>>, vector<1x1x10xf32>,
    return
  }
  func.func @transform_0(%arg0: i32) -> (i32, i32, i32) {
    %c0_i32 = arith.constant 0 : i32
    %c0_i32_0 = arith.constant 0 : i32
    %c0_i32_1 = arith.constant 0 : i32
    return %arg0, %c0_i32, %c0_i32_0 : i32, i32, i32
  }
  func.func @transform_1(%arg0: i32) -> (i32, i32) {
    %c0_i32 = arith.constant 0 : i32
    %c0_i32_0 = arith.constant 0 : i32
    %c0_i32_1 = arith.constant 0 : i32
    return %c0_i32, %c0_i32_0 : i32, i32
  }
  func.func @transform_2(%arg0: i32) -> (i32, i32) {
    %c0_i32 = arith.constant 0 : i32
    %c0_i32_0 = arith.constant 0 : i32
    %c0_i32_1 = arith.constant 0 : i32
    return %c0_i32, %c0_i32_0 : i32, i32
  }
  func.func @transform_3(%arg0: i32) -> (i32, i32) {
    %c0_i32 = arith.constant 0 : i32
    %c0_i32_0 = arith.constant 0 : i32
    %c0_i32_1 = arith.constant 0 : i32
    return %c0_i32, %c0_i32_0 : i32, i32
  }
  func.func @transform_4(%arg0: i32) -> (i32, i32) {
    %c0_i32 = arith.constant 0 : i32
    %c0_i32_0 = arith.constant 0 : i32
    %c0_i32_1 = arith.constant 0 : i32
    return %c0_i32, %c0_i32_0 : i32, i32
  }
  func.func @transform_5(%arg0: i32) -> (i32, i32) {
    %c0_i32 = arith.constant 0 : i32
    %c0_i32_0 = arith.constant 0 : i32
    %c0_i32_1 = arith.constant 0 : i32
    return %c0_i32, %c0_i32_0 : i32, i32
  }
  func.func @transform_6(%arg0: i32) -> (i32, i32) {
    %c0_i32 = arith.constant 0 : i32
    %c0_i32_0 = arith.constant 0 : i32
    %c0_i32_1 = arith.constant 0 : i32
    return %c0_i32, %c0_i32_0 : i32, i32
  }
  func.func @transform_7(%arg0: i32) -> (i32, i32) {
    %c0_i32 = arith.constant 0 : i32
    %c0_i32_0 = arith.constant 0 : i32
    %c0_i32_1 = arith.constant 0 : i32
    return %c0_i32, %c0_i32_0 : i32, i32
  }
  func.func @transform_8(%arg0: i32) -> (i32, i32) {
    %c0_i32 = arith.constant 0 : i32
    %c0_i32_0 = arith.constant 0 : i32
    %c0_i32_1 = arith.constant 0 : i32
    return %c0_i32, %c0_i32_0 : i32, i32
  }
  func.func @transform_9(%arg0: i32) -> (i32, i32) {
    %c0_i32 = arith.constant 0 : i32
    %c0_i32_0 = arith.constant 0 : i32
    %c0_i32_1 = arith.constant 0 : i32
    return %c0_i32, %c0_i32_0 : i32, i32
  }
  func.func @transform_10(%arg0: i32) -> (i32, i32) {
    %c0_i32 = arith.constant 0 : i32
    %c0_i32_0 = arith.constant 0 : i32
    %c0_i32_1 = arith.constant 0 : i32
    return %c0_i32, %c0_i32_0 : i32, i32
  }
  func.func @transform_11(%arg0: i32) -> (i32, i32) {
    %c0_i32 = arith.constant 0 : i32
    %c0_i32_0 = arith.constant 0 : i32
    %c0_i32_1 = arith.constant 0 : i32
    return %c0_i32, %c0_i32_0 : i32, i32
  }
  func.func @transform_12(%arg0: i32) -> (i32, i32) {
    %c0_i32 = arith.constant 0 : i32
    %c0_i32_0 = arith.constant 0 : i32
    %c0_i32_1 = arith.constant 0 : i32
    return %c0_i32, %c0_i32_0 : i32, i32
  }
  func.func @transform_13(%arg0: i32) -> (i32, i32) {
    %c0_i32 = arith.constant 0 : i32
    %c0_i32_0 = arith.constant 0 : i32
    %c0_i32_1 = arith.constant 0 : i32
    return %c0_i32, %c0_i32_0 : i32, i32
  }
  func.func @transform_14(%arg0: i32) -> (i32, i32) {
    %c0_i32 = arith.constant 0 : i32
    %c0_i32_0 = arith.constant 0 : i32
    %c0_i32_1 = arith.constant 0 : i32
    return %c0_i32, %c0_i32_0 : i32, i32
  }
  func.func @transform_15(%arg0: i32) -> (i32, i32, i32) {
    %c0_i32 = arith.constant 0 : i32
    %c0_i32_0 = arith.constant 0 : i32
    %c0_i32_1 = arith.constant 0 : i32
    return %arg0, %c0_i32, %c0_i32_0 : i32, i32, i32
  }
}

</mosaic_0001>

<llo_original>
// kernel: cnn1_forward.1
$region0: #{cnn1_forward.1}
  #allocation0 [shape = 'u32[]', space=smem, size = 0x4, offset = 0x4, fixed_abs, tag = 'smem constant byte address 0x4 - core index']
  #allocation1 [shape = 'u32[144,128]{1,0:T(1,128)}', space=vmem, size = 0x12000, scoped, tag = 'internal scratch']
  %s0 = inlined_call_operand.vmem [shape: f32[2,28,28], index: 0, kind: input, shape index: {}]
  %s1 = inlined_call_operand.vmem [shape: f32[9,156], index: 1, kind: input, shape index: {}]
  %s2 = inlined_call_operand.hbm [shape: f32[1,156], index: 2, kind: input, shape index: {}]
  %s3 = inlined_call_operand.vmem [shape: f32[54,176], index: 3, kind: input, shape index: {}]
  %s4 = inlined_call_operand.hbm [shape: f32[1,176], index: 4, kind: input, shape index: {}]
  %s5 = inlined_call_operand.vmem [shape: f32[155,78], index: 5, kind: input, shape index: {}]
  %s6 = inlined_call_operand.vmem [shape: f32[13,25], index: 6, kind: input, shape index: {}]
  %s7 = inlined_call_operand.vmem [shape: f32[175,80], index: 7, kind: input, shape index: {}]
  %s8 = inlined_call_operand.vmem [shape: f32[5,10], index: 8, kind: input, shape index: {}]
  %s9 = inlined_call_operand.vmem [shape: f32[400,120], index: 9, kind: input, shape index: {}]
  %s10 = inlined_call_operand.vmem [shape: f32[1,120], index: 10, kind: input, shape index: {}]
  %s11 = inlined_call_operand.vmem [shape: f32[120,84], index: 11, kind: input, shape index: {}]
  %s12 = inlined_call_operand.vmem [shape: f32[1,84], index: 12, kind: input, shape index: {}]
  %s13 = inlined_call_operand.vmem [shape: f32[84,10], index: 13, kind: input, shape index: {}]
  %s14 = inlined_call_operand.vmem [shape: f32[1,10], index: 14, kind: input, shape index: {}]
  %s15 = inlined_call_operand.hbm [shape: f32[2,1,10], index: 15, kind: output, shape index: {}]
  %s16 = sld [smem:[#allocation0]]
  $region101: #{cnn1_forward.1} parent=0
    _
  %s18 = ssub.s32 1, %s16
  %s19 = scalar_select 0, %s18, %s16
  $region1: #{cnn1_forward.1} parent=0
    #allocation2 [shape = 'u8[1024]{0}', space=vmem, size = 0x400, scoped, tag = 'input window, operand 2, single buffered']
    #allocation3 [shape = 's32[2]{0}', space=sflag, size = 0x8, scoped, tag = 'scoped memory for cnn1_forward.1']
    #allocation4 [shape = 's32[2]{0}', space=sflag, size = 0x8, scoped, tag = 'scoped memory for cnn1_forward.1']
    #allocation5 [shape = 'u8[1024]{0}', space=vmem, size = 0x400, scoped, tag = 'input window, operand 4, single buffered']
    #allocation6 [shape = 's32[1]{0}', space=sflag, size = 0x4, scoped, tag = 'scoped memory for cnn1_forward.1']
    #allocation7 [shape = 'u8[1024]{0}', space=vmem, size = 0x400, scoped, tag = 'output window, operand 0']
    %20 = vsyncpa [#allocation3], 0
    %21 = vsyncpa [#allocation6], 0
    %22 = vsyncpa [#allocation4], 0
    %s23 = scalar_lea.sflag [#allocation4], 1
    %24 = vsyncpa %s23, 0
    loop: start=0, step=1, limit=4
    $region2: #{cnn1_forward.1} parent=1 // loop_pre_header
      _
    $region3: #{cnn1_forward.1} parent=1 // loop_header
      %s26 = sphi 0, %s30
      %p27 = scmp.ge.s32.totalorder %s26, 4
      %s36 = sphi 0, %s38
      %s39 = sphi 0, %s36
      %s40 = sphi 0, %s39
      %s56 = sphi 0, %s40
      %s60 = sphi 0, %s60
      %s62 = sphi 0, %s60
      %s63 = sphi 0, %s62
      %s77 = sphi 0, %s63
      %s81 = sphi 0, %s81
      %s83 = sphi 0, %s81
      %s84 = sphi 0, %s83
      %s98 = sphi 0, %s84
      %s102 = sphi 0, %s102
      %s104 = sphi 0, %s102
      %s105 = sphi 0, %s104
      %s119 = sphi 0, %s105
      %s123 = sphi 0, %s123
      %s125 = sphi 0, %s123
      %s126 = sphi 0, %s125
      %s140 = sphi 0, %s126
      %s144 = sphi 0, %s144
      %s146 = sphi 0, %s144
      %s147 = sphi 0, %s146
      %s161 = sphi 0, %s147
      %s165 = sphi 0, %s165
      %s167 = sphi 0, %s165
      %s168 = sphi 0, %s167
      %s182 = sphi 0, %s168
      %s186 = sphi 0, %s186
      %s188 = sphi 0, %s186
      %s189 = sphi 0, %s188
      %s203 = sphi 0, %s189
      %s207 = sphi 0, %s207
      %s209 = sphi 0, %s207
      %s210 = sphi 0, %s209
      %s224 = sphi 0, %s210
      %s228 = sphi 0, %s228
      %s230 = sphi 0, %s228
      %s231 = sphi 0, %s230
      %s245 = sphi 0, %s231
      %s249 = sphi 0, %s249
      %s251 = sphi 0, %s249
      %s252 = sphi 0, %s251
      %s266 = sphi 0, %s252
      %s270 = sphi 0, %s270
      %s272 = sphi 0, %s270
      %s273 = sphi 0, %s272
      %s287 = sphi 0, %s273
      %s291 = sphi 0, %s291
      %s293 = sphi 0, %s291
      %s294 = sphi 0, %s293
      %s308 = sphi 0, %s294
      %s312 = sphi 0, %s312
      %s314 = sphi 0, %s312
      %s315 = sphi 0, %s314
      %s329 = sphi 0, %s315
      %s333 = sphi 0, %s333
      %s335 = sphi 0, %s333
      %s336 = sphi 0, %s335
      %s350 = sphi 0, %s336
      %s356 = sphi 0, %s358
      %s359 = sphi 0, %s356
      %s360 = sphi 0, %s359
      %s376 = sphi 0, %s360
    $region4: #{cnn1_forward.1} parent=1 // loop_header_branch
      %29 = sbr.rel (%p27) target = $region8
    $region5: #{cnn1_forward.1} parent=1 // loop_body
      %s31 = ssub.s32 %s26, 1
      %s32 = ssub.s32 %s26, 2
      %s33 = sadd.s32 %s26, 1
      %s34 = ssub.s32 %s26, %s33
      %p35 = scmp.eq.s32.totalorder %s34, 0
      %s37 = sadd.s32 %s36, 1
      %s38 = scalar_select %p35, %s36, %s37
      %p41 = pneg %p35
      %p42 = scmp.eq.s32.totalorder %s26, 1
      %p43 = por %p41, %p42
      %p44 = scmp.ne.s32.totalorder %s36, %s39
      %p45 = scmp.eq.s32.totalorder %s26, 0
      %p46 = por %p44, %p45
      %p47 = scmp.ne.s32.totalorder %s36, %s39
      %p48 = scmp.eq.s32.totalorder %s31, 1
      %p49 = por %p47, %p48
      %p50 = scmp.ne.s32.totalorder %s39, %s40
      %p51 = scmp.eq.s32.totalorder %s31, 0
      %p52 = por %p50, %p51
      %p53 = scmp.ne.s32.totalorder %s39, %s40
      %p54 = scmp.eq.s32.totalorder %s32, 1
      %p55 = por %p53, %p54
      %p57 = scmp.ne.s32.totalorder %s40, %s56
      %p58 = scmp.eq.s32.totalorder %s32, 0
      %p59 = por %p57, %p58
      %s61 = sadd.s32 %s60, 1
      %p64 = scmp.eq.s32.totalorder %s26, 1
      %p65 = scmp.ne.s32.totalorder %s60, %s62
      %p66 = scmp.eq.s32.totalorder %s26, 0
      %p67 = por %p65, %p66
      %p68 = scmp.ne.s32.totalorder %s60, %s62
      %p69 = scmp.eq.s32.totalorder %s31, 1
      %p70 = por %p68, %p69
      %p71 = scmp.ne.s32.totalorder %s62, %s63
      %p72 = scmp.eq.s32.totalorder %s31, 0
      %p73 = por %p71, %p72
      %p74 = scmp.ne.s32.totalorder %s62, %s63
      %p75 = scmp.eq.s32.totalorder %s32, 1
      %p76 = por %p74, %p75
      %p78 = scmp.ne.s32.totalorder %s63, %s77
      %p79 = scmp.eq.s32.totalorder %s32, 0
      %p80 = por %p78, %p79
      %s82 = sadd.s32 %s81, 1
      %p85 = scmp.eq.s32.totalorder %s26, 1
      %p86 = scmp.ne.s32.totalorder %s81, %s83
      %p87 = scmp.eq.s32.totalorder %s26, 0
      %p88 = por %p86, %p87
      %p89 = scmp.ne.s32.totalorder %s81, %s83
      %p90 = scmp.eq.s32.totalorder %s31, 1
      %p91 = por %p89, %p90
      %p92 = scmp.ne.s32.totalorder %s83, %s84
      %p93 = scmp.eq.s32.totalorder %s31, 0
      %p94 = por %p92, %p93
      %p95 = scmp.ne.s32.totalorder %s83, %s84
      %p96 = scmp.eq.s32.totalorder %s32, 1
      %p97 = por %p95, %p96
      %p99 = scmp.ne.s32.totalorder %s84, %s98
      %p100 = scmp.eq.s32.totalorder %s32, 0
      %p101 = por %p99, %p100
      %s103 = sadd.s32 %s102, 1
      %p106 = scmp.eq.s32.totalorder %s26, 1
      %p107 = scmp.ne.s32.totalorder %s102, %s104
      %p108 = scmp.eq.s32.totalorder %s26, 0
      %p109 = por %p107, %p108
      %p110 = scmp.ne.s32.totalorder %s102, %s104
      %p111 = scmp.eq.s32.totalorder %s31, 1
      %p112 = por %p110, %p111
      %p113 = scmp.ne.s32.totalorder %s104, %s105
      %p114 = scmp.eq.s32.totalorder %s31, 0
      %p115 = por %p113, %p114
      %p116 = scmp.ne.s32.totalorder %s104, %s105
      %p117 = scmp.eq.s32.totalorder %s32, 1
      %p118 = por %p116, %p117
      %p120 = scmp.ne.s32.totalorder %s105, %s119
      %p121 = scmp.eq.s32.totalorder %s32, 0
      %p122 = por %p120, %p121
      %s124 = sadd.s32 %s123, 1
      %p127 = scmp.eq.s32.totalorder %s26, 1
      %p128 = scmp.ne.s32.totalorder %s123, %s125
      %p129 = scmp.eq.s32.totalorder %s26, 0
      %p130 = por %p128, %p129
      %p131 = scmp.ne.s32.totalorder %s123, %s125
      %p132 = scmp.eq.s32.totalorder %s31, 1
      %p133 = por %p131, %p132
      %p134 = scmp.ne.s32.totalorder %s125, %s126
      %p135 = scmp.eq.s32.totalorder %s31, 0
      %p136 = por %p134, %p135
      %p137 = scmp.ne.s32.totalorder %s125, %s126
      %p138 = scmp.eq.s32.totalorder %s32, 1
      %p139 = por %p137, %p138
      %p141 = scmp.ne.s32.totalorder %s126, %s140
      %p142 = scmp.eq.s32.totalorder %s32, 0
      %p143 = por %p141, %p142
      %s145 = sadd.s32 %s144, 1
      %p148 = scmp.eq.s32.totalorder %s26, 1
      %p149 = scmp.ne.s32.totalorder %s144, %s146
      %p150 = scmp.eq.s32.totalorder %s26, 0
      %p151 = por %p149, %p150
      %p152 = scmp.ne.s32.totalorder %s144, %s146
      %p153 = scmp.eq.s32.totalorder %s31, 1
      %p154 = por %p152, %p153
      %p155 = scmp.ne.s32.totalorder %s146, %s147
      %p156 = scmp.eq.s32.totalorder %s31, 0
      %p157 = por %p155, %p156
      %p158 = scmp.ne.s32.totalorder %s146, %s147
      %p159 = scmp.eq.s32.totalorder %s32, 1
      %p160 = por %p158, %p159
      %p162 = scmp.ne.s32.totalorder %s147, %s161
      %p163 = scmp.eq.s32.totalorder %s32, 0
      %p164 = por %p162, %p163
      %s166 = sadd.s32 %s165, 1
      %p169 = scmp.eq.s32.totalorder %s26, 1
      %p170 = scmp.ne.s32.totalorder %s165, %s167
      %p171 = scmp.eq.s32.totalorder %s26, 0
      %p172 = por %p170, %p171
      %p173 = scmp.ne.s32.totalorder %s165, %s167
      %p174 = scmp.eq.s32.totalorder %s31, 1
      %p175 = por %p173, %p174
      %p176 = scmp.ne.s32.totalorder %s167, %s168
      %p177 = scmp.eq.s32.totalorder %s31, 0
      %p178 = por %p176, %p177
      %p179 = scmp.ne.s32.totalorder %s167, %s168
      %p180 = scmp.eq.s32.totalorder %s32, 1
      %p181 = por %p179, %p180
      %p183 = scmp.ne.s32.totalorder %s168, %s182
      %p184 = scmp.eq.s32.totalorder %s32, 0
      %p185 = por %p183, %p184
      %s187 = sadd.s32 %s186, 1
      %p190 = scmp.eq.s32.totalorder %s26, 1
      %p191 = scmp.ne.s32.totalorder %s186, %s188
      %p192 = scmp.eq.s32.totalorder %s26, 0
      %p193 = por %p191, %p192
      %p194 = scmp.ne.s32.totalorder %s186, %s188
      %p195 = scmp.eq.s32.totalorder %s31, 1
      %p196 = por %p194, %p195
      %p197 = scmp.ne.s32.totalorder %s188, %s189
      %p198 = scmp.eq.s32.totalorder %s31, 0
      %p199 = por %p197, %p198
      %p200 = scmp.ne.s32.totalorder %s188, %s189
      %p201 = scmp.eq.s32.totalorder %s32, 1
      %p202 = por %p200, %p201
      %p204 = scmp.ne.s32.totalorder %s189, %s203
      %p205 = scmp.eq.s32.totalorder %s32, 0
      %p206 = por %p204, %p205
      %s208 = sadd.s32 %s207, 1
      %p211 = scmp.eq.s32.totalorder %s26, 1
      %p212 = scmp.ne.s32.totalorder %s207, %s209
      %p213 = scmp.eq.s32.totalorder %s26, 0
      %p214 = por %p212, %p213
      %p215 = scmp.ne.s32.totalorder %s207, %s209
      %p216 = scmp.eq.s32.totalorder %s31, 1
      %p217 = por %p215, %p216
      %p218 = scmp.ne.s32.totalorder %s209, %s210
      %p219 = scmp.eq.s32.totalorder %s31, 0
      %p220 = por %p218, %p219
      %p221 = scmp.ne.s32.totalorder %s209, %s210
      %p222 = scmp.eq.s32.totalorder %s32, 1
      %p223 = por %p221, %p222
      %p225 = scmp.ne.s32.totalorder %s210, %s224
      %p226 = scmp.eq.s32.totalorder %s32, 0
      %p227 = por %p225, %p226
      %s229 = sadd.s32 %s228, 1
      %p232 = scmp.eq.s32.totalorder %s26, 1
      %p233 = scmp.ne.s32.totalorder %s228, %s230
      %p234 = scmp.eq.s32.totalorder %s26, 0
      %p235 = por %p233, %p234
      %p236 = scmp.ne.s32.totalorder %s228, %s230
      %p237 = scmp.eq.s32.totalorder %s31, 1
      %p238 = por %p236, %p237
      %p239 = scmp.ne.s32.totalorder %s230, %s231
      %p240 = scmp.eq.s32.totalorder %s31, 0
      %p241 = por %p239, %p240
      %p242 = scmp.ne.s32.totalorder %s230, %s231
      %p243 = scmp.eq.s32.totalorder %s32, 1
      %p244 = por %p242, %p243
      %p246 = scmp.ne.s32.totalorder %s231, %s245
      %p247 = scmp.eq.s32.totalorder %s32, 0
      %p248 = por %p246, %p247
      %s250 = sadd.s32 %s249, 1
      %p253 = scmp.eq.s32.totalorder %s26, 1
      %p254 = scmp.ne.s32.totalorder %s249, %s251
      %p255 = scmp.eq.s32.totalorder %s26, 0
      %p256 = por %p254, %p255
      %p257 = scmp.ne.s32.totalorder %s249, %s251
      %p258 = scmp.eq.s32.totalorder %s31, 1
      %p259 = por %p257, %p258
      %p260 = scmp.ne.s32.totalorder %s251, %s252
      %p261 = scmp.eq.s32.totalorder %s31, 0
      %p262 = por %p260, %p261
      %p263 = scmp.ne.s32.totalorder %s251, %s252
      %p264 = scmp.eq.s32.totalorder %s32, 1
      %p265 = por %p263, %p264
      %p267 = scmp.ne.s32.totalorder %s252, %s266
      %p268 = scmp.eq.s32.totalorder %s32, 0
      %p269 = por %p267, %p268
      %s271 = sadd.s32 %s270, 1
      %p274 = scmp.eq.s32.totalorder %s26, 1
      %p275 = scmp.ne.s32.totalorder %s270, %s272
      %p276 = scmp.eq.s32.totalorder %s26, 0
      %p277 = por %p275, %p276
      %p278 = scmp.ne.s32.totalorder %s270, %s272
      %p279 = scmp.eq.s32.totalorder %s31, 1
      %p280 = por %p278, %p279
      %p281 = scmp.ne.s32.totalorder %s272, %s273
      %p282 = scmp.eq.s32.totalorder %s31, 0
      %p283 = por %p281, %p282
      %p284 = scmp.ne.s32.totalorder %s272, %s273
      %p285 = scmp.eq.s32.totalorder %s32, 1
      %p286 = por %p284, %p285
      %p288 = scmp.ne.s32.totalorder %s273, %s287
      %p289 = scmp.eq.s32.totalorder %s32, 0
      %p290 = por %p288, %p289
      %s292 = sadd.s32 %s291, 1
      %p295 = scmp.eq.s32.totalorder %s26, 1
      %p296 = scmp.ne.s32.totalorder %s291, %s293
      %p297 = scmp.eq.s32.totalorder %s26, 0
      %p298 = por %p296, %p297
      %p299 = scmp.ne.s32.totalorder %s291, %s293
      %p300 = scmp.eq.s32.totalorder %s31, 1
      %p301 = por %p299, %p300
      %p302 = scmp.ne.s32.totalorder %s293, %s294
      %p303 = scmp.eq.s32.totalorder %s31, 0
      %p304 = por %p302, %p303
      %p305 = scmp.ne.s32.totalorder %s293, %s294
      %p306 = scmp.eq.s32.totalorder %s32, 1
      %p307 = por %p305, %p306
      %p309 = scmp.ne.s32.totalorder %s294, %s308
      %p310 = scmp.eq.s32.totalorder %s32, 0
      %p311 = por %p309, %p310
      %s313 = sadd.s32 %s312, 1
      %p316 = scmp.eq.s32.totalorder %s26, 1
      %p317 = scmp.ne.s32.totalorder %s312, %s314
      %p318 = scmp.eq.s32.totalorder %s26, 0
      %p319 = por %p317, %p318
      %p320 = scmp.ne.s32.totalorder %s312, %s314
      %p321 = scmp.eq.s32.totalorder %s31, 1
      %p322 = por %p320, %p321
      %p323 = scmp.ne.s32.totalorder %s314, %s315
      %p324 = scmp.eq.s32.totalorder %s31, 0
      %p325 = por %p323, %p324
      %p326 = scmp.ne.s32.totalorder %s314, %s315
      %p327 = scmp.eq.s32.totalorder %s32, 1
      %p328 = por %p326, %p327
      %p330 = scmp.ne.s32.totalorder %s315, %s329
      %p331 = scmp.eq.s32.totalorder %s32, 0
      %p332 = por %p330, %p331
      %s334 = sadd.s32 %s333, 1
      %p337 = scmp.eq.s32.totalorder %s26, 1
      %p338 = scmp.ne.s32.totalorder %s333, %s335
      %p339 = scmp.eq.s32.totalorder %s26, 0
      %p340 = por %p338, %p339
      %p341 = scmp.ne.s32.totalorder %s333, %s335
      %p342 = scmp.eq.s32.totalorder %s31, 1
      %p343 = por %p341, %p342
      %p344 = scmp.ne.s32.totalorder %s335, %s336
      %p345 = scmp.eq.s32.totalorder %s31, 0
      %p346 = por %p344, %p345
      %p347 = scmp.ne.s32.totalorder %s335, %s336
      %p348 = scmp.eq.s32.totalorder %s32, 1
      %p349 = por %p347, %p348
      %p351 = scmp.ne.s32.totalorder %s336, %s350
      %p352 = scmp.eq.s32.totalorder %s32, 0
      %p353 = por %p351, %p352
      %s354 = ssub.s32 %s26, %s33
      %p355 = scmp.eq.s32.totalorder %s354, 0
      %s357 = sadd.s32 %s356, 1
      %s358 = scalar_select %p355, %s356, %s357
      %p361 = pneg %p355
      %p362 = scmp.eq.s32.totalorder %s26, 1
      %p363 = por %p361, %p362
      %p364 = scmp.ne.s32.totalorder %s356, %s359
      %p365 = scmp.eq.s32.totalorder %s26, 0
      %p366 = por %p364, %p365
      %p367 = scmp.ne.s32.totalorder %s356, %s359
      %p368 = scmp.eq.s32.totalorder %s31, 1
      %p369 = por %p367, %p368
      %p370 = scmp.ne.s32.totalorder %s359, %s360
      %p371 = scmp.eq.s32.totalorder %s31, 0
      %p372 = por %p370, %p371
      %p373 = scmp.ne.s32.totalorder %s359, %s360
      %p374 = scmp.eq.s32.totalorder %s32, 1
      %p375 = por %p373, %p374
      %p377 = scmp.ne.s32.totalorder %s360, %s376
      %p378 = scmp.eq.s32.totalorder %s32, 0
      %p379 = por %p377, %p378
      %p380 = scmp.le.s32.totalorder 1, %s26
      %p381 = scmp.lt.s32.totalorder %s26, 3
      %p382 = pnand %p380, %p381
      %p383 = pneg %p382
      // Predicated region
      $region9: #{cnn1_forward.1} parent=5 // pred_check
        _
      $region10: #{cnn1_forward.1} parent=5 // pred_check_branch
        %385 = sbr.rel (%p382) target = $region12
      $region11: #{cnn1_forward.1} parent=5 // pred_region
        %s386 = ssub.s32 %s26, 1
        // Predicated region
        $region13: #{cnn1_forward.1} parent=11 // pred_check
          %p387 = pneg %p73
        $region14: #{cnn1_forward.1} parent=11 // pred_check_branch
          %389 = sbr.rel (%p387) target = $region16
        $region15: #{cnn1_forward.1} parent=11 // pred_region
          _
        $region16: #{cnn1_forward.1} parent=11 // pred_fallthru
          _
        // Predicated region
        $region17: #{cnn1_forward.1} parent=11 // pred_check
          %p390 = pneg %p94
        $region18: #{cnn1_forward.1} parent=11 // pred_check_branch
          %392 = sbr.rel (%p390) target = $region20
        $region19: #{cnn1_forward.1} parent=11 // pred_region
          %s394 = ssub.s32 32, 32
          %395 = vsyncadd [#allocation3], %s394
          %s397 = sshll.u32 [#allocation2], 4
          %s398 = int_to_ptr.vmem [resolvable:$true] %s397
          %400 = dma.hbm_to_vmem [thread:$0]  %s2, 32, %s398, [#allocation3]
        $region20: #{cnn1_forward.1} parent=11 // pred_fallthru
          _
        // Predicated region
        $region21: #{cnn1_forward.1} parent=11 // pred_check
          %p401 = pneg %p115
        $region22: #{cnn1_forward.1} parent=11 // pred_check_branch
          %403 = sbr.rel (%p401) target = $region24
        $region23: #{cnn1_forward.1} parent=11 // pred_region
          _
        $region24: #{cnn1_forward.1} parent=11 // pred_fallthru
          _
        // Predicated region
        $region25: #{cnn1_forward.1} parent=11 // pred_check
          %p404 = pneg %p136
        $region26: #{cnn1_forward.1} parent=11 // pred_check_branch
          %406 = sbr.rel (%p404) target = $region28
        $region27: #{cnn1_forward.1} parent=11 // pred_region
          %s408 = ssub.s32 32, 32
          %409 = vsyncadd [#allocation6], %s408
          %s411 = sshll.u32 [#allocation5], 4
          %s412 = int_to_ptr.vmem [resolvable:$true] %s411
          %414 = dma.hbm_to_vmem [thread:$0]  %s4, 32, %s412, [#allocation6]
        $region28: #{cnn1_forward.1} parent=11 // pred_fallthru
          _
        // Predicated region
        $region29: #{cnn1_forward.1} parent=11 // pred_check
          %p415 = pneg %p157
        $region30: #{cnn1_forward.1} parent=11 // pred_check_branch
          %417 = sbr.rel (%p415) target = $region32
        $region31: #{cnn1_forward.1} parent=11 // pred_region
          _
        $region32: #{cnn1_forward.1} parent=11 // pred_fallthru
          _
        // Predicated region
        $region33: #{cnn1_forward.1} parent=11 // pred_check
          %p418 = pneg %p178
        $region34: #{cnn1_forward.1} parent=11 // pred_check_branch
          %420 = sbr.rel (%p418) target = $region36
        $region35: #{cnn1_forward.1} parent=11 // pred_region
          _
        $region36: #{cnn1_forward.1} parent=11 // pred_fallthru
          _
        // Predicated region
        $region37: #{cnn1_forward.1} parent=11 // pred_check
          %p421 = pneg %p199
        $region38: #{cnn1_forward.1} parent=11 // pred_check_branch
          %423 = sbr.rel (%p421) target = $region40
        $region39: #{cnn1_forward.1} parent=11 // pred_region
          _
        $region40: #{cnn1_forward.1} parent=11 // pred_fallthru
          _
        // Predicated region
        $region41: #{cnn1_forward.1} parent=11 // pred_check
          %p424 = pneg %p220
        $region42: #{cnn1_forward.1} parent=11 // pred_check_branch
          %426 = sbr.rel (%p424) target = $region44
        $region43: #{cnn1_forward.1} parent=11 // pred_region
          _
        $region44: #{cnn1_forward.1} parent=11 // pred_fallthru
          _
        // Predicated region
        $region45: #{cnn1_forward.1} parent=11 // pred_check
          %p427 = pneg %p241
        $region46: #{cnn1_forward.1} parent=11 // pred_check_branch
          %429 = sbr.rel (%p427) target = $region48
        $region47: #{cnn1_forward.1} parent=11 // pred_region
          _
        $region48: #{cnn1_forward.1} parent=11 // pred_fallthru
          _
        // Predicated region
        $region49: #{cnn1_forward.1} parent=11 // pred_check
          %p430 = pneg %p262
        $region50: #{cnn1_forward.1} parent=11 // pred_check_branch
          %432 = sbr.rel (%p430) target = $region52
        $region51: #{cnn1_forward.1} parent=11 // pred_region
          _
        $region52: #{cnn1_forward.1} parent=11 // pred_fallthru
          _
        // Predicated region
        $region53: #{cnn1_forward.1} parent=11 // pred_check
          %p433 = pneg %p283
        $region54: #{cnn1_forward.1} parent=11 // pred_check_branch
          %435 = sbr.rel (%p433) target = $region56
        $region55: #{cnn1_forward.1} parent=11 // pred_region
          _
        $region56: #{cnn1_forward.1} parent=11 // pred_fallthru
          _
        // Predicated region
        $region57: #{cnn1_forward.1} parent=11 // pred_check
          %p436 = pneg %p304
        $region58: #{cnn1_forward.1} parent=11 // pred_check_branch
          %438 = sbr.rel (%p436) target = $region60
        $region59: #{cnn1_forward.1} parent=11 // pred_region
          _
        $region60: #{cnn1_forward.1} parent=11 // pred_fallthru
          _
        // Predicated region
        $region61: #{cnn1_forward.1} parent=11 // pred_check
          %p439 = pneg %p325
        $region62: #{cnn1_forward.1} parent=11 // pred_check_branch
          %441 = sbr.rel (%p439) target = $region64
        $region63: #{cnn1_forward.1} parent=11 // pred_region
          _
        $region64: #{cnn1_forward.1} parent=11 // pred_fallthru
          _
        // Predicated region
        $region65: #{cnn1_forward.1} parent=11 // pred_check
          %p442 = pneg %p346
        $region66: #{cnn1_forward.1} parent=11 // pred_check_branch
          %444 = sbr.rel (%p442) target = $region68
        $region67: #{cnn1_forward.1} parent=11 // pred_region
          _
        $region68: #{cnn1_forward.1} parent=11 // pred_fallthru
          _
      $region12: #{cnn1_forward.1} parent=5 // pred_fallthru
        _
      %p445 = scmp.lt.s32.totalorder %s26, 2
      // Predicated region
      $region69: #{cnn1_forward.1} parent=5 // pred_check
        %p446 = pneg %p445
      $region70: #{cnn1_forward.1} parent=5 // pred_check_branch
        %448 = sbr.rel (%p446) target = $region72
      $region71: #{cnn1_forward.1} parent=5 // pred_region
        // Predicated region
        $region73: #{cnn1_forward.1} parent=71 // pred_check
          %p449 = pneg %p46
        $region74: #{cnn1_forward.1} parent=71 // pred_check_branch
          %451 = sbr.rel (%p449) target = $region76
        $region75: #{cnn1_forward.1} parent=71 // pred_region
          %p452 = scmp.lt.s32.totalorder %s26, 1
          %s453 = scalar_select %p452, %s26, 1
          %s454 = smul.addr %s453, 4
          %s455 = smul.addr %s454, 8
          %s456 = scalar_lea.vmem %s0, %s455
        $region76: #{cnn1_forward.1} parent=71 // pred_fallthru
          _
      $region72: #{cnn1_forward.1} parent=5 // pred_fallthru
        _
      %p457 = scmp.le.s32.totalorder 1, %s26
      %p458 = scmp.lt.s32.totalorder %s26, 3
      %p459 = pnand %p457, %p458
      %p460 = pneg %p459
      // Predicated region
      $region77: #{cnn1_forward.1} parent=5 // pred_check
        _
      $region78: #{cnn1_forward.1} parent=5 // pred_check_branch
        %462 = sbr.rel (%p459) target = $region80
      $region79: #{cnn1_forward.1} parent=5 // pred_region
        %s463 = ssub.s32 %s26, 1
        // Predicated region
        $region81: #{cnn1_forward.1} parent=79 // pred_check
          %p464 = pneg %p94
        $region82: #{cnn1_forward.1} parent=79 // pred_check_branch
          %466 = sbr.rel (%p464) target = $region84
        $region83: #{cnn1_forward.1} parent=79 // pred_region
          %467 = dma.done [#allocation3], 32
        $region84: #{cnn1_forward.1} parent=79 // pred_fallthru
          _
        // Predicated region
        $region85: #{cnn1_forward.1} parent=79 // pred_check
          %p468 = pneg %p136
        $region86: #{cnn1_forward.1} parent=79 // pred_check_branch
          %470 = sbr.rel (%p468) target = $region88
        $region87: #{cnn1_forward.1} parent=79 // pred_region
          %471 = dma.done [#allocation6], 32
        $region88: #{cnn1_forward.1} parent=79 // pred_fallthru
          _
        %p472 = scmp.lt.s32.totalorder %s31, 1
        %s473 = scalar_select %p472, %s31, 1
        %s474 = smul.addr %s473, 4
        %s475 = smul.addr %s474, 8
        %s476 = scalar_lea.vmem %s0, %s475
        %p477 = pneg %p52
        %p478 = pneg %p49
        %p479 = pneg %p73
        %p480 = pneg %p70
        %p481 = pneg %p94
        %p482 = pneg %p91
        %p483 = pneg %p115
        %p484 = pneg %p112
        %p485 = pneg %p136
        %p486 = pneg %p133
        %p487 = pneg %p157
        %p488 = pneg %p154
        %p489 = pneg %p178
        %p490 = pneg %p175
        %p491 = pneg %p199
        %p492 = pneg %p196
        %p493 = pneg %p220
        %p494 = pneg %p217
        %p495 = pneg %p241
        %p496 = pneg %p238
        %p497 = pneg %p262
        %p498 = pneg %p259
        %p499 = pneg %p283
        %p500 = pneg %p280
        %p501 = pneg %p304
        %p502 = pneg %p301
        %p503 = pneg %p325
        %p504 = pneg %p322
        %p505 = pneg %p346
        %p506 = pneg %p343
        %p507 = pneg %p372
        %p508 = pneg %p369
        %s509 = sand.u32 %s359, 1
        %s510 = scalar_lea.sflag [#allocation4], %s509
        %s511 = sand.u32 %s359, 1
        %s512 = scalar_lea.vmem [#allocation7], %s511
        %p513 = scmp.lt.s32.totalorder %s31, 1
        %s514 = scalar_select %p513, %s31, 1
        %s515 = smul.addr %s514, 4
        %s516 = smul.addr %s515, 8
        %s517 = scalar_lea.vmem %s0, %s516
        %v518 = vld [vmem:[%s517] sm:$0xff]
        %v519 = vld [vmem:[%s517 + $0x8] sm:$0xff]
        %v520 = vld [vmem:[%s517 + $0x10] sm:$0xff]
        %v521 = vld [vmem:[%s517 + $0x18] sm:$0xf]
        %v522 = vld [vmem:[%s1] sm:$0xff]
        %v523 = vld [vmem:[%s1 + $0x8] sm:$0xff]
        %v524 = vld [vmem:[%s1 + $0x10] sm:$0x1]
        %v525 = vld [vmem:[%s1 + $0x18] sm:$0x1]
        %530 = vrot.lane.b32.xlu0 %v518, 26
        %v531 = vpop.permute.xlu0 %530
        %532 = vrot.lane.b32.xlu0 %v519, 26
        %v533 = vpop.permute.xlu0 %532
        %534 = vrot.lane.b32.xlu0 %v520, 26
        %v535 = vpop.permute.xlu0 %534
        %536 = vrot.lane.b32.xlu0 %v521, 26
        %v537 = vpop.permute.xlu0 %536
        %vm542 = vcmask 211968
        %v543 = vsel %vm542, %v518, %v531
        %v544 = vsel %vm542, %v519, %v533
        %v545 = vsel %vm542, %v520, %v535
        %v546 = vsel %vm542, %v521, %v537
        %551 = vrot.lane.b32.xlu0 %v543, 52
        %v552 = vpop.permute.xlu0 %551
        %553 = vrot.lane.b32.xlu0 %v544, 52
        %v554 = vpop.permute.xlu0 %553
        %555 = vrot.lane.b32.xlu0 %v545, 52
        %v556 = vpop.permute.xlu0 %555
        %557 = vrot.lane.b32.xlu0 %v546, 52
        %v558 = vpop.permute.xlu0 %557
        %vm563 = vcmask 424960
        %v564 = vsel %vm563, %v543, %v552
        %v565 = vsel %vm563, %v544, %v554
        %v566 = vsel %vm563, %v545, %v556
        %v567 = vsel %vm563, %v546, %v558
        %568 = vrot.lane.b32.xlu0 %v518, 104
        %v569 = vpop.permute.xlu0 %568
        %570 = vrot.lane.b32.xlu0 %v519, 104
        %v571 = vpop.permute.xlu0 %570
        %572 = vrot.lane.b32.xlu0 %v520, 104
        %v573 = vpop.permute.xlu0 %572
        %574 = vrot.lane.b32.xlu0 %v521, 104
        %v575 = vpop.permute.xlu0 %574
        %580 = vrot.lane.b32.xlu0 %v518, 2
        %v581 = vpop.permute.xlu0 %580
        %582 = vrot.lane.b32.xlu0 %v519, 2
        %v583 = vpop.permute.xlu0 %582
        %584 = vrot.lane.b32.xlu0 %v520, 2
        %v585 = vpop.permute.xlu0 %584
        %586 = vrot.lane.b32.xlu0 %v521, 2
        %v587 = vpop.permute.xlu0 %586
        %vm592 = vcmask 850944
        %v593 = vsel %vm592, %v564, %v569
        %v594 = vsel %vm592, %v565, %v571
        %v595 = vsel %vm592, %v566, %v573
        %v596 = vsel %vm592, %v567, %v575
        %vm597 = vcmask 15360
        %v598 = vsel %vm597, %v569, %v581
        %v599 = vsel %vm597, %v571, %v583
        %v600 = vsel %vm597, %v573, %v585
        %v601 = vsel %vm597, %v575, %v587
        %v602 = vlaneseq
        %v603 = vshrl.u32 %v602, 7
        %v604 = vsub.s32 0, %v603
        %v605 = vrot.slane %v522, %v604
        %v606 = vlaneseq
        %v607 = vshrl.u32 %v606, 7
        %v608 = vsub.s32 0, %v607
        %v609 = vrot.slane %v523, %v608
        %v610 = vmul.f32 %v593, %v605
        %v611 = vmul.f32 %v598, %v609
        %v612 = vmul.f32 %v594, %v605
        %v613 = vmul.f32 %v599, %v609
        %v614 = vmul.f32 %v595, %v605
        %v615 = vmul.f32 %v600, %v609
        %v616 = vmul.f32 %v596, %v605
        %v617 = vmul.f32 %v601, %v609
        %618 = vrot.lane.b32.xlu0 %v518, 127
        %v619 = vpop.permute.xlu0 %618
        %620 = vrot.lane.b32.xlu0 %v519, 127
        %v621 = vpop.permute.xlu0 %620
        %622 = vrot.lane.b32.xlu0 %v520, 127
        %v623 = vpop.permute.xlu0 %622
        %624 = vrot.lane.b32.xlu0 %v521, 127
        %v625 = vpop.permute.xlu0 %624
        %630 = vrot.lane.b32.xlu0 %v518, 25
        %v631 = vpop.permute.xlu0 %630
        %632 = vrot.lane.b32.xlu0 %v519, 25
        %v633 = vpop.permute.xlu0 %632
        %634 = vrot.lane.b32.xlu0 %v520, 25
        %v635 = vpop.permute.xlu0 %634
        %636 = vrot.lane.b32.xlu0 %v521, 25
        %v637 = vpop.permute.xlu0 %636
        %v642 = vsel %vm542, %v619, %v631
        %v643 = vsel %vm542, %v621, %v633
        %v644 = vsel %vm542, %v623, %v635
        %v645 = vsel %vm542, %v625, %v637
        %650 = vrot.lane.b32.xlu0 %v642, 52
        %v651 = vpop.permute.xlu0 %650
        %652 = vrot.lane.b32.xlu0 %v643, 52
        %v653 = vpop.permute.xlu0 %652
        %654 = vrot.lane.b32.xlu0 %v644, 52
        %v655 = vpop.permute.xlu0 %654
        %656 = vrot.lane.b32.xlu0 %v645, 52
        %v657 = vpop.permute.xlu0 %656
        %v662 = vsel %vm563, %v642, %v651
        %v663 = vsel %vm563, %v643, %v653
        %v664 = vsel %vm563, %v644, %v655
        %v665 = vsel %vm563, %v645, %v657
        %666 = vrot.lane.b32.xlu0 %v518, 103
        %v667 = vpop.permute.xlu0 %666
        %668 = vrot.lane.b32.xlu0 %v519, 103
        %v669 = vpop.permute.xlu0 %668
        %670 = vrot.lane.b32.xlu0 %v520, 103
        %v671 = vpop.permute.xlu0 %670
        %672 = vrot.lane.b32.xlu0 %v521, 103
        %v673 = vpop.permute.xlu0 %672
        %678 = vrot.lane.b32.xlu0 %v518, 1
        %v679 = vpop.permute.xlu0 %678
        %680 = vrot.lane.b32.xlu0 %v519, 1
        %v681 = vpop.permute.xlu0 %680
        %682 = vrot.lane.b32.xlu0 %v520, 1
        %v683 = vpop.permute.xlu0 %682
        %684 = vrot.lane.b32.xlu0 %v521, 1
        %v685 = vpop.permute.xlu0 %684
        %v690 = vsel %vm592, %v662, %v667
        %v691 = vsel %vm592, %v663, %v669
        %v692 = vsel %vm592, %v664, %v671
        %v693 = vsel %vm592, %v665, %v673
        %v694 = vsel %vm597, %v667, %v679
        %v695 = vsel %vm597, %v669, %v681
        %v696 = vsel %vm597, %v671, %v683
        %v697 = vsel %vm597, %v673, %v685
        %v698 = vlaneseq
        %v699 = vshrl.u32 %v698, 7
        %v700 = vsub.s32 1, %v699
        %v701 = vrot.slane %v522, %v700
        %v702 = vlaneseq
        %v703 = vshrl.u32 %v702, 7
        %v704 = vsub.s32 1, %v703
        %v705 = vrot.slane %v523, %v704
        %v706 = vmul.f32 %v690, %v701
        %v707 = vmul.f32 %v694, %v705
        %v708 = vmul.f32 %v691, %v701
        %v709 = vmul.f32 %v695, %v705
        %v710 = vmul.f32 %v692, %v701
        %v711 = vmul.f32 %v696, %v705
        %v712 = vmul.f32 %v693, %v701
        %v713 = vmul.f32 %v697, %v705
        %v714 = vadd.f32 %v610, %v706
        %v715 = vadd.f32 %v611, %v707
        %v716 = vadd.f32 %v612, %v708
        %v717 = vadd.f32 %v613, %v709
        %v718 = vadd.f32 %v614, %v710
        %v719 = vadd.f32 %v615, %v711
        %v720 = vadd.f32 %v616, %v712
        %v721 = vadd.f32 %v617, %v713
        %722 = vrot.lane.b32.xlu0 %v518, 126
        %v723 = vpop.permute.xlu0 %722
        %724 = vrot.lane.b32.xlu0 %v519, 126
        %v725 = vpop.permute.xlu0 %724
        %726 = vrot.lane.b32.xlu0 %v520, 126
        %v727 = vpop.permute.xlu0 %726
        %728 = vrot.lane.b32.xlu0 %v521, 126
        %v729 = vpop.permute.xlu0 %728
        %734 = vrot.lane.b32.xlu0 %v518, 24
        %v735 = vpop.permute.xlu0 %734
        %736 = vrot.lane.b32.xlu0 %v519, 24
        %v737 = vpop.permute.xlu0 %736
        %738 = vrot.lane.b32.xlu0 %v520, 24
        %v739 = vpop.permute.xlu0 %738
        %740 = vrot.lane.b32.xlu0 %v521, 24
        %v741 = vpop.permute.xlu0 %740
        %v746 = vsel %vm542, %v723, %v735
        %v747 = vsel %vm542, %v725, %v737
        %v748 = vsel %vm542, %v727, %v739
        %v749 = vsel %vm542, %v729, %v741
        %754 = vrot.lane.b32.xlu0 %v746, 52
        %v755 = vpop.permute.xlu0 %754
        %756 = vrot.lane.b32.xlu0 %v747, 52
        %v757 = vpop.permute.xlu0 %756
        %758 = vrot.lane.b32.xlu0 %v748, 52
        %v759 = vpop.permute.xlu0 %758
        %760 = vrot.lane.b32.xlu0 %v749, 52
        %v761 = vpop.permute.xlu0 %760
        %v766 = vsel %vm563, %v746, %v755
        %v767 = vsel %vm563, %v747, %v757
        %v768 = vsel %vm563, %v748, %v759
        %v769 = vsel %vm563, %v749, %v761
        %770 = vrot.lane.b32.xlu0 %v518, 102
        %v771 = vpop.permute.xlu0 %770
        %772 = vrot.lane.b32.xlu0 %v519, 102
        %v773 = vpop.permute.xlu0 %772
        %774 = vrot.lane.b32.xlu0 %v520, 102
        %v775 = vpop.permute.xlu0 %774
        %776 = vrot.lane.b32.xlu0 %v521, 102
        %v777 = vpop.permute.xlu0 %776
        %v782 = vsel %vm592, %v766, %v771
        %v783 = vsel %vm592, %v767, %v773
        %v784 = vsel %vm592, %v768, %v775
        %v785 = vsel %vm592, %v769, %v777
        %v786 = vsel %vm597, %v771, %v518
        %v787 = vsel %vm597, %v773, %v519
        %v788 = vsel %vm597, %v775, %v520
        %v789 = vsel %vm597, %v777, %v521
        %v790 = vlaneseq
        %v791 = vshrl.u32 %v790, 7
        %v792 = vsub.s32 2, %v791
        %v793 = vrot.slane %v522, %v792
        %v794 = vlaneseq
        %v795 = vshrl.u32 %v794, 7
        %v796 = vsub.s32 2, %v795
        %v797 = vrot.slane %v523, %v796
        %v798 = vmul.f32 %v782, %v793
        %v799 = vmul.f32 %v786, %v797
        %v800 = vmul.f32 %v783, %v793
        %v801 = vmul.f32 %v787, %v797
        %v802 = vmul.f32 %v784, %v793
        %v803 = vmul.f32 %v788, %v797
        %v804 = vmul.f32 %v785, %v793
        %v805 = vmul.f32 %v789, %v797
        %v806 = vadd.f32 %v714, %v798
        %v807 = vadd.f32 %v715, %v799
        %v808 = vadd.f32 %v716, %v800
        %v809 = vadd.f32 %v717, %v801
        %v810 = vadd.f32 %v718, %v802
        %v811 = vadd.f32 %v719, %v803
        %v812 = vadd.f32 %v720, %v804
        %v813 = vadd.f32 %v721, %v805
        %v814 = vlaneseq
        %v815 = vshrl.u32 %v814, 7
        %v816 = vsub.s32 3, %v815
        %v817 = vrot.slane %v522, %v816
        %v818 = vlaneseq
        %v819 = vshrl.u32 %v818, 7
        %v820 = vsub.s32 3, %v819
        %v821 = vrot.slane %v523, %v820
        %v822 = vmul.f32 %v593, %v817
        %v823 = vmul.f32 %v598, %v821
        %v824 = vmul.f32 %v594, %v817
        %v825 = vmul.f32 %v599, %v821
        %v826 = vmul.f32 %v595, %v817
        %v827 = vmul.f32 %v600, %v821
        %v828 = vmul.f32 %v596, %v817
        %v829 = vmul.f32 %v601, %v821
        %vm838 = vcmask 1046528
        %v839 = vrot.slane %v822, 1
        %v840 = vrot.slane %v824, 1
        %v841 = vsel %vm838, %v839, %v840
        %v842 = vrot.slane %v823, 1
        %v843 = vrot.slane %v825, 1
        %v844 = vsel %vm838, %v842, %v843
        %v845 = vrot.slane %v826, 1
        %v846 = vsel %vm838, %v840, %v845
        %v847 = vrot.slane %v827, 1
        %v848 = vsel %vm838, %v843, %v847
        %v849 = vrot.slane %v828, 1
        %v850 = vsel %vm838, %v845, %v849
        %v851 = vrot.slane %v829, 1
        %v852 = vsel %vm838, %v847, %v851
        %v861 = vadd.f32 %v806, %v841
        %v862 = vadd.f32 %v807, %v844
        %v863 = vadd.f32 %v808, %v846
        %v864 = vadd.f32 %v809, %v848
        %v865 = vadd.f32 %v810, %v850
        %v866 = vadd.f32 %v811, %v852
        %v867 = vadd.f32 %v812, %v849
        %v868 = vadd.f32 %v813, %v851
        %v869 = vlaneseq
        %v870 = vshrl.u32 %v869, 7
        %v871 = vsub.s32 4, %v870
        %v872 = vrot.slane %v522, %v871
        %v873 = vlaneseq
        %v874 = vshrl.u32 %v873, 7
        %v875 = vsub.s32 4, %v874
        %v876 = vrot.slane %v523, %v875
        %v877 = vmul.f32 %v690, %v872
        %v878 = vmul.f32 %v694, %v876
        %v879 = vmul.f32 %v691, %v872
        %v880 = vmul.f32 %v695, %v876
        %v881 = vmul.f32 %v692, %v872
        %v882 = vmul.f32 %v696, %v876
        %v883 = vmul.f32 %v693, %v872
        %v884 = vmul.f32 %v697, %v876
        %v893 = vrot.slane %v877, 1
        %v894 = vrot.slane %v879, 1
        %v895 = vsel %vm838, %v893, %v894
        %v896 = vrot.slane %v878, 1
        %v897 = vrot.slane %v880, 1
        %v898 = vsel %vm838, %v896, %v897
        %v899 = vrot.slane %v881, 1
        %v900 = vsel %vm838, %v894, %v899
        %v901 = vrot.slane %v882, 1
        %v902 = vsel %vm838, %v897, %v901
        %v903 = vrot.slane %v883, 1
        %v904 = vsel %vm838, %v899, %v903
        %v905 = vrot.slane %v884, 1
        %v906 = vsel %vm838, %v901, %v905
        %v915 = vadd.f32 %v861, %v895
        %v916 = vadd.f32 %v862, %v898
        %v917 = vadd.f32 %v863, %v900
        %v918 = vadd.f32 %v864, %v902
        %v919 = vadd.f32 %v865, %v904
        %v920 = vadd.f32 %v866, %v906
        %v921 = vadd.f32 %v867, %v903
        %v922 = vadd.f32 %v868, %v905
        %v923 = vlaneseq
        %v924 = vshrl.u32 %v923, 7
        %v925 = vsub.s32 5, %v924
        %v926 = vrot.slane %v522, %v925
        %v927 = vlaneseq
        %v928 = vshrl.u32 %v927, 7
        %v929 = vsub.s32 5, %v928
        %v930 = vrot.slane %v523, %v929
        %v931 = vmul.f32 %v782, %v926
        %v932 = vmul.f32 %v786, %v930
        %v933 = vmul.f32 %v783, %v926
        %v934 = vmul.f32 %v787, %v930
        %v935 = vmul.f32 %v784, %v926
        %v936 = vmul.f32 %v788, %v930
        %v937 = vmul.f32 %v785, %v926
        %v938 = vmul.f32 %v789, %v930
        %v947 = vrot.slane %v931, 1
        %v948 = vrot.slane %v933, 1
        %v949 = vsel %vm838, %v947, %v948
        %v950 = vrot.slane %v932, 1
        %v951 = vrot.slane %v934, 1
        %v952 = vsel %vm838, %v950, %v951
        %v953 = vrot.slane %v935, 1
        %v954 = vsel %vm838, %v948, %v953
        %v955 = vrot.slane %v936, 1
        %v956 = vsel %vm838, %v951, %v955
        %v957 = vrot.slane %v937, 1
        %v958 = vsel %vm838, %v953, %v957
        %v959 = vrot.slane %v938, 1
        %v960 = vsel %vm838, %v955, %v959
        %v969 = vadd.f32 %v915, %v949
        %v970 = vadd.f32 %v916, %v952
        %v971 = vadd.f32 %v917, %v954
        %v972 = vadd.f32 %v918, %v956
        %v973 = vadd.f32 %v919, %v958
        %v974 = vadd.f32 %v920, %v960
        %v975 = vadd.f32 %v921, %v957
        %v976 = vadd.f32 %v922, %v959
        %v977 = vlaneseq
        %v978 = vshrl.u32 %v977, 7
        %v979 = vsub.s32 6, %v978
        %v980 = vrot.slane %v522, %v979
        %v981 = vlaneseq
        %v982 = vshrl.u32 %v981, 7
        %v983 = vsub.s32 6, %v982
        %v984 = vrot.slane %v523, %v983
        %v985 = vmul.f32 %v593, %v980
        %v986 = vmul.f32 %v598, %v984
        %v987 = vmul.f32 %v594, %v980
        %v988 = vmul.f32 %v599, %v984
        %v989 = vmul.f32 %v595, %v980
        %v990 = vmul.f32 %v600, %v984
        %v991 = vmul.f32 %v596, %v980
        %v992 = vmul.f32 %v601, %v984
        %vm1001 = vcmask 1045504
        %v1002 = vrot.slane %v985, 2
        %v1003 = vrot.slane %v987, 2
        %v1004 = vsel %vm1001, %v1002, %v1003
        %v1005 = vrot.slane %v986, 2
        %v1006 = vrot.slane %v988, 2
        %v1007 = vsel %vm1001, %v1005, %v1006
        %v1008 = vrot.slane %v989, 2
        %v1009 = vsel %vm1001, %v1003, %v1008
        %v1010 = vrot.slane %v990, 2
        %v1011 = vsel %vm1001, %v1006, %v1010
        %v1012 = vrot.slane %v991, 2
        %v1013 = vsel %vm1001, %v1008, %v1012
        %v1014 = vrot.slane %v992, 2
        %v1015 = vsel %vm1001, %v1010, %v1014
        %v1024 = vadd.f32 %v969, %v1004
        %v1025 = vadd.f32 %v970, %v1007
        %v1026 = vadd.f32 %v971, %v1009
        %v1027 = vadd.f32 %v972, %v1011
        %v1028 = vadd.f32 %v973, %v1013
        %v1029 = vadd.f32 %v974, %v1015
        %v1030 = vadd.f32 %v975, %v1012
        %v1031 = vadd.f32 %v976, %v1014
        %v1032 = vlaneseq
        %v1033 = vshrl.u32 %v1032, 7
        %v1034 = vsub.s32 7, %v1033
        %v1035 = vrot.slane %v522, %v1034
        %v1036 = vlaneseq
        %v1037 = vshrl.u32 %v1036, 7
        %v1038 = vsub.s32 7, %v1037
        %v1039 = vrot.slane %v523, %v1038
        %v1040 = vmul.f32 %v690, %v1035
        %v1041 = vmul.f32 %v694, %v1039
        %v1042 = vmul.f32 %v691, %v1035
        %v1043 = vmul.f32 %v695, %v1039
        %v1044 = vmul.f32 %v692, %v1035
        %v1045 = vmul.f32 %v696, %v1039
        %v1046 = vmul.f32 %v693, %v1035
        %v1047 = vmul.f32 %v697, %v1039
        %v1056 = vrot.slane %v1040, 2
        %v1057 = vrot.slane %v1042, 2
        %v1058 = vsel %vm1001, %v1056, %v1057
        %v1059 = vrot.slane %v1041, 2
        %v1060 = vrot.slane %v1043, 2
        %v1061 = vsel %vm1001, %v1059, %v1060
        %v1062 = vrot.slane %v1044, 2
        %v1063 = vsel %vm1001, %v1057, %v1062
        %v1064 = vrot.slane %v1045, 2
        %v1065 = vsel %vm1001, %v1060, %v1064
        %v1066 = vrot.slane %v1046, 2
        %v1067 = vsel %vm1001, %v1062, %v1066
        %v1068 = vrot.slane %v1047, 2
        %v1069 = vsel %vm1001, %v1064, %v1068
        %v1078 = vadd.f32 %v1024, %v1058
        %v1079 = vadd.f32 %v1025, %v1061
        %v1080 = vadd.f32 %v1026, %v1063
        %v1081 = vadd.f32 %v1027, %v1065
        %v1082 = vadd.f32 %v1028, %v1067
        %v1083 = vadd.f32 %v1029, %v1069
        %v1084 = vadd.f32 %v1030, %v1066
        %v1085 = vadd.f32 %v1031, %v1068
        %v1086 = vlaneseq
        %v1087 = vshrl.u32 %v1086, 7
        %v1088 = vsub.s32 0, %v1087
        %v1089 = vrot.slane %v524, %v1088
        %v1090 = vlaneseq
        %v1091 = vshrl.u32 %v1090, 7
        %v1092 = vsub.s32 0, %v1091
        %v1093 = vrot.slane %v525, %v1092
        %v1094 = vmul.f32 %v782, %v1089
        %v1095 = vmul.f32 %v786, %v1093
        %v1096 = vmul.f32 %v783, %v1089
        %v1097 = vmul.f32 %v787, %v1093
        %v1098 = vmul.f32 %v784, %v1089
        %v1099 = vmul.f32 %v788, %v1093
        %v1100 = vmul.f32 %v785, %v1089
        %v1101 = vmul.f32 %v789, %v1093
        %v1110 = vrot.slane %v1094, 2
        %v1111 = vrot.slane %v1096, 2
        %v1112 = vsel %vm1001, %v1110, %v1111
        %v1113 = vrot.slane %v1095, 2
        %v1114 = vrot.slane %v1097, 2
        %v1115 = vsel %vm1001, %v1113, %v1114
        %v1116 = vrot.slane %v1098, 2
        %v1117 = vsel %vm1001, %v1111, %v1116
        %v1118 = vrot.slane %v1099, 2
        %v1119 = vsel %vm1001, %v1114, %v1118
        %v1120 = vrot.slane %v1100, 2
        %v1121 = vsel %vm1001, %v1116, %v1120
        %v1122 = vrot.slane %v1101, 2
        %v1123 = vsel %vm1001, %v1118, %v1122
        %v1132 = vadd.f32 %v1078, %v1112
        %v1133 = vadd.f32 %v1079, %v1115
        %v1134 = vadd.f32 %v1080, %v1117
        %v1135 = vadd.f32 %v1081, %v1119
        %v1136 = vadd.f32 %v1082, %v1121
        %v1137 = vadd.f32 %v1083, %v1123
        %v1138 = vadd.f32 %v1084, %v1120
        %v1139 = vadd.f32 %v1085, %v1122
        %v1140 = vld [vmem:[#allocation2] sm:$0x3]
        %v1142 = vlaneseq
        %v1143 = vshrl.u32 %v1142, 7
        %v1144 = vsub.s32 0, %v1143
        %v1145 = vrot.slane %v1140, %v1144
        %v1146 = vlaneseq
        %v1147 = vshrl.u32 %v1146, 7
        %v1148 = vsub.s32 1, %v1147
        %v1149 = vrot.slane %v1140, %v1148
        %v1152 = vadd.f32 %v1132, %v1145
        %v1153 = vadd.f32 %v1133, %v1149
        %v1154 = vadd.f32 %v1134, %v1145
        %v1155 = vadd.f32 %v1135, %v1149
        %v1156 = vadd.f32 %v1136, %v1145
        %v1157 = vadd.f32 %v1137, %v1149
        %v1158 = vadd.f32 %v1138, %v1145
        %v1159 = vadd.f32 %v1139, %v1149
        %v1160 = vmax.f32 %v1152, 0.0
        %v1161 = vmax.f32 %v1153, 0.0
        %v1162 = vmax.f32 %v1154, 0.0
        %v1163 = vmax.f32 %v1155, 0.0
        %v1164 = vmax.f32 %v1156, 0.0
        %v1165 = vmax.f32 %v1157, 0.0
        %v1166 = vmax.f32 %v1158, 0.0
        %v1167 = vmax.f32 %v1159, 0.0
        %v1176 = vrot.slane %v1160, 1
        %v1177 = vrot.slane %v1162, 1
        %v1178 = vsel %vm838, %v1176, %v1177
        %v1179 = vrot.slane %v1161, 1
        %v1180 = vrot.slane %v1163, 1
        %v1181 = vsel %vm838, %v1179, %v1180
        %v1182 = vrot.slane %v1164, 1
        %v1183 = vsel %vm838, %v1177, %v1182
        %v1184 = vrot.slane %v1165, 1
        %v1185 = vsel %vm838, %v1180, %v1184
        %v1186 = vrot.slane %v1166, 1
        %v1187 = vsel %vm838, %v1182, %v1186
        %v1188 = vrot.slane %v1167, 1
        %v1189 = vsel %vm838, %v1184, %v1188
        %v1198 = vmax.f32 %v1160, %v1178
        %v1199 = vmax.f32 %v1161, %v1181
        %v1200 = vmax.f32 %v1162, %v1183
        %v1201 = vmax.f32 %v1163, %v1185
        %v1202 = vmax.f32 %v1164, %v1187
        %v1203 = vmax.f32 %v1165, %v1189
        %v1204 = vmax.f32 %v1166, %v1186
        %v1205 = vmax.f32 %v1167, %v1188
        %1214 = vrot.lane.b32.xlu0 %v1198, 127
        %v1215 = vpop.permute.xlu0 %1214
        %1216 = vrot.lane.b32.xlu0 %v1199, 127
        %v1217 = vpop.permute.xlu0 %1216
        %1218 = vrot.lane.b32.xlu0 %v1200, 127
        %v1219 = vpop.permute.xlu0 %1218
        %1220 = vrot.lane.b32.xlu0 %v1201, 127
        %v1221 = vpop.permute.xlu0 %1220
        %1222 = vrot.lane.b32.xlu0 %v1202, 127
        %v1223 = vpop.permute.xlu0 %1222
        %1224 = vrot.lane.b32.xlu0 %v1203, 127
        %v1225 = vpop.permute.xlu0 %1224
        %1226 = vrot.lane.b32.xlu0 %v1204, 127
        %v1227 = vpop.permute.xlu0 %1226
        %1228 = vrot.lane.b32.xlu0 %v1205, 127
        %v1229 = vpop.permute.xlu0 %1228
        %vm1230 = vcmask 1039360
        %v1231 = vsel %vm1230, %v1215, %v1217
        %v1232 = vsel %vm1230, %v1219, %v1221
        %v1233 = vsel %vm1230, %v1223, %v1225
        %v1234 = vsel %vm1230, %v1227, %v1229
        %v1243 = vmax.f32 %v1198, %v1231
        %v1244 = vmax.f32 %v1199, %v1217
        %v1245 = vmax.f32 %v1200, %v1232
        %v1246 = vmax.f32 %v1201, %v1221
        %v1247 = vmax.f32 %v1202, %v1233
        %v1248 = vmax.f32 %v1203, %v1225
        %v1249 = vmax.f32 %v1204, %v1234
        %v1250 = vmax.f32 %v1205, %v1229
        %v1251 = vld [vmem:[%s5] sm:$0xff]
        %v1252 = vld [vmem:[%s5 + $0x8] sm:$0xff]
        %v1253 = vld [vmem:[%s5 + $0x10] sm:$0xff]
        %v1254 = vld [vmem:[%s5 + $0x18] sm:$0xff]
        %v1255 = vld [vmem:[%s5 + $0x20] sm:$0xff]
        %v1256 = vld [vmem:[%s5 + $0x28] sm:$0xff]
        %v1257 = vld [vmem:[%s5 + $0x30] sm:$0xff]
        %v1258 = vld [vmem:[%s5 + $0x38] sm:$0xff]
        %v1259 = vld [vmem:[%s5 + $0x40] sm:$0xff]
        %v1260 = vld [vmem:[%s5 + $0x48] sm:$0xff]
        %v1261 = vld [vmem:[%s5 + $0x50] sm:$0xff]
        %v1262 = vld [vmem:[%s5 + $0x58] sm:$0xff]
        %v1263 = vld [vmem:[%s5 + $0x60] sm:$0xff]
        %v1264 = vld [vmem:[%s5 + $0x68] sm:$0xff]
        %v1265 = vld [vmem:[%s5 + $0x70] sm:$0xff]
        %v1266 = vld [vmem:[%s5 + $0x78] sm:$0xff]
        %v1267 = vld [vmem:[%s5 + $0x80] sm:$0xff]
        %v1268 = vld [vmem:[%s5 + $0x88] sm:$0xff]
        %v1269 = vld [vmem:[%s5 + $0x90] sm:$0xff]
        %v1270 = vld [vmem:[%s5 + $0x98] sm:$0x7]
        %vm1271 = vcmask 220160
        %v1273 = vsel %vm1271, %v1244, 0
        %v1276 = vsel %vm1271, %v1246, 0
        %v1279 = vsel %vm1271, %v1248, 0
        %v1282 = vsel %vm1271, %v1250, 0
        %vm1284 = vcmask 1042432
        %v1286 = vsel %vm1284, %v1270, 0
        %1288 = vmatprep.subr.mxu0 0.0
        %1289 = vmatpush1.msra.mxu0 %v1251
        %1290 = vmatprep.subr.mxu0 0.0
        %1291 = vmatpush1.msra.mxu0 %v1252
        %1292 = vmatprep.subr.mxu0 0.0
        %1293 = vmatpush1.msra.mxu0 %v1253
        %1294 = vmatprep.subr.mxu0 0.0
        %1295 = vmatpush1.msra.mxu0 %v1254
        %1296 = vmatprep.subr.mxu0 0.0
        %1297 = vmatpush1.msra.mxu0 %v1255
        %1298 = vmatprep.subr.mxu0 0.0
        %1299 = vmatpush1.msra.mxu0 %v1256
        %1300 = vmatprep.subr.mxu0 0.0
        %1301 = vmatpush1.msra.mxu0 %v1257
        %1302 = vmatprep.subr.mxu0 0.0
        %1303 = vmatpush1.msra.mxu0 %v1258
        %1304 = vmatprep.subr.mxu0 0.0
        %1305 = vmatpush1.msra.mxu0 %v1259
        %1306 = vmatprep.subr.mxu0 0.0
        %1307 = vmatpush1.msra.mxu0 %v1260
        %1308 = vmatprep.subr.mxu0 0.0
        %1309 = vmatpush1.msra.mxu0 %v1261
        %1310 = vmatprep.subr.mxu0 0.0
        %1311 = vmatpush1.msra.mxu0 %v1262
        %1312 = vmatprep.subr.mxu0 0.0
        %1313 = vmatpush1.msra.mxu0 %v1263
        %1314 = vmatprep.subr.mxu0 0.0
        %1315 = vmatpush1.msra.mxu0 %v1264
        %1316 = vmatprep.subr.mxu0 0.0
        %1317 = vmatpush1.msra.mxu0 %v1265
        %1318 = vmatprep.subr.mxu0 0.0
        %1319 = vmatpush1.msra.mxu0 %v1266
        %1320 = vmatprep.subr.mxu0 0.0
        %1321 = vmatpush1.msra.mxu0 %v1267
        %1322 = vmatprep.subr.mxu0 0.0
        %1323 = vmatpush1.msra.mxu0 %v1268
        %1324 = vmatprep.subr.mxu0 0.0
        %1325 = vmatpush1.msra.mxu0 %v1269
        %1326 = vmatprep.subr.mxu0 0.0
        %1327 = vmatpush1.msra.mxu0 %v1286
        %1328 = vmatprep.subr.mxu0 0.0
        %1329 = vmatpush1.msra.mxu0 0.0
        %1330 = vmatprep.subr.mxu0 0.0
        %1331 = vmatpush1.msra.mxu0 0.0
        %1332 = vmatprep.subr.mxu0 0.0
        %1333 = vmatpush1.msra.mxu0 0.0
        %1334 = vmatprep.subr.mxu0 0.0
        %1335 = vmatpush1.msra.mxu0 0.0
        %1336 = vmatprep.subr.mxu0 0.0
        %1337 = vmatpush1.msra.mxu0 0.0
        %1338 = vmatprep.subr.mxu0 0.0
        %1339 = vmatpush1.msra.mxu0 0.0
        %1340 = vmatprep.subr.mxu0 0.0
        %1341 = vmatpush1.msra.mxu0 0.0
        %1342 = vmatprep.subr.mxu0 0.0
        %1343 = vmatpush1.msra.mxu0 0.0
        %1344 = vmatprep.subr.mxu0 0.0
        %1345 = vmatpush1.msra.mxu0 0.0
        %1346 = vmatprep.subr.mxu0 0.0
        %1347 = vmatpush1.msra.mxu0 0.0
        %1348 = vmatprep.subr.mxu0 0.0
        %1349 = vmatpush1.msra.mxu0 0.0
        %1350 = vmatprep.subr.mxu0 0.0
        %1351 = vmatpush1.msra.mxu0 0.0
        %1352 = vmatprep.mubr.f32.mxu0 %v1273
        %1353 = vmatmul.mubr.f32.gmra.mrb[0].mxu0 %v1243
        %v1354 = vpop.f32.mrb[0].mxu0
        %v1355 = vadd.f32 0.0, %v1354
        %v1356 = vpop.f32.mrb[0].mxu0
        %1357 = vmatprep.mubr.f32.mxu0 %v1276
        %1358 = vmatmul.mubr.f32.gmra.mrb[0].mxu0 %v1245
        %v1359 = vpop.f32.mrb[0].mxu0
        %v1360 = vadd.f32 0.0, %v1359
        %v1361 = vpop.f32.mrb[0].mxu0
        %1362 = vmatprep.mubr.f32.mxu0 %v1279
        %1363 = vmatmul.mubr.f32.gmra.mrb[0].mxu0 %v1247
        %v1364 = vpop.f32.mrb[0].mxu0
        %v1365 = vadd.f32 0.0, %v1364
        %v1366 = vpop.f32.mrb[0].mxu0
        %1367 = vmatprep.mubr.f32.mxu0 %v1282
        %1368 = vmatmul.mubr.f32.gmra.mrb[0].mxu0 %v1249
        %v1369 = vpop.f32.mrb[0].mxu0
        %v1370 = vadd.f32 0.0, %v1369
        %v1371 = vpop.f32.mrb[0].mxu0
        %1372 = vdwg.mxu0
        %v1373 = vld [vmem:[%s6] sm:$0xff]
        %v1374 = vld [vmem:[%s6 + $0x8] sm:$0x1f]
        %vm1375 = vcmask 203776
        %v1377 = vsel %vm1375, %v1373, 0
        %v1380 = vsel %vm1375, %v1374, 0
        %vm1382 = vcmask 1040384
        %v1384 = vsel %vm1382, %v1370, 0
        %1386 = vmatprep.subr.mxu0 0.0
        %1387 = vmatpush1.msra.mxu0 %v1355
        %1388 = vmatprep.subr.mxu0 0.0
        %1389 = vmatpush1.msra.mxu0 %v1360
        %1390 = vmatprep.subr.mxu0 0.0
        %1391 = vmatpush1.msra.mxu0 %v1365
        %1392 = vmatprep.subr.mxu0 0.0
        %1393 = vmatpush1.msra.mxu0 %v1384
        %1394 = vmatprep.subr.mxu0 0.0
        %1395 = vmatpush1.msra.mxu0 0.0
        %1396 = vmatprep.subr.mxu0 0.0
        %1397 = vmatpush1.msra.mxu0 0.0
        %1398 = vmatprep.subr.mxu0 0.0
        %1399 = vmatpush1.msra.mxu0 0.0
        %1400 = vmatprep.subr.mxu0 0.0
        %1401 = vmatpush1.msra.mxu0 0.0
        %1402 = vmatprep.subr.mxu0 0.0
        %1403 = vmatpush1.msra.mxu0 0.0
        %1404 = vmatprep.subr.mxu0 0.0
        %1405 = vmatpush1.msra.mxu0 0.0
        %1406 = vmatprep.subr.mxu0 0.0
        %1407 = vmatpush1.msra.mxu0 0.0
        %1408 = vmatprep.subr.mxu0 0.0
        %1409 = vmatpush1.msra.mxu0 0.0
        %1410 = vmatprep.subr.mxu0 0.0
        %1411 = vmatpush1.msra.mxu0 0.0
        %1412 = vmatprep.subr.mxu0 0.0
        %1413 = vmatpush1.msra.mxu0 0.0
        %1414 = vmatprep.subr.mxu0 0.0
        %1415 = vmatpush1.msra.mxu0 0.0
        %1416 = vmatprep.subr.mxu0 0.0
        %1417 = vmatpush1.msra.mxu0 0.0
        %1418 = vmatprep.subr.mxu0 0.0
        %1419 = vmatpush1.msra.mxu0 0.0
        %1420 = vmatprep.subr.mxu0 0.0
        %1421 = vmatpush1.msra.mxu0 0.0
        %1422 = vmatprep.subr.mxu0 0.0
        %1423 = vmatpush1.msra.mxu0 0.0
        %1424 = vmatprep.subr.mxu0 0.0
        %1425 = vmatpush1.msra.mxu0 0.0
        %1426 = vmatprep.subr.mxu0 0.0
        %1427 = vmatpush1.msra.mxu0 0.0
        %1428 = vmatprep.subr.mxu0 0.0
        %1429 = vmatpush1.msra.mxu0 0.0
        %1430 = vmatprep.subr.mxu0 0.0
        %1431 = vmatpush1.msra.mxu0 0.0
        %1432 = vmatprep.subr.mxu0 0.0
        %1433 = vmatpush1.msra.mxu0 0.0
        %1434 = vmatprep.subr.mxu0 0.0
        %1435 = vmatpush1.msra.mxu0 0.0
        %1436 = vmatprep.subr.mxu0 0.0
        %1437 = vmatpush1.msra.mxu0 0.0
        %1438 = vmatprep.subr.mxu0 0.0
        %1439 = vmatpush1.msra.mxu0 0.0
        %1440 = vmatprep.subr.mxu0 0.0
        %1441 = vmatpush1.msra.mxu0 0.0
        %1442 = vmatprep.subr.mxu0 0.0
        %1443 = vmatpush1.msra.mxu0 0.0
        %1444 = vmatprep.subr.mxu0 0.0
        %1445 = vmatpush1.msra.mxu0 0.0
        %1446 = vmatprep.subr.mxu0 0.0
        %1447 = vmatpush1.msra.mxu0 0.0
        %1448 = vmatprep.subr.mxu0 0.0
        %1449 = vmatpush1.msra.mxu0 0.0
        %1450 = vmatprep.mubr.f32.mxu0 0.0
        %1451 = vmatmul.mubr.f32.gmra.mrb[0].mxu0 %v1377
        %v1452 = vpop.f32.mrb[0].mxu0
        %v1453 = vadd.f32 0.0, %v1452
        %v1454 = vpop.f32.mrb[0].mxu0
        %1455 = vmatprep.mubr.f32.mxu0 0.0
        %1456 = vmatmul.mubr.f32.gmra.mrb[0].mxu0 %v1380
        %v1457 = vpop.f32.mrb[0].mxu0
        %v1458 = vadd.f32 0.0, %v1457
        %v1459 = vpop.f32.mrb[0].mxu0
        %1460 = vdwg.mxu0
        %v1461 = vld [vmem:[%s3] sm:$0xff]
        %v1462 = vld [vmem:[%s3 + $0x8] sm:$0xff]
        %v1463 = vld [vmem:[%s3 + $0x10] sm:$0xff]
        %v1464 = vld [vmem:[%s3 + $0x18] sm:$0xff]
        %v1465 = vld [vmem:[%s3 + $0x20] sm:$0xff]
        %v1466 = vld [vmem:[%s3 + $0x28] sm:$0xff]
        %v1467 = vld [vmem:[%s3 + $0x30] sm:$0xff]
        %v1468 = vld [vmem:[%s3 + $0x38] sm:$0xff]
        %v1469 = vld [vmem:[%s3 + $0x40] sm:$0xff]
        %v1470 = vld [vmem:[%s3 + $0x48] sm:$0xff]
        %v1471 = vld [vmem:[%s3 + $0x50] sm:$0xff]
        %v1472 = vld [vmem:[%s3 + $0x58] sm:$0xff]
        %v1473 = vld [vmem:[%s3 + $0x60] sm:$0x3f]
        %v1474 = vld [vmem:[%s3 + $0x68] sm:$0x3f]
        %1477 = vrot.lane.b32.xlu0 %v1453, 11
        %v1478 = vpop.permute.xlu0 %1477
        %1479 = vrot.lane.b32.xlu0 %v1458, 11
        %v1480 = vpop.permute.xlu0 %1479
        %vm1483 = vcmask 89088
        %v1484 = vsel %vm1483, %v1453, %v1478
        %v1485 = vsel %vm1483, %v1458, %v1480
        %1488 = vrot.lane.b32.xlu0 %v1484, 22
        %v1489 = vpop.permute.xlu0 %1488
        %1490 = vrot.lane.b32.xlu0 %v1485, 22
        %v1491 = vpop.permute.xlu0 %1490
        %vm1494 = vcmask 179200
        %v1495 = vsel %vm1494, %v1484, %v1489
        %v1496 = vsel %vm1494, %v1485, %v1491
        %1499 = vrot.lane.b32.xlu0 %v1495, 44
        %v1500 = vpop.permute.xlu0 %1499
        %1501 = vrot.lane.b32.xlu0 %v1496, 44
        %v1502 = vpop.permute.xlu0 %1501
        %vm1505 = vcmask 359424
        %v1506 = vsel %vm1505, %v1495, %v1500
        %v1507 = vsel %vm1505, %v1496, %v1502
        %1510 = vrot.lane.b32.xlu0 %v1506, 88
        %v1511 = vpop.permute.xlu0 %1510
        %1512 = vrot.lane.b32.xlu0 %v1507, 88
        %v1513 = vpop.permute.xlu0 %1512
        %vm1516 = vcmask 719872
        %v1517 = vsel %vm1516, %v1506, %v1511
        %v1518 = vsel %vm1516, %v1507, %v1513
        %v1519 = vlaneseq
        %v1520 = vshrl.u32 %v1519, 7
        %v1521 = vsub.s32 0, %v1520
        %v1522 = vrot.slane %v1461, %v1521
        %v1523 = vlaneseq
        %v1524 = vshrl.u32 %v1523, 7
        %v1525 = vsub.s32 0, %v1524
        %v1526 = vrot.slane %v1462, %v1525
        %v1527 = vmul.f32 %v1517, %v1522
        %v1528 = vmul.f32 %v1511, %v1526
        %v1529 = vmul.f32 %v1518, %v1522
        %v1530 = vmul.f32 %v1513, %v1526
        %1531 = vrot.lane.b32.xlu0 %v1453, 127
        %v1532 = vpop.permute.xlu0 %1531
        %1533 = vrot.lane.b32.xlu0 %v1458, 127
        %v1534 = vpop.permute.xlu0 %1533
        %1537 = vrot.lane.b32.xlu0 %v1453, 10
        %v1538 = vpop.permute.xlu0 %1537
        %1539 = vrot.lane.b32.xlu0 %v1458, 10
        %v1540 = vpop.permute.xlu0 %1539
        %v1543 = vsel %vm1483, %v1532, %v1538
        %v1544 = vsel %vm1483, %v1534, %v1540
        %1547 = vrot.lane.b32.xlu0 %v1543, 22
        %v1548 = vpop.permute.xlu0 %1547
        %1549 = vrot.lane.b32.xlu0 %v1544, 22
        %v1550 = vpop.permute.xlu0 %1549
        %v1553 = vsel %vm1494, %v1543, %v1548
        %v1554 = vsel %vm1494, %v1544, %v1550
        %1557 = vrot.lane.b32.xlu0 %v1553, 44
        %v1558 = vpop.permute.xlu0 %1557
        %1559 = vrot.lane.b32.xlu0 %v1554, 44
        %v1560 = vpop.permute.xlu0 %1559
        %v1563 = vsel %vm1505, %v1553, %v1558
        %v1564 = vsel %vm1505, %v1554, %v1560
        %1567 = vrot.lane.b32.xlu0 %v1563, 88
        %v1568 = vpop.permute.xlu0 %1567
        %1569 = vrot.lane.b32.xlu0 %v1564, 88
        %v1570 = vpop.permute.xlu0 %1569
        %v1573 = vsel %vm1516, %v1563, %v1568
        %v1574 = vsel %vm1516, %v1564, %v1570
        %v1575 = vlaneseq
        %v1576 = vshrl.u32 %v1575, 7
        %v1577 = vsub.s32 1, %v1576
        %v1578 = vrot.slane %v1461, %v1577
        %v1579 = vlaneseq
        %v1580 = vshrl.u32 %v1579, 7
        %v1581 = vsub.s32 1, %v1580
        %v1582 = vrot.slane %v1462, %v1581
        %v1583 = vmul.f32 %v1573, %v1578
        %v1584 = vmul.f32 %v1568, %v1582
        %v1585 = vmul.f32 %v1574, %v1578
        %v1586 = vmul.f32 %v1570, %v1582
        %v1587 = vadd.f32 %v1527, %v1583
        %v1588 = vadd.f32 %v1528, %v1584
        %v1589 = vadd.f32 %v1529, %v1585
        %v1590 = vadd.f32 %v1530, %v1586
        %1591 = vrot.lane.b32.xlu0 %v1453, 126
        %v1592 = vpop.permute.xlu0 %1591
        %1593 = vrot.lane.b32.xlu0 %v1458, 126
        %v1594 = vpop.permute.xlu0 %1593
        %1597 = vrot.lane.b32.xlu0 %v1453, 9
        %v1598 = vpop.permute.xlu0 %1597
        %1599 = vrot.lane.b32.xlu0 %v1458, 9
        %v1600 = vpop.permute.xlu0 %1599
        %v1603 = vsel %vm1483, %v1592, %v1598
        %v1604 = vsel %vm1483, %v1594, %v1600
        %1607 = vrot.lane.b32.xlu0 %v1603, 22
        %v1608 = vpop.permute.xlu0 %1607
        %1609 = vrot.lane.b32.xlu0 %v1604, 22
        %v1610 = vpop.permute.xlu0 %1609
        %v1613 = vsel %vm1494, %v1603, %v1608
        %v1614 = vsel %vm1494, %v1604, %v1610
        %1617 = vrot.lane.b32.xlu0 %v1613, 44
        %v1618 = vpop.permute.xlu0 %1617
        %1619 = vrot.lane.b32.xlu0 %v1614, 44
        %v1620 = vpop.permute.xlu0 %1619
        %v1623 = vsel %vm1505, %v1613, %v1618
        %v1624 = vsel %vm1505, %v1614, %v1620
        %1627 = vrot.lane.b32.xlu0 %v1623, 88
        %v1628 = vpop.permute.xlu0 %1627
        %1629 = vrot.lane.b32.xlu0 %v1624, 88
        %v1630 = vpop.permute.xlu0 %1629
        %v1633 = vsel %vm1516, %v1623, %v1628
        %v1634 = vsel %vm1516, %v1624, %v1630
        %v1635 = vlaneseq
        %v1636 = vshrl.u32 %v1635, 7
        %v1637 = vsub.s32 2, %v1636
        %v1638 = vrot.slane %v1461, %v1637
        %v1639 = vlaneseq
        %v1640 = vshrl.u32 %v1639, 7
        %v1641 = vsub.s32 2, %v1640
        %v1642 = vrot.slane %v1462, %v1641
        %v1643 = vmul.f32 %v1633, %v1638
        %v1644 = vmul.f32 %v1628, %v1642
        %v1645 = vmul.f32 %v1634, %v1638
        %v1646 = vmul.f32 %v1630, %v1642
        %v1647 = vadd.f32 %v1587, %v1643
        %v1648 = vadd.f32 %v1588, %v1644
        %v1649 = vadd.f32 %v1589, %v1645
        %v1650 = vadd.f32 %v1590, %v1646
        %v1651 = vlaneseq
        %v1652 = vshrl.u32 %v1651, 7
        %v1653 = vsub.s32 3, %v1652
        %v1654 = vrot.slane %v1461, %v1653
        %v1655 = vlaneseq
        %v1656 = vshrl.u32 %v1655, 7
        %v1657 = vsub.s32 3, %v1656
        %v1658 = vrot.slane %v1462, %v1657
        %v1659 = vmul.f32 %v1517, %v1654
        %v1660 = vmul.f32 %v1511, %v1658
        %v1661 = vmul.f32 %v1518, %v1654
        %v1662 = vmul.f32 %v1513, %v1658
        %v1667 = vrot.slane %v1659, 1
        %v1668 = vrot.slane %v1661, 1
        %v1669 = vsel %vm838, %v1667, %v1668
        %v1670 = vrot.slane %v1660, 1
        %v1671 = vrot.slane %v1662, 1
        %v1672 = vsel %vm838, %v1670, %v1671
        %v1677 = vadd.f32 %v1647, %v1669
        %v1678 = vadd.f32 %v1648, %v1672
        %v1679 = vadd.f32 %v1649, %v1668
        %v1680 = vadd.f32 %v1650, %v1671
        %v1681 = vlaneseq
        %v1682 = vshrl.u32 %v1681, 7
        %v1683 = vsub.s32 4, %v1682
        %v1684 = vrot.slane %v1461, %v1683
        %v1685 = vlaneseq
        %v1686 = vshrl.u32 %v1685, 7
        %v1687 = vsub.s32 4, %v1686
        %v1688 = vrot.slane %v1462, %v1687
        %v1689 = vmul.f32 %v1573, %v1684
        %v1690 = vmul.f32 %v1568, %v1688
        %v1691 = vmul.f32 %v1574, %v1684
        %v1692 = vmul.f32 %v1570, %v1688
        %v1697 = vrot.slane %v1689, 1
        %v1698 = vrot.slane %v1691, 1
        %v1699 = vsel %vm838, %v1697, %v1698
        %v1700 = vrot.slane %v1690, 1
        %v1701 = vrot.slane %v1692, 1
        %v1702 = vsel %vm838, %v1700, %v1701
        %v1707 = vadd.f32 %v1677, %v1699
        %v1708 = vadd.f32 %v1678, %v1702
        %v1709 = vadd.f32 %v1679, %v1698
        %v1710 = vadd.f32 %v1680, %v1701
        %v1711 = vlaneseq
        %v1712 = vshrl.u32 %v1711, 7
        %v1713 = vsub.s32 5, %v1712
        %v1714 = vrot.slane %v1461, %v1713
        %v1715 = vlaneseq
        %v1716 = vshrl.u32 %v1715, 7
        %v1717 = vsub.s32 5, %v1716
        %v1718 = vrot.slane %v1462, %v1717
        %v1719 = vmul.f32 %v1633, %v1714
        %v1720 = vmul.f32 %v1628, %v1718
        %v1721 = vmul.f32 %v1634, %v1714
        %v1722 = vmul.f32 %v1630, %v1718
        %v1727 = vrot.slane %v1719, 1
        %v1728 = vrot.slane %v1721, 1
        %v1729 = vsel %vm838, %v1727, %v1728
        %v1730 = vrot.slane %v1720, 1
        %v1731 = vrot.slane %v1722, 1
        %v1732 = vsel %vm838, %v1730, %v1731
        %v1737 = vadd.f32 %v1707, %v1729
        %v1738 = vadd.f32 %v1708, %v1732
        %v1739 = vadd.f32 %v1709, %v1728
        %v1740 = vadd.f32 %v1710, %v1731
        %v1741 = vlaneseq
        %v1742 = vshrl.u32 %v1741, 7
        %v1743 = vsub.s32 6, %v1742
        %v1744 = vrot.slane %v1461, %v1743
        %v1745 = vlaneseq
        %v1746 = vshrl.u32 %v1745, 7
        %v1747 = vsub.s32 6, %v1746
        %v1748 = vrot.slane %v1462, %v1747
        %v1749 = vmul.f32 %v1517, %v1744
        %v1750 = vmul.f32 %v1511, %v1748
        %v1751 = vmul.f32 %v1518, %v1744
        %v1752 = vmul.f32 %v1513, %v1748
        %v1757 = vrot.slane %v1749, 2
        %v1758 = vrot.slane %v1751, 2
        %v1759 = vsel %vm1001, %v1757, %v1758
        %v1760 = vrot.slane %v1750, 2
        %v1761 = vrot.slane %v1752, 2
        %v1762 = vsel %vm1001, %v1760, %v1761
        %v1767 = vadd.f32 %v1737, %v1759
        %v1768 = vadd.f32 %v1738, %v1762
        %v1769 = vadd.f32 %v1739, %v1758
        %v1770 = vadd.f32 %v1740, %v1761
        %v1771 = vlaneseq
        %v1772 = vshrl.u32 %v1771, 7
        %v1773 = vsub.s32 7, %v1772
        %v1774 = vrot.slane %v1461, %v1773
        %v1775 = vlaneseq
        %v1776 = vshrl.u32 %v1775, 7
        %v1777 = vsub.s32 7, %v1776
        %v1778 = vrot.slane %v1462, %v1777
        %v1779 = vmul.f32 %v1573, %v1774
        %v1780 = vmul.f32 %v1568, %v1778
        %v1781 = vmul.f32 %v1574, %v1774
        %v1782 = vmul.f32 %v1570, %v1778
        %v1787 = vrot.slane %v1779, 2
        %v1788 = vrot.slane %v1781, 2
        %v1789 = vsel %vm1001, %v1787, %v1788
        %v1790 = vrot.slane %v1780, 2
        %v1791 = vrot.slane %v1782, 2
        %v1792 = vsel %vm1001, %v1790, %v1791
        %v1797 = vadd.f32 %v1767, %v1789
        %v1798 = vadd.f32 %v1768, %v1792
        %v1799 = vadd.f32 %v1769, %v1788
        %v1800 = vadd.f32 %v1770, %v1791
        %v1801 = vlaneseq
        %v1802 = vshrl.u32 %v1801, 7
        %v1803 = vsub.s32 0, %v1802
        %v1804 = vrot.slane %v1463, %v1803
        %v1805 = vlaneseq
        %v1806 = vshrl.u32 %v1805, 7
        %v1807 = vsub.s32 0, %v1806
        %v1808 = vrot.slane %v1464, %v1807
        %v1809 = vmul.f32 %v1633, %v1804
        %v1810 = vmul.f32 %v1628, %v1808
        %v1811 = vmul.f32 %v1634, %v1804
        %v1812 = vmul.f32 %v1630, %v1808
        %v1817 = vrot.slane %v1809, 2
        %v1818 = vrot.slane %v1811, 2
        %v1819 = vsel %vm1001, %v1817, %v1818
        %v1820 = vrot.slane %v1810, 2
        %v1821 = vrot.slane %v1812, 2
        %v1822 = vsel %vm1001, %v1820, %v1821
        %v1827 = vadd.f32 %v1797, %v1819
        %v1828 = vadd.f32 %v1798, %v1822
        %v1829 = vadd.f32 %v1799, %v1818
        %v1830 = vadd.f32 %v1800, %v1821
        %1831 = vrot.lane.b32.xlu0 %v1453, 115
        %v1832 = vpop.permute.xlu0 %1831
        %1833 = vrot.lane.b32.xlu0 %v1458, 115
        %v1834 = vpop.permute.xlu0 %1833
        %v1837 = vsel %vm1483, %v1832, %v1592
        %v1838 = vsel %vm1483, %v1834, %v1594
        %1841 = vrot.lane.b32.xlu0 %v1837, 22
        %v1842 = vpop.permute.xlu0 %1841
        %1843 = vrot.lane.b32.xlu0 %v1838, 22
        %v1844 = vpop.permute.xlu0 %1843
        %v1847 = vsel %vm1494, %v1837, %v1842
        %v1848 = vsel %vm1494, %v1838, %v1844
        %1851 = vrot.lane.b32.xlu0 %v1847, 44
        %v1852 = vpop.permute.xlu0 %1851
        %1853 = vrot.lane.b32.xlu0 %v1848, 44
        %v1854 = vpop.permute.xlu0 %1853
        %v1857 = vsel %vm1505, %v1847, %v1852
        %v1858 = vsel %vm1505, %v1848, %v1854
        %1861 = vrot.lane.b32.xlu0 %v1857, 88
        %v1862 = vpop.permute.xlu0 %1861
        %1863 = vrot.lane.b32.xlu0 %v1858, 88
        %v1864 = vpop.permute.xlu0 %1863
        %v1867 = vsel %vm1516, %v1857, %v1862
        %v1868 = vsel %vm1516, %v1858, %v1864
        %v1869 = vlaneseq
        %v1870 = vshrl.u32 %v1869, 7
        %v1871 = vsub.s32 1, %v1870
        %v1872 = vrot.slane %v1463, %v1871
        %v1873 = vlaneseq
        %v1874 = vshrl.u32 %v1873, 7
        %v1875 = vsub.s32 1, %v1874
        %v1876 = vrot.slane %v1464, %v1875
        %v1877 = vmul.f32 %v1867, %v1872
        %v1878 = vmul.f32 %v1862, %v1876
        %v1879 = vmul.f32 %v1868, %v1872
        %v1880 = vmul.f32 %v1864, %v1876
        %v1881 = vadd.f32 %v1827, %v1877
        %v1882 = vadd.f32 %v1828, %v1878
        %v1883 = vadd.f32 %v1829, %v1879
        %v1884 = vadd.f32 %v1830, %v1880
        %1885 = vrot.lane.b32.xlu0 %v1453, 114
        %v1886 = vpop.permute.xlu0 %1885
        %1887 = vrot.lane.b32.xlu0 %v1458, 114
        %v1888 = vpop.permute.xlu0 %1887
        %1891 = vrot.lane.b32.xlu0 %v1453, 125
        %v1892 = vpop.permute.xlu0 %1891
        %1893 = vrot.lane.b32.xlu0 %v1458, 125
        %v1894 = vpop.permute.xlu0 %1893
        %v1897 = vsel %vm1483, %v1886, %v1892
        %v1898 = vsel %vm1483, %v1888, %v1894
        %1901 = vrot.lane.b32.xlu0 %v1897, 22
        %v1902 = vpop.permute.xlu0 %1901
        %1903 = vrot.lane.b32.xlu0 %v1898, 22
        %v1904 = vpop.permute.xlu0 %1903
        %v1907 = vsel %vm1494, %v1897, %v1902
        %v1908 = vsel %vm1494, %v1898, %v1904
        %1911 = vrot.lane.b32.xlu0 %v1907, 44
        %v1912 = vpop.permute.xlu0 %1911
        %1913 = vrot.lane.b32.xlu0 %v1908, 44
        %v1914 = vpop.permute.xlu0 %1913
        %v1917 = vsel %vm1505, %v1907, %v1912
        %v1918 = vsel %vm1505, %v1908, %v1914
        %1921 = vrot.lane.b32.xlu0 %v1917, 88
        %v1922 = vpop.permute.xlu0 %1921
        %1923 = vrot.lane.b32.xlu0 %v1918, 88
        %v1924 = vpop.permute.xlu0 %1923
        %v1927 = vsel %vm1516, %v1917, %v1922
        %v1928 = vsel %vm1516, %v1918, %v1924
        %v1929 = vlaneseq
        %v1930 = vshrl.u32 %v1929, 7
        %v1931 = vsub.s32 2, %v1930
        %v1932 = vrot.slane %v1463, %v1931
        %v1933 = vlaneseq
        %v1934 = vshrl.u32 %v1933, 7
        %v1935 = vsub.s32 2, %v1934
        %v1936 = vrot.slane %v1464, %v1935
        %v1937 = vmul.f32 %v1927, %v1932
        %v1938 = vmul.f32 %v1922, %v1936
        %v1939 = vmul.f32 %v1928, %v1932
        %v1940 = vmul.f32 %v1924, %v1936
        %v1941 = vadd.f32 %v1881, %v1937
        %v1942 = vadd.f32 %v1882, %v1938
        %v1943 = vadd.f32 %v1883, %v1939
        %v1944 = vadd.f32 %v1884, %v1940
        %1945 = vrot.lane.b32.xlu0 %v1453, 113
        %v1946 = vpop.permute.xlu0 %1945
        %1947 = vrot.lane.b32.xlu0 %v1458, 113
        %v1948 = vpop.permute.xlu0 %1947
        %1951 = vrot.lane.b32.xlu0 %v1453, 124
        %v1952 = vpop.permute.xlu0 %1951
        %1953 = vrot.lane.b32.xlu0 %v1458, 124
        %v1954 = vpop.permute.xlu0 %1953
        %v1957 = vsel %vm1483, %v1946, %v1952
        %v1958 = vsel %vm1483, %v1948, %v1954
        %1961 = vrot.lane.b32.xlu0 %v1957, 22
        %v1962 = vpop.permute.xlu0 %1961
        %1963 = vrot.lane.b32.xlu0 %v1958, 22
        %v1964 = vpop.permute.xlu0 %1963
        %v1967 = vsel %vm1494, %v1957, %v1962
        %v1968 = vsel %vm1494, %v1958, %v1964
        %1971 = vrot.lane.b32.xlu0 %v1967, 44
        %v1972 = vpop.permute.xlu0 %1971
        %1973 = vrot.lane.b32.xlu0 %v1968, 44
        %v1974 = vpop.permute.xlu0 %1973
        %v1977 = vsel %vm1505, %v1967, %v1972
        %v1978 = vsel %vm1505, %v1968, %v1974
        %1981 = vrot.lane.b32.xlu0 %v1977, 88
        %v1982 = vpop.permute.xlu0 %1981
        %1983 = vrot.lane.b32.xlu0 %v1978, 88
        %v1984 = vpop.permute.xlu0 %1983
        %v1987 = vsel %vm1516, %v1977, %v1982
        %v1988 = vsel %vm1516, %v1978, %v1984
        %v1989 = vlaneseq
        %v1990 = vshrl.u32 %v1989, 7
        %v1991 = vsub.s32 3, %v1990
        %v1992 = vrot.slane %v1463, %v1991
        %v1993 = vlaneseq
        %v1994 = vshrl.u32 %v1993, 7
        %v1995 = vsub.s32 3, %v1994
        %v1996 = vrot.slane %v1464, %v1995
        %v1997 = vmul.f32 %v1987, %v1992
        %v1998 = vmul.f32 %v1982, %v1996
        %v1999 = vmul.f32 %v1988, %v1992
        %v2000 = vmul.f32 %v1984, %v1996
        %v2001 = vadd.f32 %v1941, %v1997
        %v2002 = vadd.f32 %v1942, %v1998
        %v2003 = vadd.f32 %v1943, %v1999
        %v2004 = vadd.f32 %v1944, %v2000
        %v2005 = vlaneseq
        %v2006 = vshrl.u32 %v2005, 7
        %v2007 = vsub.s32 4, %v2006
        %v2008 = vrot.slane %v1463, %v2007
        %v2009 = vlaneseq
        %v2010 = vshrl.u32 %v2009, 7
        %v2011 = vsub.s32 4, %v2010
        %v2012 = vrot.slane %v1464, %v2011
        %v2013 = vmul.f32 %v1867, %v2008
        %v2014 = vmul.f32 %v1862, %v2012
        %v2015 = vmul.f32 %v1868, %v2008
        %v2016 = vmul.f32 %v1864, %v2012
        %v2021 = vrot.slane %v2013, 1
        %v2022 = vrot.slane %v2015, 1
        %v2023 = vsel %vm838, %v2021, %v2022
        %v2024 = vrot.slane %v2014, 1
        %v2025 = vrot.slane %v2016, 1
        %v2026 = vsel %vm838, %v2024, %v2025
        %v2031 = vadd.f32 %v2001, %v2023
        %v2032 = vadd.f32 %v2002, %v2026
        %v2033 = vadd.f32 %v2003, %v2022
        %v2034 = vadd.f32 %v2004, %v2025
        %v2035 = vlaneseq
        %v2036 = vshrl.u32 %v2035, 7
        %v2037 = vsub.s32 5, %v2036
        %v2038 = vrot.slane %v1463, %v2037
        %v2039 = vlaneseq
        %v2040 = vshrl.u32 %v2039, 7
        %v2041 = vsub.s32 5, %v2040
        %v2042 = vrot.slane %v1464, %v2041
        %v2043 = vmul.f32 %v1927, %v2038
        %v2044 = vmul.f32 %v1922, %v2042
        %v2045 = vmul.f32 %v1928, %v2038
        %v2046 = vmul.f32 %v1924, %v2042
        %v2051 = vrot.slane %v2043, 1
        %v2052 = vrot.slane %v2045, 1
        %v2053 = vsel %vm838, %v2051, %v2052
        %v2054 = vrot.slane %v2044, 1
        %v2055 = vrot.slane %v2046, 1
        %v2056 = vsel %vm838, %v2054, %v2055
        %v2061 = vadd.f32 %v2031, %v2053
        %v2062 = vadd.f32 %v2032, %v2056
        %v2063 = vadd.f32 %v2033, %v2052
        %v2064 = vadd.f32 %v2034, %v2055
        %v2065 = vlaneseq
        %v2066 = vshrl.u32 %v2065, 7
        %v2067 = vsub.s32 6, %v2066
        %v2068 = vrot.slane %v1463, %v2067
        %v2069 = vlaneseq
        %v2070 = vshrl.u32 %v2069, 7
        %v2071 = vsub.s32 6, %v2070
        %v2072 = vrot.slane %v1464, %v2071
        %v2073 = vmul.f32 %v1987, %v2068
        %v2074 = vmul.f32 %v1982, %v2072
        %v2075 = vmul.f32 %v1988, %v2068
        %v2076 = vmul.f32 %v1984, %v2072
        %v2081 = vrot.slane %v2073, 1
        %v2082 = vrot.slane %v2075, 1
        %v2083 = vsel %vm838, %v2081, %v2082
        %v2084 = vrot.slane %v2074, 1
        %v2085 = vrot.slane %v2076, 1
        %v2086 = vsel %vm838, %v2084, %v2085
        %v2091 = vadd.f32 %v2061, %v2083
        %v2092 = vadd.f32 %v2062, %v2086
        %v2093 = vadd.f32 %v2063, %v2082
        %v2094 = vadd.f32 %v2064, %v2085
        %v2095 = vlaneseq
        %v2096 = vshrl.u32 %v2095, 7
        %v2097 = vsub.s32 7, %v2096
        %v2098 = vrot.slane %v1463, %v2097
        %v2099 = vlaneseq
        %v2100 = vshrl.u32 %v2099, 7
        %v2101 = vsub.s32 7, %v2100
        %v2102 = vrot.slane %v1464, %v2101
        %v2103 = vmul.f32 %v1867, %v2098
        %v2104 = vmul.f32 %v1862, %v2102
        %v2105 = vmul.f32 %v1868, %v2098
        %v2106 = vmul.f32 %v1864, %v2102
        %v2111 = vrot.slane %v2103, 2
        %v2112 = vrot.slane %v2105, 2
        %v2113 = vsel %vm1001, %v2111, %v2112
        %v2114 = vrot.slane %v2104, 2
        %v2115 = vrot.slane %v2106, 2
        %v2116 = vsel %vm1001, %v2114, %v2115
        %v2121 = vadd.f32 %v2091, %v2113
        %v2122 = vadd.f32 %v2092, %v2116
        %v2123 = vadd.f32 %v2093, %v2112
        %v2124 = vadd.f32 %v2094, %v2115
        %v2125 = vlaneseq
        %v2126 = vshrl.u32 %v2125, 7
        %v2127 = vsub.s32 0, %v2126
        %v2128 = vrot.slane %v1465, %v2127
        %v2129 = vlaneseq
        %v2130 = vshrl.u32 %v2129, 7
        %v2131 = vsub.s32 0, %v2130
        %v2132 = vrot.slane %v1466, %v2131
        %v2133 = vmul.f32 %v1927, %v2128
        %v2134 = vmul.f32 %v1922, %v2132
        %v2135 = vmul.f32 %v1928, %v2128
        %v2136 = vmul.f32 %v1924, %v2132
        %v2141 = vrot.slane %v2133, 2
        %v2142 = vrot.slane %v2135, 2
        %v2143 = vsel %vm1001, %v2141, %v2142
        %v2144 = vrot.slane %v2134, 2
        %v2145 = vrot.slane %v2136, 2
        %v2146 = vsel %vm1001, %v2144, %v2145
        %v2151 = vadd.f32 %v2121, %v2143
        %v2152 = vadd.f32 %v2122, %v2146
        %v2153 = vadd.f32 %v2123, %v2142
        %v2154 = vadd.f32 %v2124, %v2145
        %v2155 = vlaneseq
        %v2156 = vshrl.u32 %v2155, 7
        %v2157 = vsub.s32 1, %v2156
        %v2158 = vrot.slane %v1465, %v2157
        %v2159 = vlaneseq
        %v2160 = vshrl.u32 %v2159, 7
        %v2161 = vsub.s32 1, %v2160
        %v2162 = vrot.slane %v1466, %v2161
        %v2163 = vmul.f32 %v1987, %v2158
        %v2164 = vmul.f32 %v1982, %v2162
        %v2165 = vmul.f32 %v1988, %v2158
        %v2166 = vmul.f32 %v1984, %v2162
        %v2171 = vrot.slane %v2163, 2
        %v2172 = vrot.slane %v2165, 2
        %v2173 = vsel %vm1001, %v2171, %v2172
        %v2174 = vrot.slane %v2164, 2
        %v2175 = vrot.slane %v2166, 2
        %v2176 = vsel %vm1001, %v2174, %v2175
        %v2181 = vadd.f32 %v2151, %v2173
        %v2182 = vadd.f32 %v2152, %v2176
        %v2183 = vadd.f32 %v2153, %v2172
        %v2184 = vadd.f32 %v2154, %v2175
        %2185 = vrot.lane.b32.xlu0 %v1453, 102
        %v2186 = vpop.permute.xlu0 %2185
        %2187 = vrot.lane.b32.xlu0 %v1458, 102
        %v2188 = vpop.permute.xlu0 %2187
        %v2191 = vsel %vm1483, %v2186, %v1946
        %v2192 = vsel %vm1483, %v2188, %v1948
        %2195 = vrot.lane.b32.xlu0 %v2191, 22
        %v2196 = vpop.permute.xlu0 %2195
        %2197 = vrot.lane.b32.xlu0 %v2192, 22
        %v2198 = vpop.permute.xlu0 %2197
        %v2201 = vsel %vm1494, %v2191, %v2196
        %v2202 = vsel %vm1494, %v2192, %v2198
        %2205 = vrot.lane.b32.xlu0 %v2201, 44
        %v2206 = vpop.permute.xlu0 %2205
        %2207 = vrot.lane.b32.xlu0 %v2202, 44
        %v2208 = vpop.permute.xlu0 %2207
        %v2211 = vsel %vm1505, %v2201, %v2206
        %v2212 = vsel %vm1505, %v2202, %v2208
        %2215 = vrot.lane.b32.xlu0 %v2211, 88
        %v2216 = vpop.permute.xlu0 %2215
        %2217 = vrot.lane.b32.xlu0 %v2212, 88
        %v2218 = vpop.permute.xlu0 %2217
        %v2221 = vsel %vm1516, %v2211, %v2216
        %v2222 = vsel %vm1516, %v2212, %v2218
        %v2223 = vlaneseq
        %v2224 = vshrl.u32 %v2223, 7
        %v2225 = vsub.s32 2, %v2224
        %v2226 = vrot.slane %v1465, %v2225
        %v2227 = vlaneseq
        %v2228 = vshrl.u32 %v2227, 7
        %v2229 = vsub.s32 2, %v2228
        %v2230 = vrot.slane %v1466, %v2229
        %v2231 = vmul.f32 %v2221, %v2226
        %v2232 = vmul.f32 %v2216, %v2230
        %v2233 = vmul.f32 %v2222, %v2226
        %v2234 = vmul.f32 %v2218, %v2230
        %v2235 = vadd.f32 %v2181, %v2231
        %v2236 = vadd.f32 %v2182, %v2232
        %v2237 = vadd.f32 %v2183, %v2233
        %v2238 = vadd.f32 %v2184, %v2234
        %2239 = vrot.lane.b32.xlu0 %v1453, 101
        %v2240 = vpop.permute.xlu0 %2239
        %2241 = vrot.lane.b32.xlu0 %v1458, 101
        %v2242 = vpop.permute.xlu0 %2241
        %2245 = vrot.lane.b32.xlu0 %v1453, 112
        %v2246 = vpop.permute.xlu0 %2245
        %2247 = vrot.lane.b32.xlu0 %v1458, 112
        %v2248 = vpop.permute.xlu0 %2247
        %v2251 = vsel %vm1483, %v2240, %v2246
        %v2252 = vsel %vm1483, %v2242, %v2248
        %2255 = vrot.lane.b32.xlu0 %v2251, 22
        %v2256 = vpop.permute.xlu0 %2255
        %2257 = vrot.lane.b32.xlu0 %v2252, 22
        %v2258 = vpop.permute.xlu0 %2257
        %v2261 = vsel %vm1494, %v2251, %v2256
        %v2262 = vsel %vm1494, %v2252, %v2258
        %2265 = vrot.lane.b32.xlu0 %v2261, 44
        %v2266 = vpop.permute.xlu0 %2265
        %2267 = vrot.lane.b32.xlu0 %v2262, 44
        %v2268 = vpop.permute.xlu0 %2267
        %v2271 = vsel %vm1505, %v2261, %v2266
        %v2272 = vsel %vm1505, %v2262, %v2268
        %2275 = vrot.lane.b32.xlu0 %v2271, 88
        %v2276 = vpop.permute.xlu0 %2275
        %2277 = vrot.lane.b32.xlu0 %v2272, 88
        %v2278 = vpop.permute.xlu0 %2277
        %v2281 = vsel %vm1516, %v2271, %v2276
        %v2282 = vsel %vm1516, %v2272, %v2278
        %v2283 = vlaneseq
        %v2284 = vshrl.u32 %v2283, 7
        %v2285 = vsub.s32 3, %v2284
        %v2286 = vrot.slane %v1465, %v2285
        %v2287 = vlaneseq
        %v2288 = vshrl.u32 %v2287, 7
        %v2289 = vsub.s32 3, %v2288
        %v2290 = vrot.slane %v1466, %v2289
        %v2291 = vmul.f32 %v2281, %v2286
        %v2292 = vmul.f32 %v2276, %v2290
        %v2293 = vmul.f32 %v2282, %v2286
        %v2294 = vmul.f32 %v2278, %v2290
        %v2295 = vadd.f32 %v2235, %v2291
        %v2296 = vadd.f32 %v2236, %v2292
        %v2297 = vadd.f32 %v2237, %v2293
        %v2298 = vadd.f32 %v2238, %v2294
        %2299 = vrot.lane.b32.xlu0 %v1453, 100
        %v2300 = vpop.permute.xlu0 %2299
        %2301 = vrot.lane.b32.xlu0 %v1458, 100
        %v2302 = vpop.permute.xlu0 %2301
        %2305 = vrot.lane.b32.xlu0 %v1453, 111
        %v2306 = vpop.permute.xlu0 %2305
        %2307 = vrot.lane.b32.xlu0 %v1458, 111
        %v2308 = vpop.permute.xlu0 %2307
        %v2311 = vsel %vm1483, %v2300, %v2306
        %v2312 = vsel %vm1483, %v2302, %v2308
        %2315 = vrot.lane.b32.xlu0 %v2311, 22
        %v2316 = vpop.permute.xlu0 %2315
        %2317 = vrot.lane.b32.xlu0 %v2312, 22
        %v2318 = vpop.permute.xlu0 %2317
        %v2321 = vsel %vm1494, %v2311, %v2316
        %v2322 = vsel %vm1494, %v2312, %v2318
        %2325 = vrot.lane.b32.xlu0 %v2321, 44
        %v2326 = vpop.permute.xlu0 %2325
        %2327 = vrot.lane.b32.xlu0 %v2322, 44
        %v2328 = vpop.permute.xlu0 %2327
        %v2331 = vsel %vm1505, %v2321, %v2326
        %v2332 = vsel %vm1505, %v2322, %v2328
        %2335 = vrot.lane.b32.xlu0 %v2331, 88
        %v2336 = vpop.permute.xlu0 %2335
        %2337 = vrot.lane.b32.xlu0 %v2332, 88
        %v2338 = vpop.permute.xlu0 %2337
        %v2341 = vsel %vm1516, %v2331, %v2336
        %v2342 = vsel %vm1516, %v2332, %v2338
        %v2343 = vlaneseq
        %v2344 = vshrl.u32 %v2343, 7
        %v2345 = vsub.s32 4, %v2344
        %v2346 = vrot.slane %v1465, %v2345
        %v2347 = vlaneseq
        %v2348 = vshrl.u32 %v2347, 7
        %v2349 = vsub.s32 4, %v2348
        %v2350 = vrot.slane %v1466, %v2349
        %v2351 = vmul.f32 %v2341, %v2346
        %v2352 = vmul.f32 %v2336, %v2350
        %v2353 = vmul.f32 %v2342, %v2346
        %v2354 = vmul.f32 %v2338, %v2350
        %v2355 = vadd.f32 %v2295, %v2351
        %v2356 = vadd.f32 %v2296, %v2352
        %v2357 = vadd.f32 %v2297, %v2353
        %v2358 = vadd.f32 %v2298, %v2354
        %v2359 = vlaneseq
        %v2360 = vshrl.u32 %v2359, 7
        %v2361 = vsub.s32 5, %v2360
        %v2362 = vrot.slane %v1465, %v2361
        %v2363 = vlaneseq
        %v2364 = vshrl.u32 %v2363, 7
        %v2365 = vsub.s32 5, %v2364
        %v2366 = vrot.slane %v1466, %v2365
        %v2367 = vmul.f32 %v2221, %v2362
        %v2368 = vmul.f32 %v2216, %v2366
        %v2369 = vmul.f32 %v2222, %v2362
        %v2370 = vmul.f32 %v2218, %v2366
        %v2375 = vrot.slane %v2367, 1
        %v2376 = vrot.slane %v2369, 1
        %v2377 = vsel %vm838, %v2375, %v2376
        %v2378 = vrot.slane %v2368, 1
        %v2379 = vrot.slane %v2370, 1
        %v2380 = vsel %vm838, %v2378, %v2379
        %v2385 = vadd.f32 %v2355, %v2377
        %v2386 = vadd.f32 %v2356, %v2380
        %v2387 = vadd.f32 %v2357, %v2376
        %v2388 = vadd.f32 %v2358, %v2379
        %v2389 = vlaneseq
        %v2390 = vshrl.u32 %v2389, 7
        %v2391 = vsub.s32 6, %v2390
        %v2392 = vrot.slane %v1465, %v2391
        %v2393 = vlaneseq
        %v2394 = vshrl.u32 %v2393, 7
        %v2395 = vsub.s32 6, %v2394
        %v2396 = vrot.slane %v1466, %v2395
        %v2397 = vmul.f32 %v2281, %v2392
        %v2398 = vmul.f32 %v2276, %v2396
        %v2399 = vmul.f32 %v2282, %v2392
        %v2400 = vmul.f32 %v2278, %v2396
        %v2405 = vrot.slane %v2397, 1
        %v2406 = vrot.slane %v2399, 1
        %v2407 = vsel %vm838, %v2405, %v2406
        %v2408 = vrot.slane %v2398, 1
        %v2409 = vrot.slane %v2400, 1
        %v2410 = vsel %vm838, %v2408, %v2409
        %v2415 = vadd.f32 %v2385, %v2407
        %v2416 = vadd.f32 %v2386, %v2410
        %v2417 = vadd.f32 %v2387, %v2406
        %v2418 = vadd.f32 %v2388, %v2409
        %v2419 = vlaneseq
        %v2420 = vshrl.u32 %v2419, 7
        %v2421 = vsub.s32 7, %v2420
        %v2422 = vrot.slane %v1465, %v2421
        %v2423 = vlaneseq
        %v2424 = vshrl.u32 %v2423, 7
        %v2425 = vsub.s32 7, %v2424
        %v2426 = vrot.slane %v1466, %v2425
        %v2427 = vmul.f32 %v2341, %v2422
        %v2428 = vmul.f32 %v2336, %v2426
        %v2429 = vmul.f32 %v2342, %v2422
        %v2430 = vmul.f32 %v2338, %v2426
        %v2435 = vrot.slane %v2427, 1
        %v2436 = vrot.slane %v2429, 1
        %v2437 = vsel %vm838, %v2435, %v2436
        %v2438 = vrot.slane %v2428, 1
        %v2439 = vrot.slane %v2430, 1
        %v2440 = vsel %vm838, %v2438, %v2439
        %v2445 = vadd.f32 %v2415, %v2437
        %v2446 = vadd.f32 %v2416, %v2440
        %v2447 = vadd.f32 %v2417, %v2436
        %v2448 = vadd.f32 %v2418, %v2439
        %v2449 = vlaneseq
        %v2450 = vshrl.u32 %v2449, 7
        %v2451 = vsub.s32 0, %v2450
        %v2452 = vrot.slane %v1467, %v2451
        %v2453 = vlaneseq
        %v2454 = vshrl.u32 %v2453, 7
        %v2455 = vsub.s32 0, %v2454
        %v2456 = vrot.slane %v1468, %v2455
        %v2457 = vmul.f32 %v2221, %v2452
        %v2458 = vmul.f32 %v2216, %v2456
        %v2459 = vmul.f32 %v2222, %v2452
        %v2460 = vmul.f32 %v2218, %v2456
        %v2465 = vrot.slane %v2457, 2
        %v2466 = vrot.slane %v2459, 2
        %v2467 = vsel %vm1001, %v2465, %v2466
        %v2468 = vrot.slane %v2458, 2
        %v2469 = vrot.slane %v2460, 2
        %v2470 = vsel %vm1001, %v2468, %v2469
        %v2475 = vadd.f32 %v2445, %v2467
        %v2476 = vadd.f32 %v2446, %v2470
        %v2477 = vadd.f32 %v2447, %v2466
        %v2478 = vadd.f32 %v2448, %v2469
        %v2479 = vlaneseq
        %v2480 = vshrl.u32 %v2479, 7
        %v2481 = vsub.s32 1, %v2480
        %v2482 = vrot.slane %v1467, %v2481
        %v2483 = vlaneseq
        %v2484 = vshrl.u32 %v2483, 7
        %v2485 = vsub.s32 1, %v2484
        %v2486 = vrot.slane %v1468, %v2485
        %v2487 = vmul.f32 %v2281, %v2482
        %v2488 = vmul.f32 %v2276, %v2486
        %v2489 = vmul.f32 %v2282, %v2482
        %v2490 = vmul.f32 %v2278, %v2486
        %v2495 = vrot.slane %v2487, 2
        %v2496 = vrot.slane %v2489, 2
        %v2497 = vsel %vm1001, %v2495, %v2496
        %v2498 = vrot.slane %v2488, 2
        %v2499 = vrot.slane %v2490, 2
        %v2500 = vsel %vm1001, %v2498, %v2499
        %v2505 = vadd.f32 %v2475, %v2497
        %v2506 = vadd.f32 %v2476, %v2500
        %v2507 = vadd.f32 %v2477, %v2496
        %v2508 = vadd.f32 %v2478, %v2499
        %v2509 = vlaneseq
        %v2510 = vshrl.u32 %v2509, 7
        %v2511 = vsub.s32 2, %v2510
        %v2512 = vrot.slane %v1467, %v2511
        %v2513 = vlaneseq
        %v2514 = vshrl.u32 %v2513, 7
        %v2515 = vsub.s32 2, %v2514
        %v2516 = vrot.slane %v1468, %v2515
        %v2517 = vmul.f32 %v2341, %v2512
        %v2518 = vmul.f32 %v2336, %v2516
        %v2519 = vmul.f32 %v2342, %v2512
        %v2520 = vmul.f32 %v2338, %v2516
        %v2525 = vrot.slane %v2517, 2
        %v2526 = vrot.slane %v2519, 2
        %v2527 = vsel %vm1001, %v2525, %v2526
        %v2528 = vrot.slane %v2518, 2
        %v2529 = vrot.slane %v2520, 2
        %v2530 = vsel %vm1001, %v2528, %v2529
        %v2535 = vadd.f32 %v2505, %v2527
        %v2536 = vadd.f32 %v2506, %v2530
        %v2537 = vadd.f32 %v2507, %v2526
        %v2538 = vadd.f32 %v2508, %v2529
        %2539 = vrot.lane.b32.xlu0 %v1453, 89
        %v2540 = vpop.permute.xlu0 %2539
        %2541 = vrot.lane.b32.xlu0 %v1458, 89
        %v2542 = vpop.permute.xlu0 %2541
        %v2545 = vsel %vm1483, %v2540, %v2300
        %v2546 = vsel %vm1483, %v2542, %v2302
        %2549 = vrot.lane.b32.xlu0 %v2545, 22
        %v2550 = vpop.permute.xlu0 %2549
        %2551 = vrot.lane.b32.xlu0 %v2546, 22
        %v2552 = vpop.permute.xlu0 %2551
        %v2555 = vsel %vm1494, %v2545, %v2550
        %v2556 = vsel %vm1494, %v2546, %v2552
        %2559 = vrot.lane.b32.xlu0 %v2555, 44
        %v2560 = vpop.permute.xlu0 %2559
        %2561 = vrot.lane.b32.xlu0 %v2556, 44
        %v2562 = vpop.permute.xlu0 %2561
        %v2565 = vsel %vm1505, %v2555, %v2560
        %v2566 = vsel %vm1505, %v2556, %v2562
        %2569 = vrot.lane.b32.xlu0 %v2565, 88
        %v2570 = vpop.permute.xlu0 %2569
        %2571 = vrot.lane.b32.xlu0 %v2566, 88
        %v2572 = vpop.permute.xlu0 %2571
        %v2575 = vsel %vm1516, %v2565, %v2570
        %v2576 = vsel %vm1516, %v2566, %v2572
        %v2577 = vlaneseq
        %v2578 = vshrl.u32 %v2577, 7
        %v2579 = vsub.s32 3, %v2578
        %v2580 = vrot.slane %v1467, %v2579
        %v2581 = vlaneseq
        %v2582 = vshrl.u32 %v2581, 7
        %v2583 = vsub.s32 3, %v2582
        %v2584 = vrot.slane %v1468, %v2583
        %v2585 = vmul.f32 %v2575, %v2580
        %v2586 = vmul.f32 %v2570, %v2584
        %v2587 = vmul.f32 %v2576, %v2580
        %v2588 = vmul.f32 %v2572, %v2584
        %v2589 = vadd.f32 %v2535, %v2585
        %v2590 = vadd.f32 %v2536, %v2586
        %v2591 = vadd.f32 %v2537, %v2587
        %v2592 = vadd.f32 %v2538, %v2588
        %2593 = vrot.lane.b32.xlu0 %v1453, 88
        %v2594 = vpop.permute.xlu0 %2593
        %2595 = vrot.lane.b32.xlu0 %v1458, 88
        %v2596 = vpop.permute.xlu0 %2595
        %2599 = vrot.lane.b32.xlu0 %v1453, 99
        %v2600 = vpop.permute.xlu0 %2599
        %2601 = vrot.lane.b32.xlu0 %v1458, 99
        %v2602 = vpop.permute.xlu0 %2601
        %v2605 = vsel %vm1483, %v2594, %v2600
        %v2606 = vsel %vm1483, %v2596, %v2602
        %2609 = vrot.lane.b32.xlu0 %v2605, 22
        %v2610 = vpop.permute.xlu0 %2609
        %2611 = vrot.lane.b32.xlu0 %v2606, 22
        %v2612 = vpop.permute.xlu0 %2611
        %v2615 = vsel %vm1494, %v2605, %v2610
        %v2616 = vsel %vm1494, %v2606, %v2612
        %2619 = vrot.lane.b32.xlu0 %v2615, 44
        %v2620 = vpop.permute.xlu0 %2619
        %2621 = vrot.lane.b32.xlu0 %v2616, 44
        %v2622 = vpop.permute.xlu0 %2621
        %v2625 = vsel %vm1505, %v2615, %v2620
        %v2626 = vsel %vm1505, %v2616, %v2622
        %2629 = vrot.lane.b32.xlu0 %v2625, 88
        %v2630 = vpop.permute.xlu0 %2629
        %2631 = vrot.lane.b32.xlu0 %v2626, 88
        %v2632 = vpop.permute.xlu0 %2631
        %v2635 = vsel %vm1516, %v2625, %v2630
        %v2636 = vsel %vm1516, %v2626, %v2632
        %v2637 = vlaneseq
        %v2638 = vshrl.u32 %v2637, 7
        %v2639 = vsub.s32 4, %v2638
        %v2640 = vrot.slane %v1467, %v2639
        %v2641 = vlaneseq
        %v2642 = vshrl.u32 %v2641, 7
        %v2643 = vsub.s32 4, %v2642
        %v2644 = vrot.slane %v1468, %v2643
        %v2645 = vmul.f32 %v2635, %v2640
        %v2646 = vmul.f32 %v2630, %v2644
        %v2647 = vmul.f32 %v2636, %v2640
        %v2648 = vmul.f32 %v2632, %v2644
        %v2649 = vadd.f32 %v2589, %v2645
        %v2650 = vadd.f32 %v2590, %v2646
        %v2651 = vadd.f32 %v2591, %v2647
        %v2652 = vadd.f32 %v2592, %v2648
        %2653 = vrot.lane.b32.xlu0 %v1453, 87
        %v2654 = vpop.permute.xlu0 %2653
        %2655 = vrot.lane.b32.xlu0 %v1458, 87
        %v2656 = vpop.permute.xlu0 %2655
        %2659 = vrot.lane.b32.xlu0 %v1453, 98
        %v2660 = vpop.permute.xlu0 %2659
        %2661 = vrot.lane.b32.xlu0 %v1458, 98
        %v2662 = vpop.permute.xlu0 %2661
        %v2665 = vsel %vm1483, %v2654, %v2660
        %v2666 = vsel %vm1483, %v2656, %v2662
        %2669 = vrot.lane.b32.xlu0 %v2665, 22
        %v2670 = vpop.permute.xlu0 %2669
        %2671 = vrot.lane.b32.xlu0 %v2666, 22
        %v2672 = vpop.permute.xlu0 %2671
        %v2675 = vsel %vm1494, %v2665, %v2670
        %v2676 = vsel %vm1494, %v2666, %v2672
        %2679 = vrot.lane.b32.xlu0 %v2675, 44
        %v2680 = vpop.permute.xlu0 %2679
        %2681 = vrot.lane.b32.xlu0 %v2676, 44
        %v2682 = vpop.permute.xlu0 %2681
        %v2685 = vsel %vm1505, %v2675, %v2680
        %v2686 = vsel %vm1505, %v2676, %v2682
        %2689 = vrot.lane.b32.xlu0 %v2685, 88
        %v2690 = vpop.permute.xlu0 %2689
        %2691 = vrot.lane.b32.xlu0 %v2686, 88
        %v2692 = vpop.permute.xlu0 %2691
        %v2695 = vsel %vm1516, %v2685, %v2690
        %v2696 = vsel %vm1516, %v2686, %v2692
        %v2697 = vlaneseq
        %v2698 = vshrl.u32 %v2697, 7
        %v2699 = vsub.s32 5, %v2698
        %v2700 = vrot.slane %v1467, %v2699
        %v2701 = vlaneseq
        %v2702 = vshrl.u32 %v2701, 7
        %v2703 = vsub.s32 5, %v2702
        %v2704 = vrot.slane %v1468, %v2703
        %v2705 = vmul.f32 %v2695, %v2700
        %v2706 = vmul.f32 %v2690, %v2704
        %v2707 = vmul.f32 %v2696, %v2700
        %v2708 = vmul.f32 %v2692, %v2704
        %v2709 = vadd.f32 %v2649, %v2705
        %v2710 = vadd.f32 %v2650, %v2706
        %v2711 = vadd.f32 %v2651, %v2707
        %v2712 = vadd.f32 %v2652, %v2708
        %v2713 = vlaneseq
        %v2714 = vshrl.u32 %v2713, 7
        %v2715 = vsub.s32 6, %v2714
        %v2716 = vrot.slane %v1467, %v2715
        %v2717 = vlaneseq
        %v2718 = vshrl.u32 %v2717, 7
        %v2719 = vsub.s32 6, %v2718
        %v2720 = vrot.slane %v1468, %v2719
        %v2721 = vmul.f32 %v2575, %v2716
        %v2722 = vmul.f32 %v2570, %v2720
        %v2723 = vmul.f32 %v2576, %v2716
        %v2724 = vmul.f32 %v2572, %v2720
        %v2729 = vrot.slane %v2721, 1
        %v2730 = vrot.slane %v2723, 1
        %v2731 = vsel %vm838, %v2729, %v2730
        %v2732 = vrot.slane %v2722, 1
        %v2733 = vrot.slane %v2724, 1
        %v2734 = vsel %vm838, %v2732, %v2733
        %v2739 = vadd.f32 %v2709, %v2731
        %v2740 = vadd.f32 %v2710, %v2734
        %v2741 = vadd.f32 %v2711, %v2730
        %v2742 = vadd.f32 %v2712, %v2733
        %v2743 = vlaneseq
        %v2744 = vshrl.u32 %v2743, 7
        %v2745 = vsub.s32 7, %v2744
        %v2746 = vrot.slane %v1467, %v2745
        %v2747 = vlaneseq
        %v2748 = vshrl.u32 %v2747, 7
        %v2749 = vsub.s32 7, %v2748
        %v2750 = vrot.slane %v1468, %v2749
        %v2751 = vmul.f32 %v2635, %v2746
        %v2752 = vmul.f32 %v2630, %v2750
        %v2753 = vmul.f32 %v2636, %v2746
        %v2754 = vmul.f32 %v2632, %v2750
        %v2759 = vrot.slane %v2751, 1
        %v2760 = vrot.slane %v2753, 1
        %v2761 = vsel %vm838, %v2759, %v2760
        %v2762 = vrot.slane %v2752, 1
        %v2763 = vrot.slane %v2754, 1
        %v2764 = vsel %vm838, %v2762, %v2763
        %v2769 = vadd.f32 %v2739, %v2761
        %v2770 = vadd.f32 %v2740, %v2764
        %v2771 = vadd.f32 %v2741, %v2760
        %v2772 = vadd.f32 %v2742, %v2763
        %v2773 = vlaneseq
        %v2774 = vshrl.u32 %v2773, 7
        %v2775 = vsub.s32 0, %v2774
        %v2776 = vrot.slane %v1469, %v2775
        %v2777 = vlaneseq
        %v2778 = vshrl.u32 %v2777, 7
        %v2779 = vsub.s32 0, %v2778
        %v2780 = vrot.slane %v1470, %v2779
        %v2781 = vmul.f32 %v2695, %v2776
        %v2782 = vmul.f32 %v2690, %v2780
        %v2783 = vmul.f32 %v2696, %v2776
        %v2784 = vmul.f32 %v2692, %v2780
        %v2789 = vrot.slane %v2781, 1
        %v2790 = vrot.slane %v2783, 1
        %v2791 = vsel %vm838, %v2789, %v2790
        %v2792 = vrot.slane %v2782, 1
        %v2793 = vrot.slane %v2784, 1
        %v2794 = vsel %vm838, %v2792, %v2793
        %v2799 = vadd.f32 %v2769, %v2791
        %v2800 = vadd.f32 %v2770, %v2794
        %v2801 = vadd.f32 %v2771, %v2790
        %v2802 = vadd.f32 %v2772, %v2793
        %v2803 = vlaneseq
        %v2804 = vshrl.u32 %v2803, 7
        %v2805 = vsub.s32 1, %v2804
        %v2806 = vrot.slane %v1469, %v2805
        %v2807 = vlaneseq
        %v2808 = vshrl.u32 %v2807, 7
        %v2809 = vsub.s32 1, %v2808
        %v2810 = vrot.slane %v1470, %v2809
        %v2811 = vmul.f32 %v2575, %v2806
        %v2812 = vmul.f32 %v2570, %v2810
        %v2813 = vmul.f32 %v2576, %v2806
        %v2814 = vmul.f32 %v2572, %v2810
        %v2819 = vrot.slane %v2811, 2
        %v2820 = vrot.slane %v2813, 2
        %v2821 = vsel %vm1001, %v2819, %v2820
        %v2822 = vrot.slane %v2812, 2
        %v2823 = vrot.slane %v2814, 2
        %v2824 = vsel %vm1001, %v2822, %v2823
        %v2829 = vadd.f32 %v2799, %v2821
        %v2830 = vadd.f32 %v2800, %v2824
        %v2831 = vadd.f32 %v2801, %v2820
        %v2832 = vadd.f32 %v2802, %v2823
        %v2833 = vlaneseq
        %v2834 = vshrl.u32 %v2833, 7
        %v2835 = vsub.s32 2, %v2834
        %v2836 = vrot.slane %v1469, %v2835
        %v2837 = vlaneseq
        %v2838 = vshrl.u32 %v2837, 7
        %v2839 = vsub.s32 2, %v2838
        %v2840 = vrot.slane %v1470, %v2839
        %v2841 = vmul.f32 %v2635, %v2836
        %v2842 = vmul.f32 %v2630, %v2840
        %v2843 = vmul.f32 %v2636, %v2836
        %v2844 = vmul.f32 %v2632, %v2840
        %v2849 = vrot.slane %v2841, 2
        %v2850 = vrot.slane %v2843, 2
        %v2851 = vsel %vm1001, %v2849, %v2850
        %v2852 = vrot.slane %v2842, 2
        %v2853 = vrot.slane %v2844, 2
        %v2854 = vsel %vm1001, %v2852, %v2853
        %v2859 = vadd.f32 %v2829, %v2851
        %v2860 = vadd.f32 %v2830, %v2854
        %v2861 = vadd.f32 %v2831, %v2850
        %v2862 = vadd.f32 %v2832, %v2853
        %v2863 = vlaneseq
        %v2864 = vshrl.u32 %v2863, 7
        %v2865 = vsub.s32 3, %v2864
        %v2866 = vrot.slane %v1469, %v2865
        %v2867 = vlaneseq
        %v2868 = vshrl.u32 %v2867, 7
        %v2869 = vsub.s32 3, %v2868
        %v2870 = vrot.slane %v1470, %v2869
        %v2871 = vmul.f32 %v2695, %v2866
        %v2872 = vmul.f32 %v2690, %v2870
        %v2873 = vmul.f32 %v2696, %v2866
        %v2874 = vmul.f32 %v2692, %v2870
        %v2879 = vrot.slane %v2871, 2
        %v2880 = vrot.slane %v2873, 2
        %v2881 = vsel %vm1001, %v2879, %v2880
        %v2882 = vrot.slane %v2872, 2
        %v2883 = vrot.slane %v2874, 2
        %v2884 = vsel %vm1001, %v2882, %v2883
        %v2889 = vadd.f32 %v2859, %v2881
        %v2890 = vadd.f32 %v2860, %v2884
        %v2891 = vadd.f32 %v2861, %v2880
        %v2892 = vadd.f32 %v2862, %v2883
        %2893 = vrot.lane.b32.xlu0 %v1453, 76
        %v2894 = vpop.permute.xlu0 %2893
        %2895 = vrot.lane.b32.xlu0 %v1458, 76
        %v2896 = vpop.permute.xlu0 %2895
        %v2899 = vsel %vm1483, %v2894, %v2654
        %v2900 = vsel %vm1483, %v2896, %v2656
        %2903 = vrot.lane.b32.xlu0 %v2899, 22
        %v2904 = vpop.permute.xlu0 %2903
        %2905 = vrot.lane.b32.xlu0 %v2900, 22
        %v2906 = vpop.permute.xlu0 %2905
        %v2909 = vsel %vm1494, %v2899, %v2904
        %v2910 = vsel %vm1494, %v2900, %v2906
        %2913 = vrot.lane.b32.xlu0 %v2909, 44
        %v2914 = vpop.permute.xlu0 %2913
        %2915 = vrot.lane.b32.xlu0 %v2910, 44
        %v2916 = vpop.permute.xlu0 %2915
        %v2919 = vsel %vm1505, %v2909, %v2914
        %v2920 = vsel %vm1505, %v2910, %v2916
        %2923 = vrot.lane.b32.xlu0 %v2919, 88
        %v2924 = vpop.permute.xlu0 %2923
        %2925 = vrot.lane.b32.xlu0 %v2920, 88
        %v2926 = vpop.permute.xlu0 %2925
        %v2929 = vsel %vm1516, %v2919, %v2924
        %v2930 = vsel %vm1516, %v2920, %v2926
        %v2931 = vlaneseq
        %v2932 = vshrl.u32 %v2931, 7
        %v2933 = vsub.s32 4, %v2932
        %v2934 = vrot.slane %v1469, %v2933
        %v2935 = vlaneseq
        %v2936 = vshrl.u32 %v2935, 7
        %v2937 = vsub.s32 4, %v2936
        %v2938 = vrot.slane %v1470, %v2937
        %v2939 = vmul.f32 %v2929, %v2934
        %v2940 = vmul.f32 %v2924, %v2938
        %v2941 = vmul.f32 %v2930, %v2934
        %v2942 = vmul.f32 %v2926, %v2938
        %v2943 = vadd.f32 %v2889, %v2939
        %v2944 = vadd.f32 %v2890, %v2940
        %v2945 = vadd.f32 %v2891, %v2941
        %v2946 = vadd.f32 %v2892, %v2942
        %2947 = vrot.lane.b32.xlu0 %v1453, 75
        %v2948 = vpop.permute.xlu0 %2947
        %2949 = vrot.lane.b32.xlu0 %v1458, 75
        %v2950 = vpop.permute.xlu0 %2949
        %2953 = vrot.lane.b32.xlu0 %v1453, 86
        %v2954 = vpop.permute.xlu0 %2953
        %2955 = vrot.lane.b32.xlu0 %v1458, 86
        %v2956 = vpop.permute.xlu0 %2955
        %v2959 = vsel %vm1483, %v2948, %v2954
        %v2960 = vsel %vm1483, %v2950, %v2956
        %2963 = vrot.lane.b32.xlu0 %v2959, 22
        %v2964 = vpop.permute.xlu0 %2963
        %2965 = vrot.lane.b32.xlu0 %v2960, 22
        %v2966 = vpop.permute.xlu0 %2965
        %v2969 = vsel %vm1494, %v2959, %v2964
        %v2970 = vsel %vm1494, %v2960, %v2966
        %2973 = vrot.lane.b32.xlu0 %v2969, 44
        %v2974 = vpop.permute.xlu0 %2973
        %2975 = vrot.lane.b32.xlu0 %v2970, 44
        %v2976 = vpop.permute.xlu0 %2975
        %v2979 = vsel %vm1505, %v2969, %v2974
        %v2980 = vsel %vm1505, %v2970, %v2976
        %2983 = vrot.lane.b32.xlu0 %v2979, 88
        %v2984 = vpop.permute.xlu0 %2983
        %2985 = vrot.lane.b32.xlu0 %v2980, 88
        %v2986 = vpop.permute.xlu0 %2985
        %v2989 = vsel %vm1516, %v2979, %v2984
        %v2990 = vsel %vm1516, %v2980, %v2986
        %v2991 = vlaneseq
        %v2992 = vshrl.u32 %v2991, 7
        %v2993 = vsub.s32 5, %v2992
        %v2994 = vrot.slane %v1469, %v2993
        %v2995 = vlaneseq
        %v2996 = vshrl.u32 %v2995, 7
        %v2997 = vsub.s32 5, %v2996
        %v2998 = vrot.slane %v1470, %v2997
        %v2999 = vmul.f32 %v2989, %v2994
        %v3000 = vmul.f32 %v2984, %v2998
        %v3001 = vmul.f32 %v2990, %v2994
        %v3002 = vmul.f32 %v2986, %v2998
        %v3003 = vadd.f32 %v2943, %v2999
        %v3004 = vadd.f32 %v2944, %v3000
        %v3005 = vadd.f32 %v2945, %v3001
        %v3006 = vadd.f32 %v2946, %v3002
        %3007 = vrot.lane.b32.xlu0 %v1453, 74
        %v3008 = vpop.permute.xlu0 %3007
        %3009 = vrot.lane.b32.xlu0 %v1458, 74
        %v3010 = vpop.permute.xlu0 %3009
        %3013 = vrot.lane.b32.xlu0 %v1453, 85
        %v3014 = vpop.permute.xlu0 %3013
        %3015 = vrot.lane.b32.xlu0 %v1458, 85
        %v3016 = vpop.permute.xlu0 %3015
        %v3019 = vsel %vm1483, %v3008, %v3014
        %v3020 = vsel %vm1483, %v3010, %v3016
        %3023 = vrot.lane.b32.xlu0 %v3019, 22
        %v3024 = vpop.permute.xlu0 %3023
        %3025 = vrot.lane.b32.xlu0 %v3020, 22
        %v3026 = vpop.permute.xlu0 %3025
        %v3029 = vsel %vm1494, %v3019, %v3024
        %v3030 = vsel %vm1494, %v3020, %v3026
        %3033 = vrot.lane.b32.xlu0 %v3029, 44
        %v3034 = vpop.permute.xlu0 %3033
        %3035 = vrot.lane.b32.xlu0 %v3030, 44
        %v3036 = vpop.permute.xlu0 %3035
        %v3039 = vsel %vm1505, %v3029, %v3034
        %v3040 = vsel %vm1505, %v3030, %v3036
        %3043 = vrot.lane.b32.xlu0 %v3039, 88
        %v3044 = vpop.permute.xlu0 %3043
        %3045 = vrot.lane.b32.xlu0 %v3040, 88
        %v3046 = vpop.permute.xlu0 %3045
        %v3049 = vsel %vm1516, %v3039, %v3044
        %v3050 = vsel %vm1516, %v3040, %v3046
        %v3051 = vlaneseq
        %v3052 = vshrl.u32 %v3051, 7
        %v3053 = vsub.s32 6, %v3052
        %v3054 = vrot.slane %v1469, %v3053
        %v3055 = vlaneseq
        %v3056 = vshrl.u32 %v3055, 7
        %v3057 = vsub.s32 6, %v3056
        %v3058 = vrot.slane %v1470, %v3057
        %v3059 = vmul.f32 %v3049, %v3054
        %v3060 = vmul.f32 %v3044, %v3058
        %v3061 = vmul.f32 %v3050, %v3054
        %v3062 = vmul.f32 %v3046, %v3058
        %v3063 = vadd.f32 %v3003, %v3059
        %v3064 = vadd.f32 %v3004, %v3060
        %v3065 = vadd.f32 %v3005, %v3061
        %v3066 = vadd.f32 %v3006, %v3062
        %v3067 = vlaneseq
        %v3068 = vshrl.u32 %v3067, 7
        %v3069 = vsub.s32 7, %v3068
        %v3070 = vrot.slane %v1469, %v3069
        %v3071 = vlaneseq
        %v3072 = vshrl.u32 %v3071, 7
        %v3073 = vsub.s32 7, %v3072
        %v3074 = vrot.slane %v1470, %v3073
        %v3075 = vmul.f32 %v2929, %v3070
        %v3076 = vmul.f32 %v2924, %v3074
        %v3077 = vmul.f32 %v2930, %v3070
        %v3078 = vmul.f32 %v2926, %v3074
        %v3083 = vrot.slane %v3075, 1
        %v3084 = vrot.slane %v3077, 1
        %v3085 = vsel %vm838, %v3083, %v3084
        %v3086 = vrot.slane %v3076, 1
        %v3087 = vrot.slane %v3078, 1
        %v3088 = vsel %vm838, %v3086, %v3087
        %v3093 = vadd.f32 %v3063, %v3085
        %v3094 = vadd.f32 %v3064, %v3088
        %v3095 = vadd.f32 %v3065, %v3084
        %v3096 = vadd.f32 %v3066, %v3087
        %v3097 = vlaneseq
        %v3098 = vshrl.u32 %v3097, 7
        %v3099 = vsub.s32 0, %v3098
        %v3100 = vrot.slane %v1471, %v3099
        %v3101 = vlaneseq
        %v3102 = vshrl.u32 %v3101, 7
        %v3103 = vsub.s32 0, %v3102
        %v3104 = vrot.slane %v1472, %v3103
        %v3105 = vmul.f32 %v2989, %v3100
        %v3106 = vmul.f32 %v2984, %v3104
        %v3107 = vmul.f32 %v2990, %v3100
        %v3108 = vmul.f32 %v2986, %v3104
        %v3113 = vrot.slane %v3105, 1
        %v3114 = vrot.slane %v3107, 1
        %v3115 = vsel %vm838, %v3113, %v3114
        %v3116 = vrot.slane %v3106, 1
        %v3117 = vrot.slane %v3108, 1
        %v3118 = vsel %vm838, %v3116, %v3117
        %v3123 = vadd.f32 %v3093, %v3115
        %v3124 = vadd.f32 %v3094, %v3118
        %v3125 = vadd.f32 %v3095, %v3114
        %v3126 = vadd.f32 %v3096, %v3117
        %v3127 = vlaneseq
        %v3128 = vshrl.u32 %v3127, 7
        %v3129 = vsub.s32 1, %v3128
        %v3130 = vrot.slane %v1471, %v3129
        %v3131 = vlaneseq
        %v3132 = vshrl.u32 %v3131, 7
        %v3133 = vsub.s32 1, %v3132
        %v3134 = vrot.slane %v1472, %v3133
        %v3135 = vmul.f32 %v3049, %v3130
        %v3136 = vmul.f32 %v3044, %v3134
        %v3137 = vmul.f32 %v3050, %v3130
        %v3138 = vmul.f32 %v3046, %v3134
        %v3143 = vrot.slane %v3135, 1
        %v3144 = vrot.slane %v3137, 1
        %v3145 = vsel %vm838, %v3143, %v3144
        %v3146 = vrot.slane %v3136, 1
        %v3147 = vrot.slane %v3138, 1
        %v3148 = vsel %vm838, %v3146, %v3147
        %v3153 = vadd.f32 %v3123, %v3145
        %v3154 = vadd.f32 %v3124, %v3148
        %v3155 = vadd.f32 %v3125, %v3144
        %v3156 = vadd.f32 %v3126, %v3147
        %v3157 = vlaneseq
        %v3158 = vshrl.u32 %v3157, 7
        %v3159 = vsub.s32 2, %v3158
        %v3160 = vrot.slane %v1471, %v3159
        %v3161 = vlaneseq
        %v3162 = vshrl.u32 %v3161, 7
        %v3163 = vsub.s32 2, %v3162
        %v3164 = vrot.slane %v1472, %v3163
        %v3165 = vmul.f32 %v2929, %v3160
        %v3166 = vmul.f32 %v2924, %v3164
        %v3167 = vmul.f32 %v2930, %v3160
        %v3168 = vmul.f32 %v2926, %v3164
        %v3173 = vrot.slane %v3165, 2
        %v3174 = vrot.slane %v3167, 2
        %v3175 = vsel %vm1001, %v3173, %v3174
        %v3176 = vrot.slane %v3166, 2
        %v3177 = vrot.slane %v3168, 2
        %v3178 = vsel %vm1001, %v3176, %v3177
        %v3183 = vadd.f32 %v3153, %v3175
        %v3184 = vadd.f32 %v3154, %v3178
        %v3185 = vadd.f32 %v3155, %v3174
        %v3186 = vadd.f32 %v3156, %v3177
        %v3187 = vlaneseq
        %v3188 = vshrl.u32 %v3187, 7
        %v3189 = vsub.s32 3, %v3188
        %v3190 = vrot.slane %v1471, %v3189
        %v3191 = vlaneseq
        %v3192 = vshrl.u32 %v3191, 7
        %v3193 = vsub.s32 3, %v3192
        %v3194 = vrot.slane %v1472, %v3193
        %v3195 = vmul.f32 %v2989, %v3190
        %v3196 = vmul.f32 %v2984, %v3194
        %v3197 = vmul.f32 %v2990, %v3190
        %v3198 = vmul.f32 %v2986, %v3194
        %v3203 = vrot.slane %v3195, 2
        %v3204 = vrot.slane %v3197, 2
        %v3205 = vsel %vm1001, %v3203, %v3204
        %v3206 = vrot.slane %v3196, 2
        %v3207 = vrot.slane %v3198, 2
        %v3208 = vsel %vm1001, %v3206, %v3207
        %v3213 = vadd.f32 %v3183, %v3205
        %v3214 = vadd.f32 %v3184, %v3208
        %v3215 = vadd.f32 %v3185, %v3204
        %v3216 = vadd.f32 %v3186, %v3207
        %v3217 = vlaneseq
        %v3218 = vshrl.u32 %v3217, 7
        %v3219 = vsub.s32 4, %v3218
        %v3220 = vrot.slane %v1471, %v3219
        %v3221 = vlaneseq
        %v3222 = vshrl.u32 %v3221, 7
        %v3223 = vsub.s32 4, %v3222
        %v3224 = vrot.slane %v1472, %v3223
        %v3225 = vmul.f32 %v3049, %v3220
        %v3226 = vmul.f32 %v3044, %v3224
        %v3227 = vmul.f32 %v3050, %v3220
        %v3228 = vmul.f32 %v3046, %v3224
        %v3233 = vrot.slane %v3225, 2
        %v3234 = vrot.slane %v3227, 2
        %v3235 = vsel %vm1001, %v3233, %v3234
        %v3236 = vrot.slane %v3226, 2
        %v3237 = vrot.slane %v3228, 2
        %v3238 = vsel %vm1001, %v3236, %v3237
        %v3243 = vadd.f32 %v3213, %v3235
        %v3244 = vadd.f32 %v3214, %v3238
        %v3245 = vadd.f32 %v3215, %v3234
        %v3246 = vadd.f32 %v3216, %v3237
        %3247 = vrot.lane.b32.xlu0 %v1453, 63
        %v3248 = vpop.permute.xlu0 %3247
        %3249 = vrot.lane.b32.xlu0 %v1458, 63
        %v3250 = vpop.permute.xlu0 %3249
        %v3253 = vsel %vm1483, %v3248, %v3008
        %v3254 = vsel %vm1483, %v3250, %v3010
        %3257 = vrot.lane.b32.xlu0 %v3253, 22
        %v3258 = vpop.permute.xlu0 %3257
        %3259 = vrot.lane.b32.xlu0 %v3254, 22
        %v3260 = vpop.permute.xlu0 %3259
        %v3263 = vsel %vm1494, %v3253, %v3258
        %v3264 = vsel %vm1494, %v3254, %v3260
        %3267 = vrot.lane.b32.xlu0 %v3263, 44
        %v3268 = vpop.permute.xlu0 %3267
        %3269 = vrot.lane.b32.xlu0 %v3264, 44
        %v3270 = vpop.permute.xlu0 %3269
        %v3273 = vsel %vm1505, %v3263, %v3268
        %v3274 = vsel %vm1505, %v3264, %v3270
        %3277 = vrot.lane.b32.xlu0 %v3273, 88
        %v3278 = vpop.permute.xlu0 %3277
        %3279 = vrot.lane.b32.xlu0 %v3274, 88
        %v3280 = vpop.permute.xlu0 %3279
        %v3283 = vsel %vm1516, %v3273, %v3278
        %v3284 = vsel %vm1516, %v3274, %v3280
        %v3285 = vlaneseq
        %v3286 = vshrl.u32 %v3285, 7
        %v3287 = vsub.s32 5, %v3286
        %v3288 = vrot.slane %v1471, %v3287
        %v3289 = vlaneseq
        %v3290 = vshrl.u32 %v3289, 7
        %v3291 = vsub.s32 5, %v3290
        %v3292 = vrot.slane %v1472, %v3291
        %v3293 = vmul.f32 %v3283, %v3288
        %v3294 = vmul.f32 %v3278, %v3292
        %v3295 = vmul.f32 %v3284, %v3288
        %v3296 = vmul.f32 %v3280, %v3292
        %v3297 = vadd.f32 %v3243, %v3293
        %v3298 = vadd.f32 %v3244, %v3294
        %v3299 = vadd.f32 %v3245, %v3295
        %v3300 = vadd.f32 %v3246, %v3296
        %3301 = vrot.lane.b32.xlu0 %v1453, 62
        %v3302 = vpop.permute.xlu0 %3301
        %3303 = vrot.lane.b32.xlu0 %v1458, 62
        %v3304 = vpop.permute.xlu0 %3303
        %3307 = vrot.lane.b32.xlu0 %v1453, 73
        %v3308 = vpop.permute.xlu0 %3307
        %3309 = vrot.lane.b32.xlu0 %v1458, 73
        %v3310 = vpop.permute.xlu0 %3309
        %v3313 = vsel %vm1483, %v3302, %v3308
        %v3314 = vsel %vm1483, %v3304, %v3310
        %3317 = vrot.lane.b32.xlu0 %v3313, 22
        %v3318 = vpop.permute.xlu0 %3317
        %3319 = vrot.lane.b32.xlu0 %v3314, 22
        %v3320 = vpop.permute.xlu0 %3319
        %v3323 = vsel %vm1494, %v3313, %v3318
        %v3324 = vsel %vm1494, %v3314, %v3320
        %3327 = vrot.lane.b32.xlu0 %v3323, 44
        %v3328 = vpop.permute.xlu0 %3327
        %3329 = vrot.lane.b32.xlu0 %v3324, 44
        %v3330 = vpop.permute.xlu0 %3329
        %v3333 = vsel %vm1505, %v3323, %v3328
        %v3334 = vsel %vm1505, %v3324, %v3330
        %3337 = vrot.lane.b32.xlu0 %v3333, 88
        %v3338 = vpop.permute.xlu0 %3337
        %3339 = vrot.lane.b32.xlu0 %v3334, 88
        %v3340 = vpop.permute.xlu0 %3339
        %v3343 = vsel %vm1516, %v3333, %v3338
        %v3344 = vsel %vm1516, %v3334, %v3340
        %v3345 = vlaneseq
        %v3346 = vshrl.u32 %v3345, 7
        %v3347 = vsub.s32 6, %v3346
        %v3348 = vrot.slane %v1471, %v3347
        %v3349 = vlaneseq
        %v3350 = vshrl.u32 %v3349, 7
        %v3351 = vsub.s32 6, %v3350
        %v3352 = vrot.slane %v1472, %v3351
        %v3353 = vmul.f32 %v3343, %v3348
        %v3354 = vmul.f32 %v3338, %v3352
        %v3355 = vmul.f32 %v3344, %v3348
        %v3356 = vmul.f32 %v3340, %v3352
        %v3357 = vadd.f32 %v3297, %v3353
        %v3358 = vadd.f32 %v3298, %v3354
        %v3359 = vadd.f32 %v3299, %v3355
        %v3360 = vadd.f32 %v3300, %v3356
        %3361 = vrot.lane.b32.xlu0 %v1453, 61
        %v3362 = vpop.permute.xlu0 %3361
        %3363 = vrot.lane.b32.xlu0 %v1458, 61
        %v3364 = vpop.permute.xlu0 %3363
        %3367 = vrot.lane.b32.xlu0 %v1453, 72
        %v3368 = vpop.permute.xlu0 %3367
        %3369 = vrot.lane.b32.xlu0 %v1458, 72
        %v3370 = vpop.permute.xlu0 %3369
        %v3373 = vsel %vm1483, %v3362, %v3368
        %v3374 = vsel %vm1483, %v3364, %v3370
        %3377 = vrot.lane.b32.xlu0 %v3373, 22
        %v3378 = vpop.permute.xlu0 %3377
        %3379 = vrot.lane.b32.xlu0 %v3374, 22
        %v3380 = vpop.permute.xlu0 %3379
        %v3383 = vsel %vm1494, %v3373, %v3378
        %v3384 = vsel %vm1494, %v3374, %v3380
        %3387 = vrot.lane.b32.xlu0 %v3383, 44
        %v3388 = vpop.permute.xlu0 %3387
        %3389 = vrot.lane.b32.xlu0 %v3384, 44
        %v3390 = vpop.permute.xlu0 %3389
        %v3393 = vsel %vm1505, %v3383, %v3388
        %v3394 = vsel %vm1505, %v3384, %v3390
        %3397 = vrot.lane.b32.xlu0 %v3393, 88
        %v3398 = vpop.permute.xlu0 %3397
        %3399 = vrot.lane.b32.xlu0 %v3394, 88
        %v3400 = vpop.permute.xlu0 %3399
        %v3403 = vsel %vm1516, %v3393, %v3398
        %v3404 = vsel %vm1516, %v3394, %v3400
        %v3405 = vlaneseq
        %v3406 = vshrl.u32 %v3405, 7
        %v3407 = vsub.s32 7, %v3406
        %v3408 = vrot.slane %v1471, %v3407
        %v3409 = vlaneseq
        %v3410 = vshrl.u32 %v3409, 7
        %v3411 = vsub.s32 7, %v3410
        %v3412 = vrot.slane %v1472, %v3411
        %v3413 = vmul.f32 %v3403, %v3408
        %v3414 = vmul.f32 %v3398, %v3412
        %v3415 = vmul.f32 %v3404, %v3408
        %v3416 = vmul.f32 %v3400, %v3412
        %v3417 = vadd.f32 %v3357, %v3413
        %v3418 = vadd.f32 %v3358, %v3414
        %v3419 = vadd.f32 %v3359, %v3415
        %v3420 = vadd.f32 %v3360, %v3416
        %v3421 = vlaneseq
        %v3422 = vshrl.u32 %v3421, 7
        %v3423 = vsub.s32 0, %v3422
        %v3424 = vrot.slane %v1473, %v3423
        %v3425 = vlaneseq
        %v3426 = vshrl.u32 %v3425, 7
        %v3427 = vsub.s32 0, %v3426
        %v3428 = vrot.slane %v1474, %v3427
        %v3429 = vmul.f32 %v3283, %v3424
        %v3430 = vmul.f32 %v3278, %v3428
        %v3431 = vmul.f32 %v3284, %v3424
        %v3432 = vmul.f32 %v3280, %v3428
        %v3437 = vrot.slane %v3429, 1
        %v3438 = vrot.slane %v3431, 1
        %v3439 = vsel %vm838, %v3437, %v3438
        %v3440 = vrot.slane %v3430, 1
        %v3441 = vrot.slane %v3432, 1
        %v3442 = vsel %vm838, %v3440, %v3441
        %v3447 = vadd.f32 %v3417, %v3439
        %v3448 = vadd.f32 %v3418, %v3442
        %v3449 = vadd.f32 %v3419, %v3438
        %v3450 = vadd.f32 %v3420, %v3441
        %v3451 = vlaneseq
        %v3452 = vshrl.u32 %v3451, 7
        %v3453 = vsub.s32 1, %v3452
        %v3454 = vrot.slane %v1473, %v3453
        %v3455 = vlaneseq
        %v3456 = vshrl.u32 %v3455, 7
        %v3457 = vsub.s32 1, %v3456
        %v3458 = vrot.slane %v1474, %v3457
        %v3459 = vmul.f32 %v3343, %v3454
        %v3460 = vmul.f32 %v3338, %v3458
        %v3461 = vmul.f32 %v3344, %v3454
        %v3462 = vmul.f32 %v3340, %v3458
        %v3467 = vrot.slane %v3459, 1
        %v3468 = vrot.slane %v3461, 1
        %v3469 = vsel %vm838, %v3467, %v3468
        %v3470 = vrot.slane %v3460, 1
        %v3471 = vrot.slane %v3462, 1
        %v3472 = vsel %vm838, %v3470, %v3471
        %v3477 = vadd.f32 %v3447, %v3469
        %v3478 = vadd.f32 %v3448, %v3472
        %v3479 = vadd.f32 %v3449, %v3468
        %v3480 = vadd.f32 %v3450, %v3471
        %v3481 = vlaneseq
        %v3482 = vshrl.u32 %v3481, 7
        %v3483 = vsub.s32 2, %v3482
        %v3484 = vrot.slane %v1473, %v3483
        %v3485 = vlaneseq
        %v3486 = vshrl.u32 %v3485, 7
        %v3487 = vsub.s32 2, %v3486
        %v3488 = vrot.slane %v1474, %v3487
        %v3489 = vmul.f32 %v3403, %v3484
        %v3490 = vmul.f32 %v3398, %v3488
        %v3491 = vmul.f32 %v3404, %v3484
        %v3492 = vmul.f32 %v3400, %v3488
        %v3497 = vrot.slane %v3489, 1
        %v3498 = vrot.slane %v3491, 1
        %v3499 = vsel %vm838, %v3497, %v3498
        %v3500 = vrot.slane %v3490, 1
        %v3501 = vrot.slane %v3492, 1
        %v3502 = vsel %vm838, %v3500, %v3501
        %v3507 = vadd.f32 %v3477, %v3499
        %v3508 = vadd.f32 %v3478, %v3502
        %v3509 = vadd.f32 %v3479, %v3498
        %v3510 = vadd.f32 %v3480, %v3501
        %v3511 = vlaneseq
        %v3512 = vshrl.u32 %v3511, 7
        %v3513 = vsub.s32 3, %v3512
        %v3514 = vrot.slane %v1473, %v3513
        %v3515 = vlaneseq
        %v3516 = vshrl.u32 %v3515, 7
        %v3517 = vsub.s32 3, %v3516
        %v3518 = vrot.slane %v1474, %v3517
        %v3519 = vmul.f32 %v3283, %v3514
        %v3520 = vmul.f32 %v3278, %v3518
        %v3521 = vmul.f32 %v3284, %v3514
        %v3522 = vmul.f32 %v3280, %v3518
        %v3527 = vrot.slane %v3519, 2
        %v3528 = vrot.slane %v3521, 2
        %v3529 = vsel %vm1001, %v3527, %v3528
        %v3530 = vrot.slane %v3520, 2
        %v3531 = vrot.slane %v3522, 2
        %v3532 = vsel %vm1001, %v3530, %v3531
        %v3537 = vadd.f32 %v3507, %v3529
        %v3538 = vadd.f32 %v3508, %v3532
        %v3539 = vadd.f32 %v3509, %v3528
        %v3540 = vadd.f32 %v3510, %v3531
        %v3541 = vlaneseq
        %v3542 = vshrl.u32 %v3541, 7
        %v3543 = vsub.s32 4, %v3542
        %v3544 = vrot.slane %v1473, %v3543
        %v3545 = vlaneseq
        %v3546 = vshrl.u32 %v3545, 7
        %v3547 = vsub.s32 4, %v3546
        %v3548 = vrot.slane %v1474, %v3547
        %v3549 = vmul.f32 %v3343, %v3544
        %v3550 = vmul.f32 %v3338, %v3548
        %v3551 = vmul.f32 %v3344, %v3544
        %v3552 = vmul.f32 %v3340, %v3548
        %v3557 = vrot.slane %v3549, 2
        %v3558 = vrot.slane %v3551, 2
        %v3559 = vsel %vm1001, %v3557, %v3558
        %v3560 = vrot.slane %v3550, 2
        %v3561 = vrot.slane %v3552, 2
        %v3562 = vsel %vm1001, %v3560, %v3561
        %v3567 = vadd.f32 %v3537, %v3559
        %v3568 = vadd.f32 %v3538, %v3562
        %v3569 = vadd.f32 %v3539, %v3558
        %v3570 = vadd.f32 %v3540, %v3561
        %v3571 = vlaneseq
        %v3572 = vshrl.u32 %v3571, 7
        %v3573 = vsub.s32 5, %v3572
        %v3574 = vrot.slane %v1473, %v3573
        %v3575 = vlaneseq
        %v3576 = vshrl.u32 %v3575, 7
        %v3577 = vsub.s32 5, %v3576
        %v3578 = vrot.slane %v1474, %v3577
        %v3579 = vmul.f32 %v3403, %v3574
        %v3580 = vmul.f32 %v3398, %v3578
        %v3581 = vmul.f32 %v3404, %v3574
        %v3582 = vmul.f32 %v3400, %v3578
        %v3587 = vrot.slane %v3579, 2
        %v3588 = vrot.slane %v3581, 2
        %v3589 = vsel %vm1001, %v3587, %v3588
        %v3590 = vrot.slane %v3580, 2
        %v3591 = vrot.slane %v3582, 2
        %v3592 = vsel %vm1001, %v3590, %v3591
        %v3597 = vadd.f32 %v3567, %v3589
        %v3598 = vadd.f32 %v3568, %v3592
        %v3599 = vadd.f32 %v3569, %v3588
        %v3600 = vadd.f32 %v3570, %v3591
        %v3601 = vld [vmem:[#allocation5] sm:$0x3]
        %v3603 = vlaneseq
        %v3604 = vshrl.u32 %v3603, 7
        %v3605 = vsub.s32 0, %v3604
        %v3606 = vrot.slane %v3601, %v3605
        %v3607 = vlaneseq
        %v3608 = vshrl.u32 %v3607, 7
        %v3609 = vsub.s32 1, %v3608
        %v3610 = vrot.slane %v3601, %v3609
        %v3613 = vadd.f32 %v3597, %v3606
        %v3614 = vadd.f32 %v3598, %v3610
        %v3615 = vadd.f32 %v3599, %v3606
        %v3616 = vadd.f32 %v3600, %v3610
        %v3617 = vmax.f32 %v3613, 0.0
        %v3618 = vmax.f32 %v3614, 0.0
        %v3619 = vmax.f32 %v3615, 0.0
        %v3620 = vmax.f32 %v3616, 0.0
        %v3625 = vrot.slane %v3617, 1
        %v3626 = vrot.slane %v3619, 1
        %v3627 = vsel %vm838, %v3625, %v3626
        %v3628 = vrot.slane %v3618, 1
        %v3629 = vrot.slane %v3620, 1
        %v3630 = vsel %vm838, %v3628, %v3629
        %v3635 = vmax.f32 %v3617, %v3627
        %v3636 = vmax.f32 %v3618, %v3630
        %v3637 = vmax.f32 %v3619, %v3626
        %v3638 = vmax.f32 %v3620, %v3629
        %3643 = vrot.lane.b32.xlu0 %v3635, 127
        %v3644 = vpop.permute.xlu0 %3643
        %3645 = vrot.lane.b32.xlu0 %v3636, 127
        %v3646 = vpop.permute.xlu0 %3645
        %3647 = vrot.lane.b32.xlu0 %v3637, 127
        %v3648 = vpop.permute.xlu0 %3647
        %3649 = vrot.lane.b32.xlu0 %v3638, 127
        %v3650 = vpop.permute.xlu0 %3649
        %v3651 = vsel %vm1230, %v3644, %v3646
        %v3652 = vsel %vm1230, %v3648, %v3650
        %v3657 = vmax.f32 %v3635, %v3651
        %v3658 = vmax.f32 %v3636, %v3646
        %v3659 = vmax.f32 %v3637, %v3652
        %v3660 = vmax.f32 %v3638, %v3650
        %v3661 = vld [vmem:[%s7] sm:$0xff]
        %v3662 = vld [vmem:[%s7 + $0x8] sm:$0xff]
        %v3663 = vld [vmem:[%s7 + $0x10] sm:$0xff]
        %v3664 = vld [vmem:[%s7 + $0x18] sm:$0xff]
        %v3665 = vld [vmem:[%s7 + $0x20] sm:$0xff]
        %v3666 = vld [vmem:[%s7 + $0x28] sm:$0xff]
        %v3667 = vld [vmem:[%s7 + $0x30] sm:$0xff]
        %v3668 = vld [vmem:[%s7 + $0x38] sm:$0xff]
        %v3669 = vld [vmem:[%s7 + $0x40] sm:$0xff]
        %v3670 = vld [vmem:[%s7 + $0x48] sm:$0xff]
        %v3671 = vld [vmem:[%s7 + $0x50] sm:$0xff]
        %v3672 = vld [vmem:[%s7 + $0x58] sm:$0xff]
        %v3673 = vld [vmem:[%s7 + $0x60] sm:$0xff]
        %v3674 = vld [vmem:[%s7 + $0x68] sm:$0xff]
        %v3675 = vld [vmem:[%s7 + $0x70] sm:$0xff]
        %v3676 = vld [vmem:[%s7 + $0x78] sm:$0xff]
        %v3677 = vld [vmem:[%s7 + $0x80] sm:$0xff]
        %v3678 = vld [vmem:[%s7 + $0x88] sm:$0xff]
        %v3679 = vld [vmem:[%s7 + $0x90] sm:$0xff]
        %v3680 = vld [vmem:[%s7 + $0x98] sm:$0xff]
        %v3681 = vld [vmem:[%s7 + $0xa0] sm:$0xff]
        %v3682 = vld [vmem:[%s7 + $0xa8] sm:$0x7f]
        %vm3683 = vcmask 384000
        %v3685 = vsel %vm3683, %v3658, 0
        %v3688 = vsel %vm3683, %v3660, 0
        %v3691 = vsel %vm838, %v3682, 0
        %3693 = vmatprep.subr.mxu0 0.0
        %3694 = vmatpush1.msra.mxu0 %v3661
        %3695 = vmatprep.subr.mxu0 0.0
        %3696 = vmatpush1.msra.mxu0 %v3662
        %3697 = vmatprep.subr.mxu0 0.0
        %3698 = vmatpush1.msra.mxu0 %v3663
        %3699 = vmatprep.subr.mxu0 0.0
        %3700 = vmatpush1.msra.mxu0 %v3664
        %3701 = vmatprep.subr.mxu0 0.0
        %3702 = vmatpush1.msra.mxu0 %v3665
        %3703 = vmatprep.subr.mxu0 0.0
        %3704 = vmatpush1.msra.mxu0 %v3666
        %3705 = vmatprep.subr.mxu0 0.0
        %3706 = vmatpush1.msra.mxu0 %v3667
        %3707 = vmatprep.subr.mxu0 0.0
        %3708 = vmatpush1.msra.mxu0 %v3668
        %3709 = vmatprep.subr.mxu0 0.0
        %3710 = vmatpush1.msra.mxu0 %v3669
        %3711 = vmatprep.subr.mxu0 0.0
        %3712 = vmatpush1.msra.mxu0 %v3670
        %3713 = vmatprep.subr.mxu0 0.0
        %3714 = vmatpush1.msra.mxu0 %v3671
        %3715 = vmatprep.subr.mxu0 0.0
        %3716 = vmatpush1.msra.mxu0 %v3672
        %3717 = vmatprep.subr.mxu0 0.0
        %3718 = vmatpush1.msra.mxu0 %v3673
        %3719 = vmatprep.subr.mxu0 0.0
        %3720 = vmatpush1.msra.mxu0 %v3674
        %3721 = vmatprep.subr.mxu0 0.0
        %3722 = vmatpush1.msra.mxu0 %v3675
        %3723 = vmatprep.subr.mxu0 0.0
        %3724 = vmatpush1.msra.mxu0 %v3676
        %3725 = vmatprep.subr.mxu0 0.0
        %3726 = vmatpush1.msra.mxu0 %v3677
        %3727 = vmatprep.subr.mxu0 0.0
        %3728 = vmatpush1.msra.mxu0 %v3678
        %3729 = vmatprep.subr.mxu0 0.0
        %3730 = vmatpush1.msra.mxu0 %v3679
        %3731 = vmatprep.subr.mxu0 0.0
        %3732 = vmatpush1.msra.mxu0 %v3680
        %3733 = vmatprep.subr.mxu0 0.0
        %3734 = vmatpush1.msra.mxu0 %v3681
        %3735 = vmatprep.subr.mxu0 0.0
        %3736 = vmatpush1.msra.mxu0 %v3691
        %3737 = vmatprep.subr.mxu0 0.0
        %3738 = vmatpush1.msra.mxu0 0.0
        %3739 = vmatprep.subr.mxu0 0.0
        %3740 = vmatpush1.msra.mxu0 0.0
        %3741 = vmatprep.subr.mxu0 0.0
        %3742 = vmatpush1.msra.mxu0 0.0
        %3743 = vmatprep.subr.mxu0 0.0
        %3744 = vmatpush1.msra.mxu0 0.0
        %3745 = vmatprep.subr.mxu0 0.0
        %3746 = vmatpush1.msra.mxu0 0.0
        %3747 = vmatprep.subr.mxu0 0.0
        %3748 = vmatpush1.msra.mxu0 0.0
        %3749 = vmatprep.subr.mxu0 0.0
        %3750 = vmatpush1.msra.mxu0 0.0
        %3751 = vmatprep.subr.mxu0 0.0
        %3752 = vmatpush1.msra.mxu0 0.0
        %3753 = vmatprep.subr.mxu0 0.0
        %3754 = vmatpush1.msra.mxu0 0.0
        %3755 = vmatprep.subr.mxu0 0.0
        %3756 = vmatpush1.msra.mxu0 0.0
        %3757 = vmatprep.mubr.f32.mxu0 %v3685
        %3758 = vmatmul.mubr.f32.gmra.mrb[0].mxu0 %v3657
        %v3759 = vpop.f32.mrb[0].mxu0
        %v3760 = vadd.f32 0.0, %v3759
        %v3761 = vpop.f32.mrb[0].mxu0
        %3762 = vmatprep.mubr.f32.mxu0 %v3688
        %3763 = vmatmul.mubr.f32.gmra.mrb[0].mxu0 %v3659
        %v3764 = vpop.f32.mrb[0].mxu0
        %v3765 = vadd.f32 0.0, %v3764
        %v3766 = vpop.f32.mrb[0].mxu0
        %3767 = vdwg.mxu0
        %v3768 = vld [vmem:[%s8] sm:$0x1f]
        %vm3769 = vcmask 80896
        %v3771 = vsel %vm3769, %v3768, 0
        %vm3773 = vcmask 1041408
        %v3775 = vsel %vm3773, %v3765, 0
        %3777 = vmatprep.subr.mxu0 0.0
        %3778 = vmatpush1.msra.mxu0 %v3760
        %3779 = vmatprep.subr.mxu0 0.0
        %3780 = vmatpush1.msra.mxu0 %v3775
        %3781 = vmatprep.subr.mxu0 0.0
        %3782 = vmatpush1.msra.mxu0 0.0
        %3783 = vmatprep.subr.mxu0 0.0
        %3784 = vmatpush1.msra.mxu0 0.0
        %3785 = vmatprep.subr.mxu0 0.0
        %3786 = vmatpush1.msra.mxu0 0.0
        %3787 = vmatprep.subr.mxu0 0.0
        %3788 = vmatpush1.msra.mxu0 0.0
        %3789 = vmatprep.subr.mxu0 0.0
        %3790 = vmatpush1.msra.mxu0 0.0
        %3791 = vmatprep.subr.mxu0 0.0
        %3792 = vmatpush1.msra.mxu0 0.0
        %3793 = vmatprep.subr.mxu0 0.0
        %3794 = vmatpush1.msra.mxu0 0.0
        %3795 = vmatprep.subr.mxu0 0.0
        %3796 = vmatpush1.msra.mxu0 0.0
        %3797 = vmatprep.subr.mxu0 0.0
        %3798 = vmatpush1.msra.mxu0 0.0
        %3799 = vmatprep.subr.mxu0 0.0
        %3800 = vmatpush1.msra.mxu0 0.0
        %3801 = vmatprep.subr.mxu0 0.0
        %3802 = vmatpush1.msra.mxu0 0.0
        %3803 = vmatprep.subr.mxu0 0.0
        %3804 = vmatpush1.msra.mxu0 0.0
        %3805 = vmatprep.subr.mxu0 0.0
        %3806 = vmatpush1.msra.mxu0 0.0
        %3807 = vmatprep.subr.mxu0 0.0
        %3808 = vmatpush1.msra.mxu0 0.0
        %3809 = vmatprep.subr.mxu0 0.0
        %3810 = vmatpush1.msra.mxu0 0.0
        %3811 = vmatprep.subr.mxu0 0.0
        %3812 = vmatpush1.msra.mxu0 0.0
        %3813 = vmatprep.subr.mxu0 0.0
        %3814 = vmatpush1.msra.mxu0 0.0
        %3815 = vmatprep.subr.mxu0 0.0
        %3816 = vmatpush1.msra.mxu0 0.0
        %3817 = vmatprep.subr.mxu0 0.0
        %3818 = vmatpush1.msra.mxu0 0.0
        %3819 = vmatprep.subr.mxu0 0.0
        %3820 = vmatpush1.msra.mxu0 0.0
        %3821 = vmatprep.subr.mxu0 0.0
        %3822 = vmatpush1.msra.mxu0 0.0
        %3823 = vmatprep.subr.mxu0 0.0
        %3824 = vmatpush1.msra.mxu0 0.0
        %3825 = vmatprep.subr.mxu0 0.0
        %3826 = vmatpush1.msra.mxu0 0.0
        %3827 = vmatprep.subr.mxu0 0.0
        %3828 = vmatpush1.msra.mxu0 0.0
        %3829 = vmatprep.subr.mxu0 0.0
        %3830 = vmatpush1.msra.mxu0 0.0
        %3831 = vmatprep.subr.mxu0 0.0
        %3832 = vmatpush1.msra.mxu0 0.0
        %3833 = vmatprep.subr.mxu0 0.0
        %3834 = vmatpush1.msra.mxu0 0.0
        %3835 = vmatprep.subr.mxu0 0.0
        %3836 = vmatpush1.msra.mxu0 0.0
        %3837 = vmatprep.subr.mxu0 0.0
        %3838 = vmatpush1.msra.mxu0 0.0
        %3839 = vmatprep.subr.mxu0 0.0
        %3840 = vmatpush1.msra.mxu0 0.0
        %3841 = vmatprep.mubr.f32.mxu0 0.0
        %3842 = vmatmul.mubr.f32.gmra.mrb[0].mxu0 %v3771
        %v3843 = vpop.f32.mrb[0].mxu0
        %v3844 = vadd.f32 0.0, %v3843
        %v3845 = vpop.f32.mrb[0].mxu0
        %3846 = vdwg.mxu0
        %v3848 = vrot.slane %v3844, 1
        %3849 = vrot.lane.b32.xlu0 %v3848, 80
        %v3850 = vpop.permute.xlu0 %3849
        %v3852 = vrot.slane %v3844, 2
        %3853 = vrot.lane.b32.xlu0 %v3852, 32
        %v3854 = vpop.permute.xlu0 %3853
        %v3856 = vrot.slane %v3844, 3
        %3857 = vrot.lane.b32.xlu0 %v3856, 112
        %v3858 = vpop.permute.xlu0 %3857
        %v3860 = vrot.slane %v3844, 4
        %3861 = vrot.lane.b32.xlu0 %v3860, 64
        %v3862 = vpop.permute.xlu0 %3861
        %vm3864 = vcmask 654336
        %v3865 = vsel %vm3864, %v3844, %v3850
        %vm3866 = vcmask 261120
        %v3867 = vsel %vm3866, %v3850, %v3854
        %vm3868 = vcmask 916480
        %v3869 = vsel %vm3868, %v3867, %v3858
        %vm3870 = vcmask 523264
        %v3871 = vsel %vm3870, %v3858, %v3862
        %v3872 = vld [vmem:[%s9] sm:$0xff]
        %v3873 = vld [vmem:[%s9 + $0x8] sm:$0xff]
        %v3874 = vld [vmem:[%s9 + $0x10] sm:$0xff]
        %v3875 = vld [vmem:[%s9 + $0x18] sm:$0xff]
        %v3876 = vld [vmem:[%s9 + $0x20] sm:$0xff]
        %v3877 = vld [vmem:[%s9 + $0x28] sm:$0xff]
        %v3878 = vld [vmem:[%s9 + $0x30] sm:$0xff]
        %v3879 = vld [vmem:[%s9 + $0x38] sm:$0xff]
        %v3880 = vld [vmem:[%s9 + $0x40] sm:$0xff]
        %v3881 = vld [vmem:[%s9 + $0x48] sm:$0xff]
        %v3882 = vld [vmem:[%s9 + $0x50] sm:$0xff]
        %v3883 = vld [vmem:[%s9 + $0x58] sm:$0xff]
        %v3884 = vld [vmem:[%s9 + $0x60] sm:$0xff]
        %v3885 = vld [vmem:[%s9 + $0x68] sm:$0xff]
        %v3886 = vld [vmem:[%s9 + $0x70] sm:$0xff]
        %v3887 = vld [vmem:[%s9 + $0x78] sm:$0xff]
        %v3888 = vld [vmem:[%s9 + $0x80] sm:$0xff]
        %v3889 = vld [vmem:[%s9 + $0x88] sm:$0xff]
        %v3890 = vld [vmem:[%s9 + $0x90] sm:$0xff]
        %v3891 = vld [vmem:[%s9 + $0x98] sm:$0xff]
        %v3892 = vld [vmem:[%s9 + $0xa0] sm:$0xff]
        %v3893 = vld [vmem:[%s9 + $0xa8] sm:$0xff]
        %v3894 = vld [vmem:[%s9 + $0xb0] sm:$0xff]
        %v3895 = vld [vmem:[%s9 + $0xb8] sm:$0xff]
        %v3896 = vld [vmem:[%s9 + $0xc0] sm:$0xff]
        %v3897 = vld [vmem:[%s9 + $0xc8] sm:$0xff]
        %v3898 = vld [vmem:[%s9 + $0xd0] sm:$0xff]
        %v3899 = vld [vmem:[%s9 + $0xd8] sm:$0xff]
        %v3900 = vld [vmem:[%s9 + $0xe0] sm:$0xff]
        %v3901 = vld [vmem:[%s9 + $0xe8] sm:$0xff]
        %v3902 = vld [vmem:[%s9 + $0xf0] sm:$0xff]
        %v3903 = vld [vmem:[%s9 + $0xf8] sm:$0xff]
        %v3904 = vld [vmem:[%s9 + $0x100] sm:$0xff]
        %v3905 = vld [vmem:[%s9 + $0x108] sm:$0xff]
        %v3906 = vld [vmem:[%s9 + $0x110] sm:$0xff]
        %v3907 = vld [vmem:[%s9 + $0x118] sm:$0xff]
        %v3908 = vld [vmem:[%s9 + $0x120] sm:$0xff]
        %v3909 = vld [vmem:[%s9 + $0x128] sm:$0xff]
        %v3910 = vld [vmem:[%s9 + $0x130] sm:$0xff]
        %v3911 = vld [vmem:[%s9 + $0x138] sm:$0xff]
        %v3912 = vld [vmem:[%s9 + $0x140] sm:$0xff]
        %v3913 = vld [vmem:[%s9 + $0x148] sm:$0xff]
        %v3914 = vld [vmem:[%s9 + $0x150] sm:$0xff]
        %v3915 = vld [vmem:[%s9 + $0x158] sm:$0xff]
        %v3916 = vld [vmem:[%s9 + $0x160] sm:$0xff]
        %v3917 = vld [vmem:[%s9 + $0x168] sm:$0xff]
        %v3918 = vld [vmem:[%s9 + $0x170] sm:$0xff]
        %v3919 = vld [vmem:[%s9 + $0x178] sm:$0xff]
        %v3920 = vld [vmem:[%s9 + $0x180] sm:$0xff]
        %v3921 = vld [vmem:[%s9 + $0x188] sm:$0xff]
        %v3922 = vld [vmem:[%s10] sm:$0x1]
        %vm3923 = vcmask 130048
        %v3924 = vsel %vm3923, %v3862, 0
        %3926 = vmatprep.subr.mxu0 0.0
        %3927 = vmatpush1.msra.mxu0 %v3872
        %3928 = vmatprep.subr.mxu0 0.0
        %3929 = vmatpush1.msra.mxu0 %v3873
        %3930 = vmatprep.subr.mxu0 0.0
        %3931 = vmatpush1.msra.mxu0 %v3874
        %3932 = vmatprep.subr.mxu0 0.0
        %3933 = vmatpush1.msra.mxu0 %v3875
        %3934 = vmatprep.subr.mxu0 0.0
        %3935 = vmatpush1.msra.mxu0 %v3876
        %3936 = vmatprep.subr.mxu0 0.0
        %3937 = vmatpush1.msra.mxu0 %v3877
        %3938 = vmatprep.subr.mxu0 0.0
        %3939 = vmatpush1.msra.mxu0 %v3878
        %3940 = vmatprep.subr.mxu0 0.0
        %3941 = vmatpush1.msra.mxu0 %v3879
        %3942 = vmatprep.subr.mxu0 0.0
        %3943 = vmatpush1.msra.mxu0 %v3880
        %3944 = vmatprep.subr.mxu0 0.0
        %3945 = vmatpush1.msra.mxu0 %v3881
        %3946 = vmatprep.subr.mxu0 0.0
        %3947 = vmatpush1.msra.mxu0 %v3882
        %3948 = vmatprep.subr.mxu0 0.0
        %3949 = vmatpush1.msra.mxu0 %v3883
        %3950 = vmatprep.subr.mxu0 0.0
        %3951 = vmatpush1.msra.mxu0 %v3884
        %3952 = vmatprep.subr.mxu0 0.0
        %3953 = vmatpush1.msra.mxu0 %v3885
        %3954 = vmatprep.subr.mxu0 0.0
        %3955 = vmatpush1.msra.mxu0 %v3886
        %3956 = vmatprep.subr.mxu0 0.0
        %3957 = vmatpush1.msra.mxu0 %v3887
        %3958 = vmatprep.subr.mxu0 0.0
        %3959 = vmatpush1.msra.mxu0 %v3888
        %3960 = vmatprep.subr.mxu0 0.0
        %3961 = vmatpush1.msra.mxu0 %v3889
        %3962 = vmatprep.subr.mxu0 0.0
        %3963 = vmatpush1.msra.mxu0 %v3890
        %3964 = vmatprep.subr.mxu0 0.0
        %3965 = vmatpush1.msra.mxu0 %v3891
        %3966 = vmatprep.subr.mxu0 0.0
        %3967 = vmatpush1.msra.mxu0 %v3892
        %3968 = vmatprep.subr.mxu0 0.0
        %3969 = vmatpush1.msra.mxu0 %v3893
        %3970 = vmatprep.subr.mxu0 0.0
        %3971 = vmatpush1.msra.mxu0 %v3894
        %3972 = vmatprep.subr.mxu0 0.0
        %3973 = vmatpush1.msra.mxu0 %v3895
        %3974 = vmatprep.subr.mxu0 0.0
        %3975 = vmatpush1.msra.mxu0 %v3896
        %3976 = vmatprep.subr.mxu0 0.0
        %3977 = vmatpush1.msra.mxu0 %v3897
        %3978 = vmatprep.subr.mxu0 0.0
        %3979 = vmatpush1.msra.mxu0 %v3898
        %3980 = vmatprep.subr.mxu0 0.0
        %3981 = vmatpush1.msra.mxu0 %v3899
        %3982 = vmatprep.subr.mxu0 0.0
        %3983 = vmatpush1.msra.mxu0 %v3900
        %3984 = vmatprep.subr.mxu0 0.0
        %3985 = vmatpush1.msra.mxu0 %v3901
        %3986 = vmatprep.subr.mxu0 0.0
        %3987 = vmatpush1.msra.mxu0 %v3902
        %3988 = vmatprep.subr.mxu0 0.0
        %3989 = vmatpush1.msra.mxu0 %v3903
        %3990 = vmatprep.mubr.f32.mxu0 %v3869
        %3991 = vmatmul.mubr.f32.gmra.mrb[0].mxu0 %v3865
        %v3992 = vpop.f32.mrb[0].mxu0
        %v3993 = vadd.f32 %v3922, %v3992
        %v3994 = vpop.f32.mrb[0].mxu0
        %3995 = vdwg.mxu0
        %3996 = vmatprep.subr.mxu0 0.0
        %3997 = vmatpush1.msra.mxu0 %v3904
        %3998 = vmatprep.subr.mxu0 0.0
        %3999 = vmatpush1.msra.mxu0 %v3905
        %4000 = vmatprep.subr.mxu0 0.0
        %4001 = vmatpush1.msra.mxu0 %v3906
        %4002 = vmatprep.subr.mxu0 0.0
        %4003 = vmatpush1.msra.mxu0 %v3907
        %4004 = vmatprep.subr.mxu0 0.0
        %4005 = vmatpush1.msra.mxu0 %v3908
        %4006 = vmatprep.subr.mxu0 0.0
        %4007 = vmatpush1.msra.mxu0 %v3909
        %4008 = vmatprep.subr.mxu0 0.0
        %4009 = vmatpush1.msra.mxu0 %v3910
        %4010 = vmatprep.subr.mxu0 0.0
        %4011 = vmatpush1.msra.mxu0 %v3911
        %4012 = vmatprep.subr.mxu0 0.0
        %4013 = vmatpush1.msra.mxu0 %v3912
        %4014 = vmatprep.subr.mxu0 0.0
        %4015 = vmatpush1.msra.mxu0 %v3913
        %4016 = vmatprep.subr.mxu0 0.0
        %4017 = vmatpush1.msra.mxu0 %v3914
        %4018 = vmatprep.subr.mxu0 0.0
        %4019 = vmatpush1.msra.mxu0 %v3915
        %4020 = vmatprep.subr.mxu0 0.0
        %4021 = vmatpush1.msra.mxu0 %v3916
        %4022 = vmatprep.subr.mxu0 0.0
        %4023 = vmatpush1.msra.mxu0 %v3917
        %4024 = vmatprep.subr.mxu0 0.0
        %4025 = vmatpush1.msra.mxu0 %v3918
        %4026 = vmatprep.subr.mxu0 0.0
        %4027 = vmatpush1.msra.mxu0 %v3919
        %4028 = vmatprep.subr.mxu0 0.0
        %4029 = vmatpush1.msra.mxu0 %v3920
        %4030 = vmatprep.subr.mxu0 0.0
        %4031 = vmatpush1.msra.mxu0 %v3921
        %4032 = vmatprep.subr.mxu0 0.0
        %4033 = vmatpush1.msra.mxu0 0.0
        %4034 = vmatprep.subr.mxu0 0.0
        %4035 = vmatpush1.msra.mxu0 0.0
        %4036 = vmatprep.subr.mxu0 0.0
        %4037 = vmatpush1.msra.mxu0 0.0
        %4038 = vmatprep.subr.mxu0 0.0
        %4039 = vmatpush1.msra.mxu0 0.0
        %4040 = vmatprep.subr.mxu0 0.0
        %4041 = vmatpush1.msra.mxu0 0.0
        %4042 = vmatprep.subr.mxu0 0.0
        %4043 = vmatpush1.msra.mxu0 0.0
        %4044 = vmatprep.subr.mxu0 0.0
        %4045 = vmatpush1.msra.mxu0 0.0
        %4046 = vmatprep.subr.mxu0 0.0
        %4047 = vmatpush1.msra.mxu0 0.0
        %4048 = vmatprep.subr.mxu0 0.0
        %4049 = vmatpush1.msra.mxu0 0.0
        %4050 = vmatprep.subr.mxu0 0.0
        %4051 = vmatpush1.msra.mxu0 0.0
        %4052 = vmatprep.subr.mxu0 0.0
        %4053 = vmatpush1.msra.mxu0 0.0
        %4054 = vmatprep.subr.mxu0 0.0
        %4055 = vmatpush1.msra.mxu0 0.0
        %4056 = vmatprep.subr.mxu0 0.0
        %4057 = vmatpush1.msra.mxu0 0.0
        %4058 = vmatprep.subr.mxu0 0.0
        %4059 = vmatpush1.msra.mxu0 0.0
        %4060 = vmatprep.mubr.f32.mxu0 %v3924
        %4061 = vmatmul.mubr.f32.gmra.mrb[0].mxu0 %v3871
        %v4062 = vpop.f32.mrb[0].mxu0
        %v4063 = vadd.f32 %v3993, %v4062
        %v4064 = vpop.f32.mrb[0].mxu0
        %4065 = vdwg.mxu0
        %v4066 = vmax.f32 %v4063, 0.0
        %v4067 = vld [vmem:[%s11] sm:$0xff]
        %v4068 = vld [vmem:[%s11 + $0x8] sm:$0xff]
        %v4069 = vld [vmem:[%s11 + $0x10] sm:$0xff]
        %v4070 = vld [vmem:[%s11 + $0x18] sm:$0xff]
        %v4071 = vld [vmem:[%s11 + $0x20] sm:$0xff]
        %v4072 = vld [vmem:[%s11 + $0x28] sm:$0xff]
        %v4073 = vld [vmem:[%s11 + $0x30] sm:$0xff]
        %v4074 = vld [vmem:[%s11 + $0x38] sm:$0xff]
        %v4075 = vld [vmem:[%s11 + $0x40] sm:$0xff]
        %v4076 = vld [vmem:[%s11 + $0x48] sm:$0xff]
        %v4077 = vld [vmem:[%s11 + $0x50] sm:$0xff]
        %v4078 = vld [vmem:[%s11 + $0x58] sm:$0xff]
        %v4079 = vld [vmem:[%s11 + $0x60] sm:$0xff]
        %v4080 = vld [vmem:[%s11 + $0x68] sm:$0xff]
        %v4081 = vld [vmem:[%s11 + $0x70] sm:$0xff]
        %v4082 = vld [vmem:[%s12] sm:$0x1]
        %vm4083 = vcmask 982016
        %v4085 = vsel %vm4083, %v4066, 0
        %4087 = vmatprep.subr.mxu0 0.0
        %4088 = vmatpush1.msra.mxu0 %v4067
        %4089 = vmatprep.subr.mxu0 0.0
        %4090 = vmatpush1.msra.mxu0 %v4068
        %4091 = vmatprep.subr.mxu0 0.0
        %4092 = vmatpush1.msra.mxu0 %v4069
        %4093 = vmatprep.subr.mxu0 0.0
        %4094 = vmatpush1.msra.mxu0 %v4070
        %4095 = vmatprep.subr.mxu0 0.0
        %4096 = vmatpush1.msra.mxu0 %v4071
        %4097 = vmatprep.subr.mxu0 0.0
        %4098 = vmatpush1.msra.mxu0 %v4072
        %4099 = vmatprep.subr.mxu0 0.0
        %4100 = vmatpush1.msra.mxu0 %v4073
        %4101 = vmatprep.subr.mxu0 0.0
        %4102 = vmatpush1.msra.mxu0 %v4074
        %4103 = vmatprep.subr.mxu0 0.0
        %4104 = vmatpush1.msra.mxu0 %v4075
        %4105 = vmatprep.subr.mxu0 0.0
        %4106 = vmatpush1.msra.mxu0 %v4076
        %4107 = vmatprep.subr.mxu0 0.0
        %4108 = vmatpush1.msra.mxu0 %v4077
        %4109 = vmatprep.subr.mxu0 0.0
        %4110 = vmatpush1.msra.mxu0 %v4078
        %4111 = vmatprep.subr.mxu0 0.0
        %4112 = vmatpush1.msra.mxu0 %v4079
        %4113 = vmatprep.subr.mxu0 0.0
        %4114 = vmatpush1.msra.mxu0 %v4080
        %4115 = vmatprep.subr.mxu0 0.0
        %4116 = vmatpush1.msra.mxu0 %v4081
        %4117 = vmatprep.subr.mxu0 0.0
        %4118 = vmatpush1.msra.mxu0 0.0
        %4119 = vmatprep.subr.mxu0 0.0
        %4120 = vmatpush1.msra.mxu0 0.0
        %4121 = vmatprep.subr.mxu0 0.0
        %4122 = vmatpush1.msra.mxu0 0.0
        %4123 = vmatprep.subr.mxu0 0.0
        %4124 = vmatpush1.msra.mxu0 0.0
        %4125 = vmatprep.subr.mxu0 0.0
        %4126 = vmatpush1.msra.mxu0 0.0
        %4127 = vmatprep.subr.mxu0 0.0
        %4128 = vmatpush1.msra.mxu0 0.0
        %4129 = vmatprep.subr.mxu0 0.0
        %4130 = vmatpush1.msra.mxu0 0.0
        %4131 = vmatprep.subr.mxu0 0.0
        %4132 = vmatpush1.msra.mxu0 0.0
        %4133 = vmatprep.subr.mxu0 0.0
        %4134 = vmatpush1.msra.mxu0 0.0
        %4135 = vmatprep.subr.mxu0 0.0
        %4136 = vmatpush1.msra.mxu0 0.0
        %4137 = vmatprep.subr.mxu0 0.0
        %4138 = vmatpush1.msra.mxu0 0.0
        %4139 = vmatprep.subr.mxu0 0.0
        %4140 = vmatpush1.msra.mxu0 0.0
        %4141 = vmatprep.subr.mxu0 0.0
        %4142 = vmatpush1.msra.mxu0 0.0
        %4143 = vmatprep.subr.mxu0 0.0
        %4144 = vmatpush1.msra.mxu0 0.0
        %4145 = vmatprep.subr.mxu0 0.0
        %4146 = vmatpush1.msra.mxu0 0.0
        %4147 = vmatprep.subr.mxu0 0.0
        %4148 = vmatpush1.msra.mxu0 0.0
        %4149 = vmatprep.subr.mxu0 0.0
        %4150 = vmatpush1.msra.mxu0 0.0
        %4151 = vmatprep.mubr.f32.mxu0 0.0
        %4152 = vmatmul.mubr.f32.gmra.mrb[0].mxu0 %v4085
        %v4153 = vpop.f32.mrb[0].mxu0
        %v4154 = vadd.f32 %v4082, %v4153
        %v4155 = vpop.f32.mrb[0].mxu0
        %4156 = vdwg.mxu0
        %v4157 = vmax.f32 %v4154, 0.0
        %v4158 = vld [vmem:[%s13] sm:$0xff]
        %v4159 = vld [vmem:[%s13 + $0x8] sm:$0xff]
        %v4160 = vld [vmem:[%s13 + $0x10] sm:$0xff]
        %v4161 = vld [vmem:[%s13 + $0x18] sm:$0xff]
        %v4162 = vld [vmem:[%s13 + $0x20] sm:$0xff]
        %v4163 = vld [vmem:[%s13 + $0x28] sm:$0xff]
        %v4164 = vld [vmem:[%s13 + $0x30] sm:$0xff]
        %v4165 = vld [vmem:[%s13 + $0x38] sm:$0xff]
        %v4166 = vld [vmem:[%s13 + $0x40] sm:$0xff]
        %v4167 = vld [vmem:[%s13 + $0x48] sm:$0xff]
        %v4168 = vld [vmem:[%s13 + $0x50] sm:$0xf]
        %v4169 = vld [vmem:[%s14] sm:$0x1]
        %vm4170 = vcmask 687104
        %v4172 = vsel %vm4170, %v4157, 0
        %vm4174 = vcmask 1043456
        %v4176 = vsel %vm4174, %v4168, 0
        %4178 = vmatprep.subr.mxu0 0.0
        %4179 = vmatpush1.msra.mxu0 %v4158
        %4180 = vmatprep.subr.mxu0 0.0
        %4181 = vmatpush1.msra.mxu0 %v4159
        %4182 = vmatprep.subr.mxu0 0.0
        %4183 = vmatpush1.msra.mxu0 %v4160
        %4184 = vmatprep.subr.mxu0 0.0
        %4185 = vmatpush1.msra.mxu0 %v4161
        %4186 = vmatprep.subr.mxu0 0.0
        %4187 = vmatpush1.msra.mxu0 %v4162
        %4188 = vmatprep.subr.mxu0 0.0
        %4189 = vmatpush1.msra.mxu0 %v4163
        %4190 = vmatprep.subr.mxu0 0.0
        %4191 = vmatpush1.msra.mxu0 %v4164
        %4192 = vmatprep.subr.mxu0 0.0
        %4193 = vmatpush1.msra.mxu0 %v4165
        %4194 = vmatprep.subr.mxu0 0.0
        %4195 = vmatpush1.msra.mxu0 %v4166
        %4196 = vmatprep.subr.mxu0 0.0
        %4197 = vmatpush1.msra.mxu0 %v4167
        %4198 = vmatprep.subr.mxu0 0.0
        %4199 = vmatpush1.msra.mxu0 %v4176
        %4200 = vmatprep.subr.mxu0 0.0
        %4201 = vmatpush1.msra.mxu0 0.0
        %4202 = vmatprep.subr.mxu0 0.0
        %4203 = vmatpush1.msra.mxu0 0.0
        %4204 = vmatprep.subr.mxu0 0.0
        %4205 = vmatpush1.msra.mxu0 0.0
        %4206 = vmatprep.subr.mxu0 0.0
        %4207 = vmatpush1.msra.mxu0 0.0
        %4208 = vmatprep.subr.mxu0 0.0
        %4209 = vmatpush1.msra.mxu0 0.0
        %4210 = vmatprep.subr.mxu0 0.0
        %4211 = vmatpush1.msra.mxu0 0.0
        %4212 = vmatprep.subr.mxu0 0.0
        %4213 = vmatpush1.msra.mxu0 0.0
        %4214 = vmatprep.subr.mxu0 0.0
        %4215 = vmatpush1.msra.mxu0 0.0
        %4216 = vmatprep.subr.mxu0 0.0
        %4217 = vmatpush1.msra.mxu0 0.0
        %4218 = vmatprep.subr.mxu0 0.0
        %4219 = vmatpush1.msra.mxu0 0.0
        %4220 = vmatprep.subr.mxu0 0.0
        %4221 = vmatpush1.msra.mxu0 0.0
        %4222 = vmatprep.subr.mxu0 0.0
        %4223 = vmatpush1.msra.mxu0 0.0
        %4224 = vmatprep.subr.mxu0 0.0
        %4225 = vmatpush1.msra.mxu0 0.0
        %4226 = vmatprep.subr.mxu0 0.0
        %4227 = vmatpush1.msra.mxu0 0.0
        %4228 = vmatprep.subr.mxu0 0.0
        %4229 = vmatpush1.msra.mxu0 0.0
        %4230 = vmatprep.subr.mxu0 0.0
        %4231 = vmatpush1.msra.mxu0 0.0
        %4232 = vmatprep.subr.mxu0 0.0
        %4233 = vmatpush1.msra.mxu0 0.0
        %4234 = vmatprep.subr.mxu0 0.0
        %4235 = vmatpush1.msra.mxu0 0.0
        %4236 = vmatprep.subr.mxu0 0.0
        %4237 = vmatpush1.msra.mxu0 0.0
        %4238 = vmatprep.subr.mxu0 0.0
        %4239 = vmatpush1.msra.mxu0 0.0
        %4240 = vmatprep.subr.mxu0 0.0
        %4241 = vmatpush1.msra.mxu0 0.0
        %4242 = vmatprep.mubr.f32.mxu0 0.0
        %4243 = vmatmul.mubr.f32.gmra.mrb[0].mxu0 %v4172
        %v4244 = vpop.f32.mrb[0].mxu0
        %v4245 = vadd.f32 %v4169, %v4244
        %v4246 = vpop.f32.mrb[0].mxu0
        %4247 = vdwg.mxu0
        %vm4248 = vcmask 73728
        %v4249 = vsel %vm4248, %v4245, -inf
        %4250 = vmax.xlane.f32.xlu0 %v4249
        %v4251 = vpop.xlane.xlu0 %4250
        %v4252 = vsub.f32 %v4245, %v4251
        %v4253 = vmul.f32 %v4252, 1.442695
        %v4254 = vpow.pop %v4253
        %v4255 = vsel %vm4248, %v4254, 0.0
        %4256 = vadd.xlane.f32.xlu0 %v4255
        %v4257 = vpop.xlane.xlu0 %4256
        %v4258 = vlog2.pop %v4257
        %v4259 = vmul.f32 %v4258, 0.6931472
        %v4260 = vsub.f32 %v4252, %v4259
        %4261 = vst.msk [vmem:[%s512] sm:$0x1] %vm4248, %v4260
        %s4262 = sand.u32 %s359, 1
        %s4263 = scalar_lea.sflag [#allocation4], %s4262
        %s4264 = sand.u32 %s359, 1
        %s4265 = scalar_lea.vmem [#allocation7], %s4264
        // Predicated region
        $region89: #{cnn1_forward.1} parent=79 // pred_check
          %p4266 = pneg %p369
        $region90: #{cnn1_forward.1} parent=79 // pred_check_branch
          %4268 = sbr.rel (%p4266) target = $region92
        $region91: #{cnn1_forward.1} parent=79 // pred_region
          %s4270 = ssub.s32 16, 16
          %4271 = vsyncadd %s4263, %s4270
          %s4272 = smul.addr %s31, 16
          %s4273 = scalar_lea.hbm %s15, %s4272
          %s4275 = sshll.u32 %s4265, 4
          %s4276 = int_to_ptr.vmem [resolvable:$true] %s4275
          %4278 = dma.vmem_to_hbm [thread:$0]  %s4276, 16, %s4273, %s4263
        $region92: #{cnn1_forward.1} parent=79 // pred_fallthru
          _
      $region80: #{cnn1_forward.1} parent=5 // pred_fallthru
        _
      %p4279 = scmp.le.s32.totalorder 2, %s26
      // Predicated region
      $region93: #{cnn1_forward.1} parent=5 // pred_check
        %p4280 = pneg %p4279
      $region94: #{cnn1_forward.1} parent=5 // pred_check_branch
        %4282 = sbr.rel (%p4280) target = $region96
      $region95: #{cnn1_forward.1} parent=5 // pred_region
        %s4283 = ssub.s32 %s26, 2
        // Predicated region
        $region97: #{cnn1_forward.1} parent=95 // pred_check
          %p4284 = pneg %p375
        $region98: #{cnn1_forward.1} parent=95 // pred_check_branch
          %4286 = sbr.rel (%p4284) target = $region100
        $region99: #{cnn1_forward.1} parent=95 // pred_region
          %s4287 = sand.u32 %s360, 1
          %s4288 = scalar_lea.sflag [#allocation4], %s4287
          %s4289 = sand.u32 %s360, 1
          %s4290 = scalar_lea.vmem [#allocation7], %s4289
          %4291 = dma.done %s4288, 16
        $region100: #{cnn1_forward.1} parent=95 // pred_fallthru
          _
      $region96: #{cnn1_forward.1} parent=5 // pred_fallthru
        _
    $region6: #{cnn1_forward.1} parent=1 // loop_footer
      %s30 = sadd.s32 1, %s26
    $region7: #{cnn1_forward.1} parent=1 // loop_footer_branch
      %25 = sbr.rel target = $region3
    $region8: #{cnn1_forward.1} parent=1 // loop_exit
      _
    %4292 = vsyncpa [#allocation3], 1
    %s4293 = scalar_lea.sflag [#allocation3], 1
    %4294 = vsyncpa %s4293, 1
    %4295 = vsyncpa [#allocation6], 1
    %4296 = vsyncpa [#allocation4], 1
    %s4297 = scalar_lea.sflag [#allocation4], 1
    %4298 = vsyncpa %s4297, 1

</llo_original>
